<compile_context>
chip_gen: v7x
topology: tpu7x:2x2x1
jax: 0.10.0
libtpu: 0.0.40
codegen_flags: <defaults>
</compile_context>

<pallas_src>
import functools

import jax
import jax.numpy as jnp
from jax import lax
from jax.experimental import pallas as pl
from jax.experimental.pallas import tpu as pltpu

# ----------------------------- config (small) -------------------------------
B = 2                       # batch
C_IN = 3                    # image channels
IMG = 16                    # image H = W
PATCH = 8                   # patch size -> 2x2 = 4 patches / image
NPATCH = (IMG // PATCH) ** 2
CPP = C_IN * PATCH * PATCH  # 192 patch feature dim
VIS_DIM = 128               # vision tower feature dim (lane-dense)
HID = 128                   # LM hidden dim (lane-dense)
NH = 4                      # attention heads
DH = HID // NH              # head dim
FF = 256                    # MLP intermediate (lane-dense)
VOCAB = 256                 # vocab size (lane-dense)
TXT = 8                     # text sequence length
SEQ = NPATCH + TXT
IGNORE = -100

_PARALLEL = pltpu.CompilerParams(dimension_semantics=("parallel",))


# ------------------------------ in-kernel helpers ----------------------------
def _rms(x, w):
    var = jnp.mean(x * x, axis=-1, keepdims=True)
    return x * lax.rsqrt(var + 1e-6) * w


def _bdot(a, b):
    """bf16 MXU matmul with f32 accumulation."""
    return jnp.dot(a.astype(jnp.bfloat16), b.astype(jnp.bfloat16),
                   preferred_element_type=jnp.float32)


# ------------------------- kernel 1: fused vision stem -----------------------
def _vision_kernel(*refs, with_gt):
    if with_gt:
        (px_ref, pw_ref, pb_ref, vln_ref, w1_ref, b1_ref, w2_ref, b2_ref,
         gt_ref, feat_ref, him_ref, sse_ref) = refs
    else:
        (px_ref, pw_ref, pb_ref, vln_ref, w1_ref, b1_ref, w2_ref, b2_ref,
         feat_ref, him_ref) = refs

    x = px_ref[0]                                             # (NP, CPP) f32
    v = _bdot(x, pw_ref[...]) + pb_ref[...]                   # (NP, VIS_DIM)
    v = jax.nn.gelu(v, approximate=True)
    v = _rms(v, vln_ref[...])
    feat_ref[0] = v                                           # im_features

    # mm_projector (2-layer MLP), all VMEM-resident
    h1 = jax.nn.gelu(_bdot(v, w1_ref[...]) + b1_ref[...], approximate=True)
    him_ref[0] = _bdot(h1, w2_ref[...]) + b2_ref[...]

    if with_gt:                                               # fused feature MSE
        d = v - gt_ref[0]
        row = jnp.sum(d * d, axis=-1, keepdims=True)          # (NP, 1)
        sse_ref[0] = jnp.sum(row, axis=0, keepdims=True)      # (1, 1)


def vision_stem(params, patches, gt_feat=None):
    b, n_patch, cpp = patches.shape
    with_gt = gt_feat is not None
    w2 = lambda shape: pl.BlockSpec(shape, lambda i: (0, 0))
    pb = lambda shape: pl.BlockSpec(shape, lambda i: (i, 0, 0))

    in_specs = [pb((1, n_patch, cpp)),
                w2((cpp, VIS_DIM)), w2((1, VIS_DIM)), w2((1, VIS_DIM)),
                w2((VIS_DIM, HID)), w2((1, HID)),
                w2((HID, HID)), w2((1, HID))]
    inputs = [patches, params["patch_w"], params["patch_b"], params["vis_ln"],
              params["proj1_w"], params["proj1_b"],
              params["proj2_w"], params["proj2_b"]]
    out_specs = [pb((1, n_patch, VIS_DIM)), pb((1, n_patch, HID))]
    out_shape = [jax.ShapeDtypeStruct((b, n_patch, VIS_DIM), jnp.float32),
                 jax.ShapeDtypeStruct((b, n_patch, HID), jnp.float32)]
    if with_gt:
        in_specs.append(pb((1, n_patch, VIS_DIM)))
        inputs.append(gt_feat)
        out_specs.append(pb((1, 1, 1)))
        out_shape.append(jax.ShapeDtypeStruct((b, 1, 1), jnp.float32))

    return pl.pallas_call(
        functools.partial(_vision_kernel, with_gt=with_gt),
        grid=(b,),
        in_specs=in_specs,
        out_specs=tuple(out_specs),
        out_shape=tuple(out_shape),
        compiler_params=_PARALLEL,
    )(*inputs)


# ------------------------ kernel 2: fused decoder block ----------------------
def _decoder_kernel(hid0_ref, mask_ref, ln1_ref, wqkv_ref, wo_ref,
                    ln2_ref, wgu_ref, wd_ref, out_ref, *, nh, dh, ff):
    h = hid0_ref[0]                                           # (S, HID) f32
    hid = nh * dh
    s_len = h.shape[0]
    scale = 1.0 / float(dh) ** 0.5

    # --- attention: fused QKV, mask built in-kernel (no O(S^2) HBM input) ---
    hn = _rms(h, ln1_ref[...])
    qkv = _bdot(hn, wqkv_ref[...])                            # (S, 3*HID) f32

    row = lax.broadcasted_iota(jnp.int32, (s_len, s_len), 0)
    col = lax.broadcasted_iota(jnp.int32, (s_len, s_len), 1)
    keep = (row >= col) & (mask_ref[0] > 0.0)                 # causal & padding

    attn_o = jnp.zeros((s_len, hid), jnp.float32)
    for i in range(nh):                                       # unrolled heads
        q_h = qkv[:, i * dh:(i + 1) * dh]
        k_h = qkv[:, hid + i * dh: hid + (i + 1) * dh]
        v_h = qkv[:, 2 * hid + i * dh: 2 * hid + (i + 1) * dh]
        s = lax.dot_general(q_h.astype(jnp.bfloat16), k_h.astype(jnp.bfloat16),
                            (((1,), (1,)), ((), ())),
                            preferred_element_type=jnp.float32) * scale
        s = jnp.where(keep, s, -1e30)
        m = jnp.max(s, axis=-1, keepdims=True)
        p = jnp.exp(s - m)
        p = p * pl.reciprocal(jnp.sum(p, axis=-1, keepdims=True), approx=False)
        out_h = _bdot(p, v_h)                                 # (S, DH)
        # head-concat folded into the wo matmul (per-head row slab of wo)
        attn_o = attn_o + _bdot(out_h, wo_ref[i * dh:(i + 1) * dh, :])
    h = h + attn_o

    # --- SwiGLU MLP with fused gate/up projection ---
    hn2 = _rms(h, ln2_ref[...])
    gu = _bdot(hn2, wgu_ref[...])                             # (S, 2*FF)
    g = gu[:, :ff]
    u = gu[:, ff:]
    h = h + _bdot(g * jax.nn.sigmoid(g) * u, wd_ref[...])
    out_ref[0] = h


def decoder_block(params, hidden0, mask3d):
    b, seq, _ = hidden0.shape
    w2 = lambda shape: pl.BlockSpec(shape, lambda i: (0, 0))
    return pl.pallas_call(
        functools.partial(_decoder_kernel, nh=NH, dh=DH, ff=FF),
        grid=(b,),
        in_specs=[pl.BlockSpec((1, seq, HID), lambda i: (i, 0, 0)),
                  pl.BlockSpec((1, 1, seq), lambda i: (i, 0, 0)),
                  w2((1, HID)), w2((HID, 3 * HID)), w2((HID, HID)),
                  w2((1, HID)), w2((HID, 2 * FF)), w2((FF, HID))],
        out_specs=pl.BlockSpec((1, seq, HID), lambda i: (i, 0, 0)),
        out_shape=jax.ShapeDtypeStruct((b, seq, HID), jnp.float32),
        compiler_params=_PARALLEL,
    )(hidden0, mask3d, params["ln1"], params["wqkv"], params["wo"],
      params["ln2"], params["wgu"], params["wd"])


# -------------------- kernel 3: final norm + LM head + CE --------------------
def _head_kernel(*refs, with_labels):
    if with_labels:
        (h_ref, lnf_ref, w_ref, b_ref, lab_ref,
         logits_ref, loss_ref, valid_ref) = refs
    else:
        (h_ref, lnf_ref, w_ref, b_ref, logits_ref) = refs

    hn = _rms(h_ref[0], lnf_ref[...])
    logits = _bdot(hn, w_ref[...]) + b_ref[...]               # (S, VOCAB) f32
    logits_ref[0] = logits

    if with_labels:
        lg = logits[:-1, :]                                   # (S-1, V)
        lb = lab_ref[0]                                       # (S-1, 1) int32
        m = jnp.max(lg, axis=-1, keepdims=True)
        lse = jnp.log(jnp.sum(jnp.exp(lg - m), axis=-1, keepdims=True)) + m
        iota = lax.broadcasted_iota(jnp.int32, lg.shape, 1)
        tgt = jnp.sum(jnp.where(iota == lb, lg, 0.0), axis=-1, keepdims=True)
        valid = (lb >= 0).astype(jnp.float32)
        per = (lse - tgt) * valid                             # (S-1, 1)
        loss_ref[0] = jnp.sum(per, axis=0, keepdims=True)     # (1, 1)
        valid_ref[0] = jnp.sum(valid, axis=0, keepdims=True)  # (1, 1)


def lm_head_ce(params, hidden, shift_labels):
    b, seq, _ = hidden.shape
    with_labels = shift_labels is not None
    w2 = lambda shape: pl.BlockSpec(shape, lambda i: (0, 0))
    in_specs = [pl.BlockSpec((1, seq, HID), lambda i: (i, 0, 0)),
                w2((1, HID)), w2((HID, VOCAB)), w2((1, VOCAB))]
    inputs = [hidden, params["lnf"], params["lm_head"], params["lm_b"]]
    out_specs = [pl.BlockSpec((1, seq, VOCAB), lambda i: (i, 0, 0))]
    out_shape = [jax.ShapeDtypeStruct((b, seq, VOCAB), jnp.float32)]
    if with_labels:
        in_specs.append(pl.BlockSpec((1, seq - 1, 1), lambda i: (i, 0, 0)))
        inputs.append(shift_labels)
        out_specs += [pl.BlockSpec((1, 1, 1), lambda i: (i, 0, 0))] * 2
        out_shape += [jax.ShapeDtypeStruct((b, 1, 1), jnp.float32)] * 2

    res = pl.pallas_call(
        functools.partial(_head_kernel, with_labels=with_labels),
        grid=(b,),
        in_specs=in_specs,
        out_specs=tuple(out_specs),
        out_shape=tuple(out_shape),
        compiler_params=_PARALLEL,
    )(*inputs)
    if with_labels:
        return res
    return res[0] if isinstance(res, (tuple, list)) else res


# ----------------------------- parameters ------------------------------------
def init_params(key):
    ks = jax.random.split(key, 10)

    def w(k, shape, scale=0.05):
        # weights stored bf16 (halves HBM/VMEM traffic; MXU runs bf16)
        return (scale * jax.random.normal(k, shape, jnp.float32)
                ).astype(jnp.bfloat16)

    return {
        "patch_w": w(ks[0], (CPP, VIS_DIM)),
        "patch_b": jnp.zeros((1, VIS_DIM), jnp.float32),
        "vis_ln": jnp.ones((1, VIS_DIM), jnp.float32),
        "proj1_w": w(ks[1], (VIS_DIM, HID)),
        "proj1_b": jnp.zeros((1, HID), jnp.float32),
        "proj2_w": w(ks[2], (HID, HID)),
        "proj2_b": jnp.zeros((1, HID), jnp.float32),
        "embed": 0.05 * jax.random.normal(ks[3], (VOCAB, HID), jnp.float32),
        "ln1": jnp.ones((1, HID), jnp.float32),
        "wqkv": w(ks[4], (HID, 3 * HID)),      # fused q/k/v projection
        "wo": w(ks[5], (HID, HID)),
        "ln2": jnp.ones((1, HID), jnp.float32),
        "wgu": w(ks[6], (HID, 2 * FF)),        # fused gate/up projection
        "wd": w(ks[7], (FF, HID)),
        "lnf": jnp.ones((1, HID), jnp.float32),
        "lm_head": w(ks[8], (HID, VOCAB)),
        "lm_b": jnp.zeros((1, VOCAB), jnp.float32),
    }


# ------------------------------- forward --------------------------------------
def forward(params, input_ids, pixel_values, attention_mask, labels=None,
            output_im_features=True, gt_im_features=None,
            camera_pos=None, polygon=None):
    # TODO(synk): camera_pos / polygon conditioning of the CLIP vision tower
    # (use_clip_camera_polygon=True) has no clean synthetic equivalent here.
    b, c, hh, ww = pixel_values.shape
    nph, npw = hh // PATCH, ww // PATCH
    n_patch = nph * npw

    # Patchify NCHW -> [B, NP, C*P*P] (one-time layout glue in XLA).
    # TODO(synk): fold the patch gather into the vision kernel's index_map.
    patches = pixel_values.reshape(b, c, nph, PATCH, npw, PATCH)
    patches = patches.transpose(0, 2, 4, 1, 3, 5).reshape(
        b, n_patch, c * PATCH * PATCH)

    gt_flat = None
    if gt_im_features is not None:
        gt_flat = gt_im_features.reshape(b, n_patch, VIS_DIM).astype(jnp.float32)

    vis_out = vision_stem(params, patches, gt_flat)
    if gt_flat is not None:
        im_features, h_img, sse = vis_out
    else:
        im_features, h_img = vis_out
        sse = None

    # text embeddings (tiny gather stays in XLA) + concat with image tokens
    h_txt = jnp.take(params["embed"], input_ids, axis=0)         # (B, TXT, HID)
    hidden0 = jnp.concatenate([h_img, h_txt], axis=1)            # (B, S, HID)
    seq = hidden0.shape[1]

    # combined padding mask (image tokens always attended); causal part is
    # built inside the decoder kernel with iota (no O(S^2) tensor in HBM).
    full_mask = jnp.concatenate(
        [jnp.ones((b, n_patch), jnp.float32),
         attention_mask.astype(jnp.float32)], axis=1)            # (B, S)

    hidden = decoder_block(params, hidden0, full_mask.reshape(b, 1, seq))

    loss = None
    if labels is not None:
        full_labels = jnp.concatenate(
            [jnp.full((b, n_patch), IGNORE, jnp.int32),
             labels.astype(jnp.int32)], axis=1)
        full_labels = jnp.where(full_mask > 0, full_labels, IGNORE)
        shift_labels = full_labels[:, 1:].reshape(b, seq - 1, 1)
        logits, loss_sum, valid_sum = lm_head_ce(params, hidden, shift_labels)
        loss = jnp.sum(loss_sum) / jnp.maximum(jnp.sum(valid_sum), 1.0)
    else:
        logits = lm_head_ce(params, hidden, None)

    if sse is not None:
        feat_loss = jnp.sum(sse) / (b * n_patch * VIS_DIM)
        loss = feat_loss if loss is None else loss + feat_loss

    out = {
        "loss": loss,
        "logits": logits,
        "hidden_states": (hidden0, hidden),
    }
    if output_im_features:
        out["im_features"] = im_features
    return out


# --------------------------------- main ---------------------------------------
if __name__ == "__main__":
    key = jax.random.PRNGKey(0)
    k_param, k_img, k_ids, k_gt = jax.random.split(key, 4)

    params = init_params(k_param)

    pixel_values = jax.random.normal(k_img, (B, C_IN, IMG, IMG), jnp.float32)
    input_ids = jax.random.randint(k_ids, (B, TXT), 0, VOCAB, jnp.int32)
    attention_mask = jnp.ones((B, TXT), jnp.int32)
    labels = input_ids  # teacher-forced LM labels over the text tokens
    gt_im_features = jax.random.normal(k_gt, (B, NPATCH, VIS_DIM), jnp.float32)

    fwd = jax.jit(functools.partial(forward, output_im_features=True))
    outputs = fwd(params, input_ids, pixel_values, attention_mask,
                  labels=labels, gt_im_features=gt_im_features)

    jax.block_until_ready(outputs["loss"])
    jax.block_until_ready(outputs["logits"])
    jax.block_until_ready(outputs["im_features"])
    print("KERNEL_OK")
</pallas_src>

<mosaic_0001>
module attributes {stable_mosaic.version = 11 : i64} {
  func.func @_vision_kernel(%arg0: i32, %arg1: memref<1x4x192xf32, #tpu.memory_space<vmem>>, %arg2: memref<192x128xbf16, #tpu.memory_space<vmem>>, %arg3: memref<1x128xf32, #tpu.memory_space<vmem>>, %arg4: memref<1x128xf32, #tpu.memory_space<vmem>>, %arg5: memref<128x128xbf16, #tpu.memory_space<vmem>>, %arg6: memref<1x128xf32, #tpu.memory_space<vmem>>, %arg7: memref<128x128xbf16, #tpu.memory_space<vmem>>, %arg8: memref<1x128xf32, #tpu.memory_space<vmem>>, %arg9: memref<1x4x128xf32, #tpu.memory_space<vmem>>, %arg10: memref<1x4x128xf32, #tpu.memory_space<vmem>>, %arg11: memref<1x4x128xf32, #tpu.memory_space<vmem>>, %arg12: memref<1x1x1xf32, #tpu.memory_space<vmem>>) attributes {dimension_semantics = [#tpu.dimension_semantics<parallel>], iteration_bounds = array<i64: 2>, scalar_prefetch = 0 : i64, scratch_operands = 0 : i64, tpu.core_type = #tpu.core_type<tc>, window_params = [{transform_indices = @transform_0, window_bounds = array<i64: 1, 4, 192>}, {pipeline_mode = #tpu.pipeline_mode<synchronous>, transform_indices = @transform_1, window_bounds = array<i64: 192, 128>}, {pipeline_mode = #tpu.pipeline_mode<synchronous>, transform_indices = @transform_2, window_bounds = array<i64: 1, 128>}, {pipeline_mode = #tpu.pipeline_mode<synchronous>, transform_indices = @transform_3, window_bounds = array<i64: 1, 128>}, {pipeline_mode = #tpu.pipeline_mode<synchronous>, transform_indices = @transform_4, window_bounds = array<i64: 128, 128>}, {pipeline_mode = #tpu.pipeline_mode<synchronous>, transform_indices = @transform_5, window_bounds = array<i64: 1, 128>}, {pipeline_mode = #tpu.pipeline_mode<synchronous>, transform_indices = @transform_6, window_bounds = array<i64: 128, 128>}, {pipeline_mode = #tpu.pipeline_mode<synchronous>, transform_indices = @transform_7, window_bounds = array<i64: 1, 128>}, {transform_indices = @transform_8, window_bounds = array<i64: 1, 4, 128>}, {transform_indices = @transform_9, window_bounds = array<i64: 1, 4, 128>}, {transform_indices = @transform_10, window_bounds = array<i64: 1, 4, 128>}, {transform_indices = @transform_11, window_bounds = array<i64: 1, 1, 1>}]} {
    %c0 = arith.constant 0 : index
    %c0_0 = arith.constant 0 : index
    %c0_1 = arith.constant 0 : index
    %0 = vector.load %arg1[%c0, %c0_0, %c0_1] : memref<1x4x192xf32, #tpu.memory_space<vmem>>, vector<1x4x192xf32>
    %1 = vector.shape_cast %0 : vector<1x4x192xf32> to vector<4x192xf32>
    %c0_2 = arith.constant 0 : index
    %c0_3 = arith.constant 0 : index
    %2 = vector.load %arg2[%c0_2, %c0_3] : memref<192x128xbf16, #tpu.memory_space<vmem>>, vector<192x128xbf16>
    %3 = arith.truncf %1 : vector<4x192xf32> to vector<4x192xbf16>
    %cst = arith.constant dense<0.000000e+00> : vector<4x128xf32>
    %4 = tpu.matmul %3, %2, %cst {dimension_numbers = #tpu.dot_dimension_numbers<[1], [0], [0], [1], [0, 0, 1, 1], [], []>} : vector<4x192xbf16>, vector<192x128xbf16>, vector<4x128xf32> -> vector<4x128xf32>
    %c0_4 = arith.constant 0 : index
    %c0_5 = arith.constant 0 : index
    %5 = vector.load %arg3[%c0_4, %c0_5] : memref<1x128xf32, #tpu.memory_space<vmem>>, vector<1x128xf32>
    %6 = vector.broadcast %5 : vector<1x128xf32> to vector<4x128xf32>
    %7 = arith.addf %4, %6 : vector<4x128xf32>
    %8 = arith.mulf %7, %7 : vector<4x128xf32>
    %9 = arith.mulf %7, %8 : vector<4x128xf32>
    %cst_6 = arith.constant 4.471500e-02 : f32
    %10 = vector.broadcast %cst_6 : f32 to vector<4x128xf32>
    %11 = arith.mulf %10, %9 : vector<4x128xf32>
    %12 = arith.addf %7, %11 : vector<4x128xf32>
    %cst_7 = arith.constant 0.797884583 : f32
    %13 = vector.broadcast %cst_7 : f32 to vector<4x128xf32>
    %14 = arith.mulf %13, %12 : vector<4x128xf32>
    %15 = math.tanh %14 : vector<4x128xf32>
    %cst_8 = arith.constant 1.000000e+00 : f32
    %16 = vector.broadcast %cst_8 : f32 to vector<4x128xf32>
    %17 = arith.addf %16, %15 : vector<4x128xf32>
    %cst_9 = arith.constant 5.000000e-01 : f32
    %18 = vector.broadcast %cst_9 : f32 to vector<4x128xf32>
    %19 = arith.mulf %18, %17 : vector<4x128xf32>
    %20 = arith.mulf %7, %19 : vector<4x128xf32>
    %c0_10 = arith.constant 0 : index
    %c0_11 = arith.constant 0 : index
    %21 = vector.load %arg4[%c0_10, %c0_11] : memref<1x128xf32, #tpu.memory_space<vmem>>, vector<1x128xf32>
    %22 = arith.mulf %20, %20 : vector<4x128xf32>
    %cst_12 = arith.constant dense<0.000000e+00> : vector<4xf32>
    %23 = vector.multi_reduction <add>, %22, %cst_12 [1] : vector<4x128xf32> to vector<4xf32>
    %24 = vector.shape_cast %23 : vector<4xf32> to vector<4x1xf32>
    %cst_13 = arith.constant 1.280000e+02 : f32
    %25 = vector.broadcast %cst_13 : f32 to vector<4x1xf32>
    %26 = arith.divf %24, %25 : vector<4x1xf32>
    %cst_14 = arith.constant 9.99999997E-7 : f32
    %27 = vector.broadcast %cst_14 : f32 to vector<4x1xf32>
    %28 = arith.addf %26, %27 : vector<4x1xf32>
    %29 = math.rsqrt %28 : vector<4x1xf32>
    %30 = vector.broadcast %29 : vector<4x1xf32> to vector<4x128xf32>
    %31 = arith.mulf %20, %30 : vector<4x128xf32>
    %32 = vector.broadcast %21 : vector<1x128xf32> to vector<4x128xf32>
    %33 = arith.mulf %31, %32 : vector<4x128xf32>
    %c0_15 = arith.constant 0 : index
    %c0_16 = arith.constant 0 : index
    %c0_17 = arith.constant 0 : index
    %34 = vector.load %arg10[%c0_15, %c0_16, %c0_17] : memref<1x4x128xf32, #tpu.memory_space<vmem>>, vector<1x4x128xf32>
    %35 = vector.shape_cast %34 : vector<1x4x128xf32> to vector<4x128xf32>
    %36 = vector.shape_cast %33 : vector<4x128xf32> to vector<1x4x128xf32>
    tpu.vector_store %arg10[%c0_15, %c0_16, %c0_17], %36 {strides = array<i32>} : memref<1x4x128xf32, #tpu.memory_space<vmem>>, vector<1x4x128xf32>,
    %c0_18 = arith.constant 0 : index
    %c0_19 = arith.constant 0 : index
    %37 = vector.load %arg5[%c0_18, %c0_19] : memref<128x128xbf16, #tpu.memory_space<vmem>>, vector<128x128xbf16>
    %38 = arith.truncf %33 : vector<4x128xf32> to vector<4x128xbf16>
    %cst_20 = arith.constant dense<0.000000e+00> : vector<4x128xf32>
    %39 = tpu.matmul %38, %37, %cst_20 {dimension_numbers = #tpu.dot_dimension_numbers<[1], [0], [0], [1], [0, 0, 1, 1], [], []>} : vector<4x128xbf16>, vector<128x128xbf16>, vector<4x128xf32> -> vector<4x128xf32>
    %c0_21 = arith.constant 0 : index
    %c0_22 = arith.constant 0 : index
    %40 = vector.load %arg6[%c0_21, %c0_22] : memref<1x128xf32, #tpu.memory_space<vmem>>, vector<1x128xf32>
    %41 = vector.broadcast %40 : vector<1x128xf32> to vector<4x128xf32>
    %42 = arith.addf %39, %41 : vector<4x128xf32>
    %43 = arith.mulf %42, %42 : vector<4x128xf32>
    %44 = arith.mulf %42, %43 : vector<4x128xf32>
    %cst_23 = arith.constant 4.471500e-02 : f32
    %45 = vector.broadcast %cst_23 : f32 to vector<4x128xf32>
    %46 = arith.mulf %45, %44 : vector<4x128xf32>
    %47 = arith.addf %42, %46 : vector<4x128xf32>
    %cst_24 = arith.constant 0.797884583 : f32
    %48 = vector.broadcast %cst_24 : f32 to vector<4x128xf32>
    %49 = arith.mulf %48, %47 : vector<4x128xf32>
    %50 = math.tanh %49 : vector<4x128xf32>
    %cst_25 = arith.constant 1.000000e+00 : f32
    %51 = vector.broadcast %cst_25 : f32 to vector<4x128xf32>
    %52 = arith.addf %51, %50 : vector<4x128xf32>
    %cst_26 = arith.constant 5.000000e-01 : f32
    %53 = vector.broadcast %cst_26 : f32 to vector<4x128xf32>
    %54 = arith.mulf %53, %52 : vector<4x128xf32>
    %55 = arith.mulf %42, %54 : vector<4x128xf32>
    %c0_27 = arith.constant 0 : index
    %c0_28 = arith.constant 0 : index
    %56 = vector.load %arg7[%c0_27, %c0_28] : memref<128x128xbf16, #tpu.memory_space<vmem>>, vector<128x128xbf16>
    %57 = arith.truncf %55 : vector<4x128xf32> to vector<4x128xbf16>
    %cst_29 = arith.constant dense<0.000000e+00> : vector<4x128xf32>
    %58 = tpu.matmul %57, %56, %cst_29 {dimension_numbers = #tpu.dot_dimension_numbers<[1], [0], [0], [1], [0, 0, 1, 1], [], []>} : vector<4x128xbf16>, vector<128x128xbf16>, vector<4x128xf32> -> vector<4x128xf32>
    %c0_30 = arith.constant 0 : index
    %c0_31 = arith.constant 0 : index
    %59 = vector.load %arg8[%c0_30, %c0_31] : memref<1x128xf32, #tpu.memory_space<vmem>>, vector<1x128xf32>
    %60 = vector.broadcast %59 : vector<1x128xf32> to vector<4x128xf32>
    %61 = arith.addf %58, %60 : vector<4x128xf32>
    %c0_32 = arith.constant 0 : index
    %c0_33 = arith.constant 0 : index
    %c0_34 = arith.constant 0 : index
    %62 = vector.load %arg11[%c0_32, %c0_33, %c0_34] : memref<1x4x128xf32, #tpu.memory_space<vmem>>, vector<1x4x128xf32>
    %63 = vector.shape_cast %62 : vector<1x4x128xf32> to vector<4x128xf32>
    %64 = vector.shape_cast %61 : vector<4x128xf32> to vector<1x4x128xf32>
    tpu.vector_store %arg11[%c0_32, %c0_33, %c0_34], %64 {strides = array<i32>} : memref<1x4x128xf32, #tpu.memory_space<vmem>>, vector<1x4x128xf32>,
    %c0_35 = arith.constant 0 : index
    %c0_36 = arith.constant 0 : index
    %c0_37 = arith.constant 0 : index
    %65 = vector.load %arg9[%c0_35, %c0_36, %c0_37] : memref<1x4x128xf32, #tpu.memory_space<vmem>>, vector<1x4x128xf32>
    %66 = vector.shape_cast %65 : vector<1x4x128xf32> to vector<4x128xf32>
    %67 = arith.subf %33, %66 : vector<4x128xf32>
    %68 = arith.mulf %67, %67 : vector<4x128xf32>
    %cst_38 = arith.constant dense<0.000000e+00> : vector<4xf32>
    %69 = vector.multi_reduction <add>, %68, %cst_38 [1] : vector<4x128xf32> to vector<4xf32>
    %70 = vector.shape_cast %69 : vector<4xf32> to vector<4x1xf32>
    %cst_39 = arith.constant dense<0.000000e+00> : vector<1xf32>
    %71 = vector.multi_reduction <add>, %70, %cst_39 [0] : vector<4x1xf32> to vector<1xf32>
    %72 = vector.shape_cast %71 : vector<1xf32> to vector<1x1xf32>
    %c0_40 = arith.constant 0 : index
    %c0_41 = arith.constant 0 : index
    %c0_42 = arith.constant 0 : index
    %73 = vector.load %arg12[%c0_40, %c0_41, %c0_42] : memref<1x1x1xf32, #tpu.memory_space<vmem>>, vector<1x1x1xf32>
    %74 = vector.shape_cast %73 : vector<1x1x1xf32> to vector<1x1xf32>
    %75 = vector.shape_cast %72 : vector<1x1xf32> to vector<1x1x1xf32>
    tpu.vector_store %arg12[%c0_40, %c0_41, %c0_42], %75 {strides = array<i32>} : memref<1x1x1xf32, #tpu.memory_space<vmem>>, vector<1x1x1xf32>,
    return
  }
  func.func @transform_0(%arg0: i32) -> (i32, i32, i32) {
    %c0_i32 = arith.constant 0 : i32
    %c0_i32_0 = arith.constant 0 : i32
    %c0_i32_1 = arith.constant 0 : i32
    return %arg0, %c0_i32, %c0_i32_0 : i32, i32, i32
  }
  func.func @transform_1(%arg0: i32) -> (i32, i32) {
    %c0_i32 = arith.constant 0 : i32
    %c0_i32_0 = arith.constant 0 : i32
    %c0_i32_1 = arith.constant 0 : i32
    return %c0_i32, %c0_i32_0 : i32, i32
  }
  func.func @transform_2(%arg0: i32) -> (i32, i32) {
    %c0_i32 = arith.constant 0 : i32
    %c0_i32_0 = arith.constant 0 : i32
    %c0_i32_1 = arith.constant 0 : i32
    return %c0_i32, %c0_i32_0 : i32, i32
  }
  func.func @transform_3(%arg0: i32) -> (i32, i32) {
    %c0_i32 = arith.constant 0 : i32
    %c0_i32_0 = arith.constant 0 : i32
    %c0_i32_1 = arith.constant 0 : i32
    return %c0_i32, %c0_i32_0 : i32, i32
  }
  func.func @transform_4(%arg0: i32) -> (i32, i32) {
    %c0_i32 = arith.constant 0 : i32
    %c0_i32_0 = arith.constant 0 : i32
    %c0_i32_1 = arith.constant 0 : i32
    return %c0_i32, %c0_i32_0 : i32, i32
  }
  func.func @transform_5(%arg0: i32) -> (i32, i32) {
    %c0_i32 = arith.constant 0 : i32
    %c0_i32_0 = arith.constant 0 : i32
    %c0_i32_1 = arith.constant 0 : i32
    return %c0_i32, %c0_i32_0 : i32, i32
  }
  func.func @transform_6(%arg0: i32) -> (i32, i32) {
    %c0_i32 = arith.constant 0 : i32
    %c0_i32_0 = arith.constant 0 : i32
    %c0_i32_1 = arith.constant 0 : i32
    return %c0_i32, %c0_i32_0 : i32, i32
  }
  func.func @transform_7(%arg0: i32) -> (i32, i32) {
    %c0_i32 = arith.constant 0 : i32
    %c0_i32_0 = arith.constant 0 : i32
    %c0_i32_1 = arith.constant 0 : i32
    return %c0_i32, %c0_i32_0 : i32, i32
  }
  func.func @transform_8(%arg0: i32) -> (i32, i32, i32) {
    %c0_i32 = arith.constant 0 : i32
    %c0_i32_0 = arith.constant 0 : i32
    %c0_i32_1 = arith.constant 0 : i32
    return %arg0, %c0_i32, %c0_i32_0 : i32, i32, i32
  }
  func.func @transform_9(%arg0: i32) -> (i32, i32, i32) {
    %c0_i32 = arith.constant 0 : i32
    %c0_i32_0 = arith.constant 0 : i32
    %c0_i32_1 = arith.constant 0 : i32
    return %arg0, %c0_i32, %c0_i32_0 : i32, i32, i32
  }
  func.func @transform_10(%arg0: i32) -> (i32, i32, i32) {
    %c0_i32 = arith.constant 0 : i32
    %c0_i32_0 = arith.constant 0 : i32
    %c0_i32_1 = arith.constant 0 : i32
    return %arg0, %c0_i32, %c0_i32_0 : i32, i32, i32
  }
  func.func @transform_11(%arg0: i32) -> (i32, i32, i32) {
    %c0_i32 = arith.constant 0 : i32
    %c0_i32_0 = arith.constant 0 : i32
    %c0_i32_1 = arith.constant 0 : i32
    return %arg0, %c0_i32, %c0_i32_0 : i32, i32, i32
  }
}

module attributes {stable_mosaic.version = 11 : i64} {
  func.func @_decoder_kernel(%arg0: i32, %arg1: memref<1x12x128xf32, #tpu.memory_space<vmem>>, %arg2: memref<1x1x12xf32, #tpu.memory_space<vmem>>, %arg3: memref<1x128xf32, #tpu.memory_space<vmem>>, %arg4: memref<128x384xbf16, #tpu.memory_space<vmem>>, %arg5: memref<128x128xbf16, #tpu.memory_space<vmem>>, %arg6: memref<1x128xf32, #tpu.memory_space<vmem>>, %arg7: memref<128x512xbf16, #tpu.memory_space<vmem>>, %arg8: memref<256x128xbf16, #tpu.memory_space<vmem>>, %arg9: memref<1x12x128xf32, #tpu.memory_space<vmem>>) attributes {dimension_semantics = [#tpu.dimension_semantics<parallel>], iteration_bounds = array<i64: 2>, scalar_prefetch = 0 : i64, scratch_operands = 0 : i64, tpu.core_type = #tpu.core_type<tc>, window_params = [{transform_indices = @transform_0, window_bounds = array<i64: 1, 12, 128>}, {transform_indices = @transform_1, window_bounds = array<i64: 1, 1, 12>}, {pipeline_mode = #tpu.pipeline_mode<synchronous>, transform_indices = @transform_2, window_bounds = array<i64: 1, 128>}, {pipeline_mode = #tpu.pipeline_mode<synchronous>, transform_indices = @transform_3, window_bounds = array<i64: 128, 384>}, {pipeline_mode = #tpu.pipeline_mode<synchronous>, transform_indices = @transform_4, window_bounds = array<i64: 128, 128>}, {pipeline_mode = #tpu.pipeline_mode<synchronous>, transform_indices = @transform_5, window_bounds = array<i64: 1, 128>}, {pipeline_mode = #tpu.pipeline_mode<synchronous>, transform_indices = @transform_6, window_bounds = array<i64: 128, 512>}, {pipeline_mode = #tpu.pipeline_mode<synchronous>, transform_indices = @transform_7, window_bounds = array<i64: 256, 128>}, {transform_indices = @transform_8, window_bounds = array<i64: 1, 12, 128>}]} {
    %c0 = arith.constant 0 : index
    %c0_0 = arith.constant 0 : index
    %c0_1 = arith.constant 0 : index
    %0 = vector.load %arg1[%c0, %c0_0, %c0_1] : memref<1x12x128xf32, #tpu.memory_space<vmem>>, vector<1x12x128xf32>
    %1 = vector.shape_cast %0 : vector<1x12x128xf32> to vector<12x128xf32>
    %c0_2 = arith.constant 0 : index
    %c0_3 = arith.constant 0 : index
    %2 = vector.load %arg3[%c0_2, %c0_3] : memref<1x128xf32, #tpu.memory_space<vmem>>, vector<1x128xf32>
    %3 = arith.mulf %1, %1 : vector<12x128xf32>
    %cst = arith.constant dense<0.000000e+00> : vector<12xf32>
    %4 = vector.multi_reduction <add>, %3, %cst [1] : vector<12x128xf32> to vector<12xf32>
    %5 = vector.shape_cast %4 : vector<12xf32> to vector<12x1xf32>
    %cst_4 = arith.constant 1.280000e+02 : f32
    %6 = vector.broadcast %cst_4 : f32 to vector<12x1xf32>
    %7 = arith.divf %5, %6 : vector<12x1xf32>
    %cst_5 = arith.constant 9.99999997E-7 : f32
    %8 = vector.broadcast %cst_5 : f32 to vector<12x1xf32>
    %9 = arith.addf %7, %8 : vector<12x1xf32>
    %10 = math.rsqrt %9 : vector<12x1xf32>
    %11 = vector.broadcast %10 : vector<12x1xf32> to vector<12x128xf32>
    %12 = arith.mulf %1, %11 : vector<12x128xf32>
    %13 = vector.broadcast %2 : vector<1x128xf32> to vector<12x128xf32>
    %14 = arith.mulf %12, %13 : vector<12x128xf32>
    %c0_6 = arith.constant 0 : index
    %c0_7 = arith.constant 0 : index
    %15 = vector.load %arg4[%c0_6, %c0_7] : memref<128x384xbf16, #tpu.memory_space<vmem>>, vector<128x384xbf16>
    %16 = arith.truncf %14 : vector<12x128xf32> to vector<12x128xbf16>
    %cst_8 = arith.constant dense<0.000000e+00> : vector<12x384xf32>
    %17 = tpu.matmul %16, %15, %cst_8 {dimension_numbers = #tpu.dot_dimension_numbers<[1], [0], [0], [1], [0, 0, 1, 1], [], []>} : vector<12x128xbf16>, vector<128x384xbf16>, vector<12x384xf32> -> vector<12x384xf32>
    %18 = tpu.iota {dimensions = array<i32: 0>} : vector<12x12xi32>
    %19 = tpu.iota {dimensions = array<i32: 1>} : vector<12x12xi32>
    %20 = arith.cmpi sge, %18, %19 : vector<12x12xi32>
    %c0_9 = arith.constant 0 : index
    %c0_10 = arith.constant 0 : index
    %c0_11 = arith.constant 0 : index
    %21 = vector.load %arg2[%c0_9, %c0_10, %c0_11] : memref<1x1x12xf32, #tpu.memory_space<vmem>>, vector<1x1x12xf32>
    %22 = vector.shape_cast %21 : vector<1x1x12xf32> to vector<1x12xf32>
    %cst_12 = arith.constant 0.000000e+00 : f32
    %23 = vector.broadcast %cst_12 : f32 to vector<1x12xf32>
    %24 = arith.cmpf ogt, %22, %23 : vector<1x12xf32>
    %25 = vector.broadcast %24 : vector<1x12xi1> to vector<12x12xi1>
    %26 = arith.andi %20, %25 : vector<12x12xi1>
    %cst_13 = arith.constant 0.000000e+00 : f32
    %27 = vector.broadcast %cst_13 : f32 to vector<12x128xf32>
    %28 = vector.extract_strided_slice %17 {offsets = [0, 0], sizes = [12, 32], strides = [1, 1]} : vector<12x384xf32> to vector<12x32xf32>
    %29 = vector.extract_strided_slice %17 {offsets = [0, 128], sizes = [12, 32], strides = [1, 1]} : vector<12x384xf32> to vector<12x32xf32>
    %30 = vector.extract_strided_slice %17 {offsets = [0, 256], sizes = [12, 32], strides = [1, 1]} : vector<12x384xf32> to vector<12x32xf32>
    %31 = arith.truncf %28 : vector<12x32xf32> to vector<12x32xbf16>
    %32 = arith.truncf %29 : vector<12x32xf32> to vector<12x32xbf16>
    %cst_14 = arith.constant dense<0.000000e+00> : vector<12x12xf32>
    %33 = tpu.matmul %31, %32, %cst_14 {dimension_numbers = #tpu.dot_dimension_numbers<[1], [1], [0], [0], [0, 0, 1, 0], [], []>} : vector<12x32xbf16>, vector<12x32xbf16>, vector<12x12xf32> -> vector<12x12xf32>
    %cst_15 = arith.constant 0.176776692 : f32
    %34 = vector.broadcast %cst_15 : f32 to vector<12x12xf32>
    %35 = arith.mulf %33, %34 : vector<12x12xf32>
    %cst_16 = arith.constant -1.000000e+30 : f32
    %36 = vector.broadcast %cst_16 : f32 to vector<12x12xf32>
    %37 = arith.select %26, %35, %36 : vector<12x12xi1>, vector<12x12xf32>
    %cst_17 = arith.constant dense<0xFF800000> : vector<12xf32>
    %38 = vector.multi_reduction <maximumf>, %37, %cst_17 [1] : vector<12x12xf32> to vector<12xf32>
    %39 = vector.shape_cast %38 : vector<12xf32> to vector<12x1xf32>
    %40 = vector.broadcast %39 : vector<12x1xf32> to vector<12x12xf32>
    %41 = arith.subf %37, %40 : vector<12x12xf32>
    %42 = math.exp %41 : vector<12x12xf32>
    %cst_18 = arith.constant dense<0.000000e+00> : vector<12xf32>
    %43 = vector.multi_reduction <add>, %42, %cst_18 [1] : vector<12x12xf32> to vector<12xf32>
    %44 = vector.shape_cast %43 : vector<12xf32> to vector<12x1xf32>
    %45 = tpu.reciprocal %44 : vector<12x1xf32> -> vector<12x1xf32>
    %46 = vector.broadcast %45 : vector<12x1xf32> to vector<12x12xf32>
    %47 = arith.mulf %42, %46 : vector<12x12xf32>
    %48 = arith.truncf %47 : vector<12x12xf32> to vector<12x12xbf16>
    %49 = arith.truncf %30 : vector<12x32xf32> to vector<12x32xbf16>
    %cst_19 = arith.constant dense<0.000000e+00> : vector<12x32xf32>
    %50 = tpu.matmul %48, %49, %cst_19 {dimension_numbers = #tpu.dot_dimension_numbers<[1], [0], [0], [1], [0, 0, 1, 1], [], []>} : vector<12x12xbf16>, vector<12x32xbf16>, vector<12x32xf32> -> vector<12x32xf32>
    %c0_20 = arith.constant 0 : index
    %c0_21 = arith.constant 0 : index
    %51 = vector.load %arg5[%c0_20, %c0_21] : memref<128x128xbf16, #tpu.memory_space<vmem>>, vector<32x128xbf16>
    %52 = arith.truncf %50 : vector<12x32xf32> to vector<12x32xbf16>
    %cst_22 = arith.constant dense<0.000000e+00> : vector<12x128xf32>
    %53 = tpu.matmul %52, %51, %cst_22 {dimension_numbers = #tpu.dot_dimension_numbers<[1], [0], [0], [1], [0, 0, 1, 1], [], []>} : vector<12x32xbf16>, vector<32x128xbf16>, vector<12x128xf32> -> vector<12x128xf32>
    %54 = arith.addf %27, %53 : vector<12x128xf32>
    %55 = vector.extract_strided_slice %17 {offsets = [0, 32], sizes = [12, 32], strides = [1, 1]} : vector<12x384xf32> to vector<12x32xf32>
    %56 = vector.extract_strided_slice %17 {offsets = [0, 160], sizes = [12, 32], strides = [1, 1]} : vector<12x384xf32> to vector<12x32xf32>
    %57 = vector.extract_strided_slice %17 {offsets = [0, 288], sizes = [12, 32], strides = [1, 1]} : vector<12x384xf32> to vector<12x32xf32>
    %58 = arith.truncf %55 : vector<12x32xf32> to vector<12x32xbf16>
    %59 = arith.truncf %56 : vector<12x32xf32> to vector<12x32xbf16>
    %cst_23 = arith.constant dense<0.000000e+00> : vector<12x12xf32>
    %60 = tpu.matmul %58, %59, %cst_23 {dimension_numbers = #tpu.dot_dimension_numbers<[1], [1], [0], [0], [0, 0, 1, 0], [], []>} : vector<12x32xbf16>, vector<12x32xbf16>, vector<12x12xf32> -> vector<12x12xf32>
    %cst_24 = arith.constant 0.176776692 : f32
    %61 = vector.broadcast %cst_24 : f32 to vector<12x12xf32>
    %62 = arith.mulf %60, %61 : vector<12x12xf32>
    %cst_25 = arith.constant -1.000000e+30 : f32
    %63 = vector.broadcast %cst_25 : f32 to vector<12x12xf32>
    %64 = arith.select %26, %62, %63 : vector<12x12xi1>, vector<12x12xf32>
    %cst_26 = arith.constant dense<0xFF800000> : vector<12xf32>
    %65 = vector.multi_reduction <maximumf>, %64, %cst_26 [1] : vector<12x12xf32> to vector<12xf32>
    %66 = vector.shape_cast %65 : vector<12xf32> to vector<12x1xf32>
    %67 = vector.broadcast %66 : vector<12x1xf32> to vector<12x12xf32>
    %68 = arith.subf %64, %67 : vector<12x12xf32>
    %69 = math.exp %68 : vector<12x12xf32>
    %cst_27 = arith.constant dense<0.000000e+00> : vector<12xf32>
    %70 = vector.multi_reduction <add>, %69, %cst_27 [1] : vector<12x12xf32> to vector<12xf32>
    %71 = vector.shape_cast %70 : vector<12xf32> to vector<12x1xf32>
    %72 = tpu.reciprocal %71 : vector<12x1xf32> -> vector<12x1xf32>
    %73 = vector.broadcast %72 : vector<12x1xf32> to vector<12x12xf32>
    %74 = arith.mulf %69, %73 : vector<12x12xf32>
    %75 = arith.truncf %74 : vector<12x12xf32> to vector<12x12xbf16>
    %76 = arith.truncf %57 : vector<12x32xf32> to vector<12x32xbf16>
    %cst_28 = arith.constant dense<0.000000e+00> : vector<12x32xf32>
    %77 = tpu.matmul %75, %76, %cst_28 {dimension_numbers = #tpu.dot_dimension_numbers<[1], [0], [0], [1], [0, 0, 1, 1], [], []>} : vector<12x12xbf16>, vector<12x32xbf16>, vector<12x32xf32> -> vector<12x32xf32>
    %c32 = arith.constant 32 : index
    %c0_29 = arith.constant 0 : index
    %78 = vector.load %arg5[%c32, %c0_29] : memref<128x128xbf16, #tpu.memory_space<vmem>>, vector<32x128xbf16>
    %79 = arith.truncf %77 : vector<12x32xf32> to vector<12x32xbf16>
    %cst_30 = arith.constant dense<0.000000e+00> : vector<12x128xf32>
    %80 = tpu.matmul %79, %78, %cst_30 {dimension_numbers = #tpu.dot_dimension_numbers<[1], [0], [0], [1], [0, 0, 1, 1], [], []>} : vector<12x32xbf16>, vector<32x128xbf16>, vector<12x128xf32> -> vector<12x128xf32>
    %81 = arith.addf %54, %80 : vector<12x128xf32>
    %82 = vector.extract_strided_slice %17 {offsets = [0, 64], sizes = [12, 32], strides = [1, 1]} : vector<12x384xf32> to vector<12x32xf32>
    %83 = vector.extract_strided_slice %17 {offsets = [0, 192], sizes = [12, 32], strides = [1, 1]} : vector<12x384xf32> to vector<12x32xf32>
    %84 = vector.extract_strided_slice %17 {offsets = [0, 320], sizes = [12, 32], strides = [1, 1]} : vector<12x384xf32> to vector<12x32xf32>
    %85 = arith.truncf %82 : vector<12x32xf32> to vector<12x32xbf16>
    %86 = arith.truncf %83 : vector<12x32xf32> to vector<12x32xbf16>
    %cst_31 = arith.constant dense<0.000000e+00> : vector<12x12xf32>
    %87 = tpu.matmul %85, %86, %cst_31 {dimension_numbers = #tpu.dot_dimension_numbers<[1], [1], [0], [0], [0, 0, 1, 0], [], []>} : vector<12x32xbf16>, vector<12x32xbf16>, vector<12x12xf32> -> vector<12x12xf32>
    %cst_32 = arith.constant 0.176776692 : f32
    %88 = vector.broadcast %cst_32 : f32 to vector<12x12xf32>
    %89 = arith.mulf %87, %88 : vector<12x12xf32>
    %cst_33 = arith.constant -1.000000e+30 : f32
    %90 = vector.broadcast %cst_33 : f32 to vector<12x12xf32>
    %91 = arith.select %26, %89, %90 : vector<12x12xi1>, vector<12x12xf32>
    %cst_34 = arith.constant dense<0xFF800000> : vector<12xf32>
    %92 = vector.multi_reduction <maximumf>, %91, %cst_34 [1] : vector<12x12xf32> to vector<12xf32>
    %93 = vector.shape_cast %92 : vector<12xf32> to vector<12x1xf32>
    %94 = vector.broadcast %93 : vector<12x1xf32> to vector<12x12xf32>
    %95 = arith.subf %91, %94 : vector<12x12xf32>
    %96 = math.exp %95 : vector<12x12xf32>
    %cst_35 = arith.constant dense<0.000000e+00> : vector<12xf32>
    %97 = vector.multi_reduction <add>, %96, %cst_35 [1] : vector<12x12xf32> to vector<12xf32>
    %98 = vector.shape_cast %97 : vector<12xf32> to vector<12x1xf32>
    %99 = tpu.reciprocal %98 : vector<12x1xf32> -> vector<12x1xf32>
    %100 = vector.broadcast %99 : vector<12x1xf32> to vector<12x12xf32>
    %101 = arith.mulf %96, %100 : vector<12x12xf32>
    %102 = arith.truncf %101 : vector<12x12xf32> to vector<12x12xbf16>
    %103 = arith.truncf %84 : vector<12x32xf32> to vector<12x32xbf16>
    %cst_36 = arith.constant dense<0.000000e+00> : vector<12x32xf32>
    %104 = tpu.matmul %102, %103, %cst_36 {dimension_numbers = #tpu.dot_dimension_numbers<[1], [0], [0], [1], [0, 0, 1, 1], [], []>} : vector<12x12xbf16>, vector<12x32xbf16>, vector<12x32xf32> -> vector<12x32xf32>
    %c64 = arith.constant 64 : index
    %c0_37 = arith.constant 0 : index
    %105 = vector.load %arg5[%c64, %c0_37] : memref<128x128xbf16, #tpu.memory_space<vmem>>, vector<32x128xbf16>
    %106 = arith.truncf %104 : vector<12x32xf32> to vector<12x32xbf16>
    %cst_38 = arith.constant dense<0.000000e+00> : vector<12x128xf32>
    %107 = tpu.matmul %106, %105, %cst_38 {dimension_numbers = #tpu.dot_dimension_numbers<[1], [0], [0], [1], [0, 0, 1, 1], [], []>} : vector<12x32xbf16>, vector<32x128xbf16>, vector<12x128xf32> -> vector<12x128xf32>
    %108 = arith.addf %81, %107 : vector<12x128xf32>
    %109 = vector.extract_strided_slice %17 {offsets = [0, 96], sizes = [12, 32], strides = [1, 1]} : vector<12x384xf32> to vector<12x32xf32>
    %110 = vector.extract_strided_slice %17 {offsets = [0, 224], sizes = [12, 32], strides = [1, 1]} : vector<12x384xf32> to vector<12x32xf32>
    %111 = vector.extract_strided_slice %17 {offsets = [0, 352], sizes = [12, 32], strides = [1, 1]} : vector<12x384xf32> to vector<12x32xf32>
    %112 = arith.truncf %109 : vector<12x32xf32> to vector<12x32xbf16>
    %113 = arith.truncf %110 : vector<12x32xf32> to vector<12x32xbf16>
    %cst_39 = arith.constant dense<0.000000e+00> : vector<12x12xf32>
    %114 = tpu.matmul %112, %113, %cst_39 {dimension_numbers = #tpu.dot_dimension_numbers<[1], [1], [0], [0], [0, 0, 1, 0], [], []>} : vector<12x32xbf16>, vector<12x32xbf16>, vector<12x12xf32> -> vector<12x12xf32>
    %cst_40 = arith.constant 0.176776692 : f32
    %115 = vector.broadcast %cst_40 : f32 to vector<12x12xf32>
    %116 = arith.mulf %114, %115 : vector<12x12xf32>
    %cst_41 = arith.constant -1.000000e+30 : f32
    %117 = vector.broadcast %cst_41 : f32 to vector<12x12xf32>
    %118 = arith.select %26, %116, %117 : vector<12x12xi1>, vector<12x12xf32>
    %cst_42 = arith.constant dense<0xFF800000> : vector<12xf32>
    %119 = vector.multi_reduction <maximumf>, %118, %cst_42 [1] : vector<12x12xf32> to vector<12xf32>
    %120 = vector.shape_cast %119 : vector<12xf32> to vector<12x1xf32>
    %121 = vector.broadcast %120 : vector<12x1xf32> to vector<12x12xf32>
    %122 = arith.subf %118, %121 : vector<12x12xf32>
    %123 = math.exp %122 : vector<12x12xf32>
    %cst_43 = arith.constant dense<0.000000e+00> : vector<12xf32>
    %124 = vector.multi_reduction <add>, %123, %cst_43 [1] : vector<12x12xf32> to vector<12xf32>
    %125 = vector.shape_cast %124 : vector<12xf32> to vector<12x1xf32>
    %126 = tpu.reciprocal %125 : vector<12x1xf32> -> vector<12x1xf32>
    %127 = vector.broadcast %126 : vector<12x1xf32> to vector<12x12xf32>
    %128 = arith.mulf %123, %127 : vector<12x12xf32>
    %129 = arith.truncf %128 : vector<12x12xf32> to vector<12x12xbf16>
    %130 = arith.truncf %111 : vector<12x32xf32> to vector<12x32xbf16>
    %cst_44 = arith.constant dense<0.000000e+00> : vector<12x32xf32>
    %131 = tpu.matmul %129, %130, %cst_44 {dimension_numbers = #tpu.dot_dimension_numbers<[1], [0], [0], [1], [0, 0, 1, 1], [], []>} : vector<12x12xbf16>, vector<12x32xbf16>, vector<12x32xf32> -> vector<12x32xf32>
    %c96 = arith.constant 96 : index
    %c0_45 = arith.constant 0 : index
    %132 = vector.load %arg5[%c96, %c0_45] : memref<128x128xbf16, #tpu.memory_space<vmem>>, vector<32x128xbf16>
    %133 = arith.truncf %131 : vector<12x32xf32> to vector<12x32xbf16>
    %cst_46 = arith.constant dense<0.000000e+00> : vector<12x128xf32>
    %134 = tpu.matmul %133, %132, %cst_46 {dimension_numbers = #tpu.dot_dimension_numbers<[1], [0], [0], [1], [0, 0, 1, 1], [], []>} : vector<12x32xbf16>, vector<32x128xbf16>, vector<12x128xf32> -> vector<12x128xf32>
    %135 = arith.addf %108, %134 : vector<12x128xf32>
    %136 = arith.addf %1, %135 : vector<12x128xf32>
    %c0_47 = arith.constant 0 : index
    %c0_48 = arith.constant 0 : index
    %137 = vector.load %arg6[%c0_47, %c0_48] : memref<1x128xf32, #tpu.memory_space<vmem>>, vector<1x128xf32>
    %138 = arith.mulf %136, %136 : vector<12x128xf32>
    %cst_49 = arith.constant dense<0.000000e+00> : vector<12xf32>
    %139 = vector.multi_reduction <add>, %138, %cst_49 [1] : vector<12x128xf32> to vector<12xf32>
    %140 = vector.shape_cast %139 : vector<12xf32> to vector<12x1xf32>
    %cst_50 = arith.constant 1.280000e+02 : f32
    %141 = vector.broadcast %cst_50 : f32 to vector<12x1xf32>
    %142 = arith.divf %140, %141 : vector<12x1xf32>
    %cst_51 = arith.constant 9.99999997E-7 : f32
    %143 = vector.broadcast %cst_51 : f32 to vector<12x1xf32>
    %144 = arith.addf %142, %143 : vector<12x1xf32>
    %145 = math.rsqrt %144 : vector<12x1xf32>
    %146 = vector.broadcast %145 : vector<12x1xf32> to vector<12x128xf32>
    %147 = arith.mulf %136, %146 : vector<12x128xf32>
    %148 = vector.broadcast %137 : vector<1x128xf32> to vector<12x128xf32>
    %149 = arith.mulf %147, %148 : vector<12x128xf32>
    %c0_52 = arith.constant 0 : index
    %c0_53 = arith.constant 0 : index
    %150 = vector.load %arg7[%c0_52, %c0_53] : memref<128x512xbf16, #tpu.memory_space<vmem>>, vector<128x512xbf16>
    %151 = arith.truncf %149 : vector<12x128xf32> to vector<12x128xbf16>
    %cst_54 = arith.constant dense<0.000000e+00> : vector<12x512xf32>
    %152 = tpu.matmul %151, %150, %cst_54 {dimension_numbers = #tpu.dot_dimension_numbers<[1], [0], [0], [1], [0, 0, 1, 1], [], []>} : vector<12x128xbf16>, vector<128x512xbf16>, vector<12x512xf32> -> vector<12x512xf32>
    %153 = vector.extract_strided_slice %152 {offsets = [0, 0], sizes = [12, 256], strides = [1, 1]} : vector<12x512xf32> to vector<12x256xf32>
    %154 = vector.extract_strided_slice %152 {offsets = [0, 256], sizes = [12, 256], strides = [1, 1]} : vector<12x512xf32> to vector<12x256xf32>
    %155 = arith.negf %153 : vector<12x256xf32>
    %156 = math.exp %155 : vector<12x256xf32>
    %cst_55 = arith.constant 1.000000e+00 : f32
    %157 = vector.broadcast %cst_55 : f32 to vector<12x256xf32>
    %158 = arith.addf %157, %156 : vector<12x256xf32>
    %159 = arith.divf %157, %158 : vector<12x256xf32>
    %160 = arith.mulf %153, %159 : vector<12x256xf32>
    %161 = arith.mulf %160, %154 : vector<12x256xf32>
    %c0_56 = arith.constant 0 : index
    %c0_57 = arith.constant 0 : index
    %162 = vector.load %arg8[%c0_56, %c0_57] : memref<256x128xbf16, #tpu.memory_space<vmem>>, vector<256x128xbf16>
    %163 = arith.truncf %161 : vector<12x256xf32> to vector<12x256xbf16>
    %cst_58 = arith.constant dense<0.000000e+00> : vector<12x128xf32>
    %164 = tpu.matmul %163, %162, %cst_58 {dimension_numbers = #tpu.dot_dimension_numbers<[1], [0], [0], [1], [0, 0, 1, 1], [], []>} : vector<12x256xbf16>, vector<256x128xbf16>, vector<12x128xf32> -> vector<12x128xf32>
    %165 = arith.addf %136, %164 : vector<12x128xf32>
    %c0_59 = arith.constant 0 : index
    %c0_60 = arith.constant 0 : index
    %c0_61 = arith.constant 0 : index
    %166 = vector.load %arg9[%c0_59, %c0_60, %c0_61] : memref<1x12x128xf32, #tpu.memory_space<vmem>>, vector<1x12x128xf32>
    %167 = vector.shape_cast %166 : vector<1x12x128xf32> to vector<12x128xf32>
    %168 = vector.shape_cast %165 : vector<12x128xf32> to vector<1x12x128xf32>
    tpu.vector_store %arg9[%c0_59, %c0_60, %c0_61], %168 {strides = array<i32>} : memref<1x12x128xf32, #tpu.memory_space<vmem>>, vector<1x12x128xf32>,
    return
  }
  func.func @transform_0(%arg0: i32) -> (i32, i32, i32) {
    %c0_i32 = arith.constant 0 : i32
    %c0_i32_0 = arith.constant 0 : i32
    %c0_i32_1 = arith.constant 0 : i32
    return %arg0, %c0_i32, %c0_i32_0 : i32, i32, i32
  }
  func.func @transform_1(%arg0: i32) -> (i32, i32, i32) {
    %c0_i32 = arith.constant 0 : i32
    %c0_i32_0 = arith.constant 0 : i32
    %c0_i32_1 = arith.constant 0 : i32
    return %arg0, %c0_i32, %c0_i32_0 : i32, i32, i32
  }
  func.func @transform_2(%arg0: i32) -> (i32, i32) {
    %c0_i32 = arith.constant 0 : i32
    %c0_i32_0 = arith.constant 0 : i32
    %c0_i32_1 = arith.constant 0 : i32
    return %c0_i32, %c0_i32_0 : i32, i32
  }
  func.func @transform_3(%arg0: i32) -> (i32, i32) {
    %c0_i32 = arith.constant 0 : i32
    %c0_i32_0 = arith.constant 0 : i32
    %c0_i32_1 = arith.constant 0 : i32
    return %c0_i32, %c0_i32_0 : i32, i32
  }
  func.func @transform_4(%arg0: i32) -> (i32, i32) {
    %c0_i32 = arith.constant 0 : i32
    %c0_i32_0 = arith.constant 0 : i32
    %c0_i32_1 = arith.constant 0 : i32
    return %c0_i32, %c0_i32_0 : i32, i32
  }
  func.func @transform_5(%arg0: i32) -> (i32, i32) {
    %c0_i32 = arith.constant 0 : i32
    %c0_i32_0 = arith.constant 0 : i32
    %c0_i32_1 = arith.constant 0 : i32
    return %c0_i32, %c0_i32_0 : i32, i32
  }
  func.func @transform_6(%arg0: i32) -> (i32, i32) {
    %c0_i32 = arith.constant 0 : i32
    %c0_i32_0 = arith.constant 0 : i32
    %c0_i32_1 = arith.constant 0 : i32
    return %c0_i32, %c0_i32_0 : i32, i32
  }
  func.func @transform_7(%arg0: i32) -> (i32, i32) {
    %c0_i32 = arith.constant 0 : i32
    %c0_i32_0 = arith.constant 0 : i32
    %c0_i32_1 = arith.constant 0 : i32
    return %c0_i32, %c0_i32_0 : i32, i32
  }
  func.func @transform_8(%arg0: i32) -> (i32, i32, i32) {
    %c0_i32 = arith.constant 0 : i32
    %c0_i32_0 = arith.constant 0 : i32
    %c0_i32_1 = arith.constant 0 : i32
    return %arg0, %c0_i32, %c0_i32_0 : i32, i32, i32
  }
}

module attributes {stable_mosaic.version = 11 : i64} {
  func.func @_head_kernel(%arg0: i32, %arg1: memref<1x12x128xf32, #tpu.memory_space<vmem>>, %arg2: memref<1x128xf32, #tpu.memory_space<vmem>>, %arg3: memref<128x256xbf16, #tpu.memory_space<vmem>>, %arg4: memref<1x256xf32, #tpu.memory_space<vmem>>, %arg5: memref<1x11x1xi32, #tpu.memory_space<vmem>>, %arg6: memref<1x12x256xf32, #tpu.memory_space<vmem>>, %arg7: memref<1x1x1xf32, #tpu.memory_space<vmem>>, %arg8: memref<1x1x1xf32, #tpu.memory_space<vmem>>) attributes {dimension_semantics = [#tpu.dimension_semantics<parallel>], iteration_bounds = array<i64: 2>, scalar_prefetch = 0 : i64, scratch_operands = 0 : i64, tpu.core_type = #tpu.core_type<tc>, window_params = [{transform_indices = @transform_0, window_bounds = array<i64: 1, 12, 128>}, {pipeline_mode = #tpu.pipeline_mode<synchronous>, transform_indices = @transform_1, window_bounds = array<i64: 1, 128>}, {pipeline_mode = #tpu.pipeline_mode<synchronous>, transform_indices = @transform_2, window_bounds = array<i64: 128, 256>}, {pipeline_mode = #tpu.pipeline_mode<synchronous>, transform_indices = @transform_3, window_bounds = array<i64: 1, 256>}, {transform_indices = @transform_4, window_bounds = array<i64: 1, 11, 1>}, {transform_indices = @transform_5, window_bounds = array<i64: 1, 12, 256>}, {transform_indices = @transform_6, window_bounds = array<i64: 1, 1, 1>}, {transform_indices = @transform_7, window_bounds = array<i64: 1, 1, 1>}]} {
    %c0 = arith.constant 0 : index
    %c0_0 = arith.constant 0 : index
    %c0_1 = arith.constant 0 : index
    %0 = vector.load %arg1[%c0, %c0_0, %c0_1] : memref<1x12x128xf32, #tpu.memory_space<vmem>>, vector<1x12x128xf32>
    %1 = vector.shape_cast %0 : vector<1x12x128xf32> to vector<12x128xf32>
    %c0_2 = arith.constant 0 : index
    %c0_3 = arith.constant 0 : index
    %2 = vector.load %arg2[%c0_2, %c0_3] : memref<1x128xf32, #tpu.memory_space<vmem>>, vector<1x128xf32>
    %3 = arith.mulf %1, %1 : vector<12x128xf32>
    %cst = arith.constant dense<0.000000e+00> : vector<12xf32>
    %4 = vector.multi_reduction <add>, %3, %cst [1] : vector<12x128xf32> to vector<12xf32>
    %5 = vector.shape_cast %4 : vector<12xf32> to vector<12x1xf32>
    %cst_4 = arith.constant 1.280000e+02 : f32
    %6 = vector.broadcast %cst_4 : f32 to vector<12x1xf32>
    %7 = arith.divf %5, %6 : vector<12x1xf32>
    %cst_5 = arith.constant 9.99999997E-7 : f32
    %8 = vector.broadcast %cst_5 : f32 to vector<12x1xf32>
    %9 = arith.addf %7, %8 : vector<12x1xf32>
    %10 = math.rsqrt %9 : vector<12x1xf32>
    %11 = vector.broadcast %10 : vector<12x1xf32> to vector<12x128xf32>
    %12 = arith.mulf %1, %11 : vector<12x128xf32>
    %13 = vector.broadcast %2 : vector<1x128xf32> to vector<12x128xf32>
    %14 = arith.mulf %12, %13 : vector<12x128xf32>
    %c0_6 = arith.constant 0 : index
    %c0_7 = arith.constant 0 : index
    %15 = vector.load %arg3[%c0_6, %c0_7] : memref<128x256xbf16, #tpu.memory_space<vmem>>, vector<128x256xbf16>
    %16 = arith.truncf %14 : vector<12x128xf32> to vector<12x128xbf16>
    %cst_8 = arith.constant dense<0.000000e+00> : vector<12x256xf32>
    %17 = tpu.matmul %16, %15, %cst_8 {dimension_numbers = #tpu.dot_dimension_numbers<[1], [0], [0], [1], [0, 0, 1, 1], [], []>} : vector<12x128xbf16>, vector<128x256xbf16>, vector<12x256xf32> -> vector<12x256xf32>
    %c0_9 = arith.constant 0 : index
    %c0_10 = arith.constant 0 : index
    %18 = vector.load %arg4[%c0_9, %c0_10] : memref<1x256xf32, #tpu.memory_space<vmem>>, vector<1x256xf32>
    %19 = vector.broadcast %18 : vector<1x256xf32> to vector<12x256xf32>
    %20 = arith.addf %17, %19 : vector<12x256xf32>
    %c0_11 = arith.constant 0 : index
    %c0_12 = arith.constant 0 : index
    %c0_13 = arith.constant 0 : index
    %21 = vector.load %arg6[%c0_11, %c0_12, %c0_13] : memref<1x12x256xf32, #tpu.memory_space<vmem>>, vector<1x12x256xf32>
    %22 = vector.shape_cast %21 : vector<1x12x256xf32> to vector<12x256xf32>
    %23 = vector.shape_cast %20 : vector<12x256xf32> to vector<1x12x256xf32>
    tpu.vector_store %arg6[%c0_11, %c0_12, %c0_13], %23 {strides = array<i32>} : memref<1x12x256xf32, #tpu.memory_space<vmem>>, vector<1x12x256xf32>,
    %24 = vector.extract_strided_slice %20 {offsets = [0, 0], sizes = [11, 256], strides = [1, 1]} : vector<12x256xf32> to vector<11x256xf32>
    %c0_14 = arith.constant 0 : index
    %c0_15 = arith.constant 0 : index
    %c0_16 = arith.constant 0 : index
    %25 = vector.load %arg5[%c0_14, %c0_15, %c0_16] : memref<1x11x1xi32, #tpu.memory_space<vmem>>, vector<1x11x1xi32>
    %26 = vector.shape_cast %25 : vector<1x11x1xi32> to vector<11x1xi32>
    %cst_17 = arith.constant dense<0xFF800000> : vector<11xf32>
    %27 = vector.multi_reduction <maximumf>, %24, %cst_17 [1] : vector<11x256xf32> to vector<11xf32>
    %28 = vector.shape_cast %27 : vector<11xf32> to vector<11x1xf32>
    %29 = vector.broadcast %28 : vector<11x1xf32> to vector<11x256xf32>
    %30 = arith.subf %24, %29 : vector<11x256xf32>
    %31 = math.exp %30 : vector<11x256xf32>
    %cst_18 = arith.constant dense<0.000000e+00> : vector<11xf32>
    %32 = vector.multi_reduction <add>, %31, %cst_18 [1] : vector<11x256xf32> to vector<11xf32>
    %33 = vector.shape_cast %32 : vector<11xf32> to vector<11x1xf32>
    %34 = math.log %33 : vector<11x1xf32>
    %35 = arith.addf %34, %28 : vector<11x1xf32>
    %36 = tpu.iota {dimensions = array<i32: 1>} : vector<11x256xi32>
    %37 = vector.broadcast %26 : vector<11x1xi32> to vector<11x256xi32>
    %38 = arith.cmpi eq, %36, %37 : vector<11x256xi32>
    %cst_19 = arith.constant 0.000000e+00 : f32
    %39 = vector.broadcast %cst_19 : f32 to vector<11x256xf32>
    %40 = arith.select %38, %24, %39 : vector<11x256xi1>, vector<11x256xf32>
    %cst_20 = arith.constant dense<0.000000e+00> : vector<11xf32>
    %41 = vector.multi_reduction <add>, %40, %cst_20 [1] : vector<11x256xf32> to vector<11xf32>
    %42 = vector.shape_cast %41 : vector<11xf32> to vector<11x1xf32>
    %c0_i32 = arith.constant 0 : i32
    %43 = vector.broadcast %c0_i32 : i32 to vector<11x1xi32>
    %44 = arith.cmpi sge, %26, %43 : vector<11x1xi32>
    %45 = arith.extui %44 : vector<11x1xi1> to vector<11x1xi32>
    %46 = arith.sitofp %45 : vector<11x1xi32> to vector<11x1xf32>
    %47 = arith.subf %35, %42 : vector<11x1xf32>
    %48 = arith.mulf %47, %46 : vector<11x1xf32>
    %cst_21 = arith.constant dense<0.000000e+00> : vector<1xf32>
    %49 = vector.multi_reduction <add>, %48, %cst_21 [0] : vector<11x1xf32> to vector<1xf32>
    %50 = vector.shape_cast %49 : vector<1xf32> to vector<1x1xf32>
    %c0_22 = arith.constant 0 : index
    %c0_23 = arith.constant 0 : index
    %c0_24 = arith.constant 0 : index
    %51 = vector.load %arg7[%c0_22, %c0_23, %c0_24] : memref<1x1x1xf32, #tpu.memory_space<vmem>>, vector<1x1x1xf32>
    %52 = vector.shape_cast %51 : vector<1x1x1xf32> to vector<1x1xf32>
    %53 = vector.shape_cast %50 : vector<1x1xf32> to vector<1x1x1xf32>
    tpu.vector_store %arg7[%c0_22, %c0_23, %c0_24], %53 {strides = array<i32>} : memref<1x1x1xf32, #tpu.memory_space<vmem>>, vector<1x1x1xf32>,
    %cst_25 = arith.constant dense<0.000000e+00> : vector<1xf32>
    %54 = vector.multi_reduction <add>, %46, %cst_25 [0] : vector<11x1xf32> to vector<1xf32>
    %55 = vector.shape_cast %54 : vector<1xf32> to vector<1x1xf32>
    %c0_26 = arith.constant 0 : index
    %c0_27 = arith.constant 0 : index
    %c0_28 = arith.constant 0 : index
    %56 = vector.load %arg8[%c0_26, %c0_27, %c0_28] : memref<1x1x1xf32, #tpu.memory_space<vmem>>, vector<1x1x1xf32>
    %57 = vector.shape_cast %56 : vector<1x1x1xf32> to vector<1x1xf32>
    %58 = vector.shape_cast %55 : vector<1x1xf32> to vector<1x1x1xf32>
    tpu.vector_store %arg8[%c0_26, %c0_27, %c0_28], %58 {strides = array<i32>} : memref<1x1x1xf32, #tpu.memory_space<vmem>>, vector<1x1x1xf32>,
    return
  }
  func.func @transform_0(%arg0: i32) -> (i32, i32, i32) {
    %c0_i32 = arith.constant 0 : i32
    %c0_i32_0 = arith.constant 0 : i32
    %c0_i32_1 = arith.constant 0 : i32
    return %arg0, %c0_i32, %c0_i32_0 : i32, i32, i32
  }
  func.func @transform_1(%arg0: i32) -> (i32, i32) {
    %c0_i32 = arith.constant 0 : i32
    %c0_i32_0 = arith.constant 0 : i32
    %c0_i32_1 = arith.constant 0 : i32
    return %c0_i32, %c0_i32_0 : i32, i32
  }
  func.func @transform_2(%arg0: i32) -> (i32, i32) {
    %c0_i32 = arith.constant 0 : i32
    %c0_i32_0 = arith.constant 0 : i32
    %c0_i32_1 = arith.constant 0 : i32
    return %c0_i32, %c0_i32_0 : i32, i32
  }
  func.func @transform_3(%arg0: i32) -> (i32, i32) {
    %c0_i32 = arith.constant 0 : i32
    %c0_i32_0 = arith.constant 0 : i32
    %c0_i32_1 = arith.constant 0 : i32
    return %c0_i32, %c0_i32_0 : i32, i32
  }
  func.func @transform_4(%arg0: i32) -> (i32, i32, i32) {
    %c0_i32 = arith.constant 0 : i32
    %c0_i32_0 = arith.constant 0 : i32
    %c0_i32_1 = arith.constant 0 : i32
    return %arg0, %c0_i32, %c0_i32_0 : i32, i32, i32
  }
  func.func @transform_5(%arg0: i32) -> (i32, i32, i32) {
    %c0_i32 = arith.constant 0 : i32
    %c0_i32_0 = arith.constant 0 : i32
    %c0_i32_1 = arith.constant 0 : i32
    return %arg0, %c0_i32, %c0_i32_0 : i32, i32, i32
  }
  func.func @transform_6(%arg0: i32) -> (i32, i32, i32) {
    %c0_i32 = arith.constant 0 : i32
    %c0_i32_0 = arith.constant 0 : i32
    %c0_i32_1 = arith.constant 0 : i32
    return %arg0, %c0_i32, %c0_i32_0 : i32, i32, i32
  }
  func.func @transform_7(%arg0: i32) -> (i32, i32, i32) {
    %c0_i32 = arith.constant 0 : i32
    %c0_i32_0 = arith.constant 0 : i32
    %c0_i32_1 = arith.constant 0 : i32
    return %arg0, %c0_i32, %c0_i32_0 : i32, i32, i32
  }
}

</mosaic_0001>

<llo_original>
// kernel: forward.3
$region0: #{forward.3}
  #allocation0 [shape = 'u32[]', space=smem, size = 0x4, offset = 0x4, fixed_abs, tag = 'smem constant byte address 0x4 - core index']
  #allocation1 [shape = 'u32[144,128]{1,0:T(1,128)}', space=vmem, size = 0x12000, scoped, tag = 'internal scratch']
  %s0 = inlined_call_operand.vmem [shape: f32[2,4,192], index: 0, kind: input, shape index: {}]
  %s1 = inlined_call_operand.vmem [shape: bf16[192,128], index: 1, kind: input, shape index: {}]
  %s2 = inlined_call_operand.vmem [shape: f32[1,128], index: 2, kind: input, shape index: {}]
  %s3 = inlined_call_operand.vmem [shape: f32[1,128], index: 3, kind: input, shape index: {}]
  %s4 = inlined_call_operand.vmem [shape: bf16[128,128], index: 4, kind: input, shape index: {}]
  %s5 = inlined_call_operand.vmem [shape: f32[1,128], index: 5, kind: input, shape index: {}]
  %s6 = inlined_call_operand.vmem [shape: bf16[128,128], index: 6, kind: input, shape index: {}]
  %s7 = inlined_call_operand.vmem [shape: f32[1,128], index: 7, kind: input, shape index: {}]
  %s8 = inlined_call_operand.vmem [shape: f32[2,4,128], index: 8, kind: input, shape index: {}]
  %s9 = inlined_call_operand.hbm [shape: f32[2,4,128], index: 9, kind: output, shape index: {0}]
  %s10 = inlined_call_operand.vmem [shape: f32[2,4,128], index: 10, kind: output, shape index: {1}]
  %s11 = inlined_call_operand.vmem [shape: f32[2,1,1], index: 11, kind: output, shape index: {2}]
  %12 = xla_tuple %s9, %s10, %s11
  %s13 = sld [smem:[#allocation0]]
  $region85: #{forward.3} parent=0
    _
  %s15 = ssub.s32 1, %s13
  %s16 = scalar_select 0, %s15, %s13
  $region1: #{forward.3} parent=0
    #allocation2 [shape = 'u8[4096]{0}', space=vmem, size = 0x1000, scoped, tag = 'output window, operand 0']
    #allocation3 [shape = 's32[2]{0}', space=sflag, size = 0x8, scoped, tag = 'scoped memory for forward.3']
    %17 = vsyncpa [#allocation3], 0
    %s18 = scalar_lea.sflag [#allocation3], 1
    %19 = vsyncpa %s18, 0
    loop: start=0, step=1, limit=4
    $region2: #{forward.3} parent=1 // loop_pre_header
      _
    $region3: #{forward.3} parent=1 // loop_header
      %s21 = sphi 0, %s25
      %p22 = scmp.ge.s32.totalorder %s21, 4
      %s31 = sphi 0, %s33
      %s34 = sphi 0, %s31
      %s35 = sphi 0, %s34
      %s51 = sphi 0, %s35
      %s55 = sphi 0, %s55
      %s57 = sphi 0, %s55
      %s58 = sphi 0, %s57
      %s72 = sphi 0, %s58
      %s76 = sphi 0, %s76
      %s78 = sphi 0, %s76
      %s79 = sphi 0, %s78
      %s93 = sphi 0, %s79
      %s97 = sphi 0, %s97
      %s99 = sphi 0, %s97
      %s100 = sphi 0, %s99
      %s114 = sphi 0, %s100
      %s118 = sphi 0, %s118
      %s120 = sphi 0, %s118
      %s121 = sphi 0, %s120
      %s135 = sphi 0, %s121
      %s139 = sphi 0, %s139
      %s141 = sphi 0, %s139
      %s142 = sphi 0, %s141
      %s156 = sphi 0, %s142
      %s160 = sphi 0, %s160
      %s162 = sphi 0, %s160
      %s163 = sphi 0, %s162
      %s177 = sphi 0, %s163
      %s181 = sphi 0, %s181
      %s183 = sphi 0, %s181
      %s184 = sphi 0, %s183
      %s198 = sphi 0, %s184
      %s204 = sphi 0, %s206
      %s207 = sphi 0, %s204
      %s208 = sphi 0, %s207
      %s224 = sphi 0, %s208
      %s230 = sphi 0, %s232
      %s233 = sphi 0, %s230
      %s234 = sphi 0, %s233
      %s250 = sphi 0, %s234
      %s256 = sphi 0, %s258
      %s259 = sphi 0, %s256
      %s260 = sphi 0, %s259
      %s276 = sphi 0, %s260
      %s282 = sphi 0, %s284
      %s285 = sphi 0, %s282
      %s286 = sphi 0, %s285
      %s302 = sphi 0, %s286
    $region4: #{forward.3} parent=1 // loop_header_branch
      %24 = sbr.rel (%p22) target = $region8
    $region5: #{forward.3} parent=1 // loop_body
      %s26 = ssub.s32 %s21, 1
      %s27 = ssub.s32 %s21, 2
      %s28 = sadd.s32 %s21, 1
      %s29 = ssub.s32 %s21, %s28
      %p30 = scmp.eq.s32.totalorder %s29, 0
      %s32 = sadd.s32 %s31, 1
      %s33 = scalar_select %p30, %s31, %s32
      %p36 = pneg %p30
      %p37 = scmp.eq.s32.totalorder %s21, 1
      %p38 = por %p36, %p37
      %p39 = scmp.ne.s32.totalorder %s31, %s34
      %p40 = scmp.eq.s32.totalorder %s21, 0
      %p41 = por %p39, %p40
      %p42 = scmp.ne.s32.totalorder %s31, %s34
      %p43 = scmp.eq.s32.totalorder %s26, 1
      %p44 = por %p42, %p43
      %p45 = scmp.ne.s32.totalorder %s34, %s35
      %p46 = scmp.eq.s32.totalorder %s26, 0
      %p47 = por %p45, %p46
      %p48 = scmp.ne.s32.totalorder %s34, %s35
      %p49 = scmp.eq.s32.totalorder %s27, 1
      %p50 = por %p48, %p49
      %p52 = scmp.ne.s32.totalorder %s35, %s51
      %p53 = scmp.eq.s32.totalorder %s27, 0
      %p54 = por %p52, %p53
      %s56 = sadd.s32 %s55, 1
      %p59 = scmp.eq.s32.totalorder %s21, 1
      %p60 = scmp.ne.s32.totalorder %s55, %s57
      %p61 = scmp.eq.s32.totalorder %s21, 0
      %p62 = por %p60, %p61
      %p63 = scmp.ne.s32.totalorder %s55, %s57
      %p64 = scmp.eq.s32.totalorder %s26, 1
      %p65 = por %p63, %p64
      %p66 = scmp.ne.s32.totalorder %s57, %s58
      %p67 = scmp.eq.s32.totalorder %s26, 0
      %p68 = por %p66, %p67
      %p69 = scmp.ne.s32.totalorder %s57, %s58
      %p70 = scmp.eq.s32.totalorder %s27, 1
      %p71 = por %p69, %p70
      %p73 = scmp.ne.s32.totalorder %s58, %s72
      %p74 = scmp.eq.s32.totalorder %s27, 0
      %p75 = por %p73, %p74
      %s77 = sadd.s32 %s76, 1
      %p80 = scmp.eq.s32.totalorder %s21, 1
      %p81 = scmp.ne.s32.totalorder %s76, %s78
      %p82 = scmp.eq.s32.totalorder %s21, 0
      %p83 = por %p81, %p82
      %p84 = scmp.ne.s32.totalorder %s76, %s78
      %p85 = scmp.eq.s32.totalorder %s26, 1
      %p86 = por %p84, %p85
      %p87 = scmp.ne.s32.totalorder %s78, %s79
      %p88 = scmp.eq.s32.totalorder %s26, 0
      %p89 = por %p87, %p88
      %p90 = scmp.ne.s32.totalorder %s78, %s79
      %p91 = scmp.eq.s32.totalorder %s27, 1
      %p92 = por %p90, %p91
      %p94 = scmp.ne.s32.totalorder %s79, %s93
      %p95 = scmp.eq.s32.totalorder %s27, 0
      %p96 = por %p94, %p95
      %s98 = sadd.s32 %s97, 1
      %p101 = scmp.eq.s32.totalorder %s21, 1
      %p102 = scmp.ne.s32.totalorder %s97, %s99
      %p103 = scmp.eq.s32.totalorder %s21, 0
      %p104 = por %p102, %p103
      %p105 = scmp.ne.s32.totalorder %s97, %s99
      %p106 = scmp.eq.s32.totalorder %s26, 1
      %p107 = por %p105, %p106
      %p108 = scmp.ne.s32.totalorder %s99, %s100
      %p109 = scmp.eq.s32.totalorder %s26, 0
      %p110 = por %p108, %p109
      %p111 = scmp.ne.s32.totalorder %s99, %s100
      %p112 = scmp.eq.s32.totalorder %s27, 1
      %p113 = por %p111, %p112
      %p115 = scmp.ne.s32.totalorder %s100, %s114
      %p116 = scmp.eq.s32.totalorder %s27, 0
      %p117 = por %p115, %p116
      %s119 = sadd.s32 %s118, 1
      %p122 = scmp.eq.s32.totalorder %s21, 1
      %p123 = scmp.ne.s32.totalorder %s118, %s120
      %p124 = scmp.eq.s32.totalorder %s21, 0
      %p125 = por %p123, %p124
      %p126 = scmp.ne.s32.totalorder %s118, %s120
      %p127 = scmp.eq.s32.totalorder %s26, 1
      %p128 = por %p126, %p127
      %p129 = scmp.ne.s32.totalorder %s120, %s121
      %p130 = scmp.eq.s32.totalorder %s26, 0
      %p131 = por %p129, %p130
      %p132 = scmp.ne.s32.totalorder %s120, %s121
      %p133 = scmp.eq.s32.totalorder %s27, 1
      %p134 = por %p132, %p133
      %p136 = scmp.ne.s32.totalorder %s121, %s135
      %p137 = scmp.eq.s32.totalorder %s27, 0
      %p138 = por %p136, %p137
      %s140 = sadd.s32 %s139, 1
      %p143 = scmp.eq.s32.totalorder %s21, 1
      %p144 = scmp.ne.s32.totalorder %s139, %s141
      %p145 = scmp.eq.s32.totalorder %s21, 0
      %p146 = por %p144, %p145
      %p147 = scmp.ne.s32.totalorder %s139, %s141
      %p148 = scmp.eq.s32.totalorder %s26, 1
      %p149 = por %p147, %p148
      %p150 = scmp.ne.s32.totalorder %s141, %s142
      %p151 = scmp.eq.s32.totalorder %s26, 0
      %p152 = por %p150, %p151
      %p153 = scmp.ne.s32.totalorder %s141, %s142
      %p154 = scmp.eq.s32.totalorder %s27, 1
      %p155 = por %p153, %p154
      %p157 = scmp.ne.s32.totalorder %s142, %s156
      %p158 = scmp.eq.s32.totalorder %s27, 0
      %p159 = por %p157, %p158
      %s161 = sadd.s32 %s160, 1
      %p164 = scmp.eq.s32.totalorder %s21, 1
      %p165 = scmp.ne.s32.totalorder %s160, %s162
      %p166 = scmp.eq.s32.totalorder %s21, 0
      %p167 = por %p165, %p166
      %p168 = scmp.ne.s32.totalorder %s160, %s162
      %p169 = scmp.eq.s32.totalorder %s26, 1
      %p170 = por %p168, %p169
      %p171 = scmp.ne.s32.totalorder %s162, %s163
      %p172 = scmp.eq.s32.totalorder %s26, 0
      %p173 = por %p171, %p172
      %p174 = scmp.ne.s32.totalorder %s162, %s163
      %p175 = scmp.eq.s32.totalorder %s27, 1
      %p176 = por %p174, %p175
      %p178 = scmp.ne.s32.totalorder %s163, %s177
      %p179 = scmp.eq.s32.totalorder %s27, 0
      %p180 = por %p178, %p179
      %s182 = sadd.s32 %s181, 1
      %p185 = scmp.eq.s32.totalorder %s21, 1
      %p186 = scmp.ne.s32.totalorder %s181, %s183
      %p187 = scmp.eq.s32.totalorder %s21, 0
      %p188 = por %p186, %p187
      %p189 = scmp.ne.s32.totalorder %s181, %s183
      %p190 = scmp.eq.s32.totalorder %s26, 1
      %p191 = por %p189, %p190
      %p192 = scmp.ne.s32.totalorder %s183, %s184
      %p193 = scmp.eq.s32.totalorder %s26, 0
      %p194 = por %p192, %p193
      %p195 = scmp.ne.s32.totalorder %s183, %s184
      %p196 = scmp.eq.s32.totalorder %s27, 1
      %p197 = por %p195, %p196
      %p199 = scmp.ne.s32.totalorder %s184, %s198
      %p200 = scmp.eq.s32.totalorder %s27, 0
      %p201 = por %p199, %p200
      %s202 = ssub.s32 %s21, %s28
      %p203 = scmp.eq.s32.totalorder %s202, 0
      %s205 = sadd.s32 %s204, 1
      %s206 = scalar_select %p203, %s204, %s205
      %p209 = pneg %p203
      %p210 = scmp.eq.s32.totalorder %s21, 1
      %p211 = por %p209, %p210
      %p212 = scmp.ne.s32.totalorder %s204, %s207
      %p213 = scmp.eq.s32.totalorder %s21, 0
      %p214 = por %p212, %p213
      %p215 = scmp.ne.s32.totalorder %s204, %s207
      %p216 = scmp.eq.s32.totalorder %s26, 1
      %p217 = por %p215, %p216
      %p218 = scmp.ne.s32.totalorder %s207, %s208
      %p219 = scmp.eq.s32.totalorder %s26, 0
      %p220 = por %p218, %p219
      %p221 = scmp.ne.s32.totalorder %s207, %s208
      %p222 = scmp.eq.s32.totalorder %s27, 1
      %p223 = por %p221, %p222
      %p225 = scmp.ne.s32.totalorder %s208, %s224
      %p226 = scmp.eq.s32.totalorder %s27, 0
      %p227 = por %p225, %p226
      %s228 = ssub.s32 %s21, %s28
      %p229 = scmp.eq.s32.totalorder %s228, 0
      %s231 = sadd.s32 %s230, 1
      %s232 = scalar_select %p229, %s230, %s231
      %p235 = pneg %p229
      %p236 = scmp.eq.s32.totalorder %s21, 1
      %p237 = por %p235, %p236
      %p238 = scmp.ne.s32.totalorder %s230, %s233
      %p239 = scmp.eq.s32.totalorder %s21, 0
      %p240 = por %p238, %p239
      %p241 = scmp.ne.s32.totalorder %s230, %s233
      %p242 = scmp.eq.s32.totalorder %s26, 1
      %p243 = por %p241, %p242
      %p244 = scmp.ne.s32.totalorder %s233, %s234
      %p245 = scmp.eq.s32.totalorder %s26, 0
      %p246 = por %p244, %p245
      %p247 = scmp.ne.s32.totalorder %s233, %s234
      %p248 = scmp.eq.s32.totalorder %s27, 1
      %p249 = por %p247, %p248
      %p251 = scmp.ne.s32.totalorder %s234, %s250
      %p252 = scmp.eq.s32.totalorder %s27, 0
      %p253 = por %p251, %p252
      %s254 = ssub.s32 %s21, %s28
      %p255 = scmp.eq.s32.totalorder %s254, 0
      %s257 = sadd.s32 %s256, 1
      %s258 = scalar_select %p255, %s256, %s257
      %p261 = pneg %p255
      %p262 = scmp.eq.s32.totalorder %s21, 1
      %p263 = por %p261, %p262
      %p264 = scmp.ne.s32.totalorder %s256, %s259
      %p265 = scmp.eq.s32.totalorder %s21, 0
      %p266 = por %p264, %p265
      %p267 = scmp.ne.s32.totalorder %s256, %s259
      %p268 = scmp.eq.s32.totalorder %s26, 1
      %p269 = por %p267, %p268
      %p270 = scmp.ne.s32.totalorder %s259, %s260
      %p271 = scmp.eq.s32.totalorder %s26, 0
      %p272 = por %p270, %p271
      %p273 = scmp.ne.s32.totalorder %s259, %s260
      %p274 = scmp.eq.s32.totalorder %s27, 1
      %p275 = por %p273, %p274
      %p277 = scmp.ne.s32.totalorder %s260, %s276
      %p278 = scmp.eq.s32.totalorder %s27, 0
      %p279 = por %p277, %p278
      %s280 = ssub.s32 %s21, %s28
      %p281 = scmp.eq.s32.totalorder %s280, 0
      %s283 = sadd.s32 %s282, 1
      %s284 = scalar_select %p281, %s282, %s283
      %p287 = pneg %p281
      %p288 = scmp.eq.s32.totalorder %s21, 1
      %p289 = por %p287, %p288
      %p290 = scmp.ne.s32.totalorder %s282, %s285
      %p291 = scmp.eq.s32.totalorder %s21, 0
      %p292 = por %p290, %p291
      %p293 = scmp.ne.s32.totalorder %s282, %s285
      %p294 = scmp.eq.s32.totalorder %s26, 1
      %p295 = por %p293, %p294
      %p296 = scmp.ne.s32.totalorder %s285, %s286
      %p297 = scmp.eq.s32.totalorder %s26, 0
      %p298 = por %p296, %p297
      %p299 = scmp.ne.s32.totalorder %s285, %s286
      %p300 = scmp.eq.s32.totalorder %s27, 1
      %p301 = por %p299, %p300
      %p303 = scmp.ne.s32.totalorder %s286, %s302
      %p304 = scmp.eq.s32.totalorder %s27, 0
      %p305 = por %p303, %p304
      %p306 = scmp.le.s32.totalorder 1, %s21
      %p307 = scmp.lt.s32.totalorder %s21, 3
      %p308 = pnand %p306, %p307
      %p309 = pneg %p308
      // Predicated region
      $region9: #{forward.3} parent=5 // pred_check
        _
      $region10: #{forward.3} parent=5 // pred_check_branch
        %311 = sbr.rel (%p308) target = $region12
      $region11: #{forward.3} parent=5 // pred_region
        %s312 = ssub.s32 %s21, 1
        // Predicated region
        $region13: #{forward.3} parent=11 // pred_check
          %p313 = pneg %p68
        $region14: #{forward.3} parent=11 // pred_check_branch
          %315 = sbr.rel (%p313) target = $region16
        $region15: #{forward.3} parent=11 // pred_region
          _
        $region16: #{forward.3} parent=11 // pred_fallthru
          _
        // Predicated region
        $region17: #{forward.3} parent=11 // pred_check
          %p316 = pneg %p89
        $region18: #{forward.3} parent=11 // pred_check_branch
          %318 = sbr.rel (%p316) target = $region20
        $region19: #{forward.3} parent=11 // pred_region
          _
        $region20: #{forward.3} parent=11 // pred_fallthru
          _
        // Predicated region
        $region21: #{forward.3} parent=11 // pred_check
          %p319 = pneg %p110
        $region22: #{forward.3} parent=11 // pred_check_branch
          %321 = sbr.rel (%p319) target = $region24
        $region23: #{forward.3} parent=11 // pred_region
          _
        $region24: #{forward.3} parent=11 // pred_fallthru
          _
        // Predicated region
        $region25: #{forward.3} parent=11 // pred_check
          %p322 = pneg %p131
        $region26: #{forward.3} parent=11 // pred_check_branch
          %324 = sbr.rel (%p322) target = $region28
        $region27: #{forward.3} parent=11 // pred_region
          _
        $region28: #{forward.3} parent=11 // pred_fallthru
          _
        // Predicated region
        $region29: #{forward.3} parent=11 // pred_check
          %p325 = pneg %p152
        $region30: #{forward.3} parent=11 // pred_check_branch
          %327 = sbr.rel (%p325) target = $region32
        $region31: #{forward.3} parent=11 // pred_region
          _
        $region32: #{forward.3} parent=11 // pred_fallthru
          _
        // Predicated region
        $region33: #{forward.3} parent=11 // pred_check
          %p328 = pneg %p173
        $region34: #{forward.3} parent=11 // pred_check_branch
          %330 = sbr.rel (%p328) target = $region36
        $region35: #{forward.3} parent=11 // pred_region
          _
        $region36: #{forward.3} parent=11 // pred_fallthru
          _
        // Predicated region
        $region37: #{forward.3} parent=11 // pred_check
          %p331 = pneg %p194
        $region38: #{forward.3} parent=11 // pred_check_branch
          %333 = sbr.rel (%p331) target = $region40
        $region39: #{forward.3} parent=11 // pred_region
          _
        $region40: #{forward.3} parent=11 // pred_fallthru
          _
      $region12: #{forward.3} parent=5 // pred_fallthru
        _
      %p334 = scmp.lt.s32.totalorder %s21, 2
      // Predicated region
      $region41: #{forward.3} parent=5 // pred_check
        %p335 = pneg %p334
      $region42: #{forward.3} parent=5 // pred_check_branch
        %337 = sbr.rel (%p335) target = $region44
      $region43: #{forward.3} parent=5 // pred_region
        // Predicated region
        $region45: #{forward.3} parent=43 // pred_check
          %p338 = pneg %p41
        $region46: #{forward.3} parent=43 // pred_check_branch
          %340 = sbr.rel (%p338) target = $region48
        $region47: #{forward.3} parent=43 // pred_region
          %p341 = scmp.lt.s32.totalorder %s21, 1
          %s342 = scalar_select %p341, %s21, 1
          %s343 = smul.addr %s342, 2
          %s344 = smul.addr %s343, 4
          %s345 = scalar_lea.vmem %s0, %s344
        $region48: #{forward.3} parent=43 // pred_fallthru
          _
        // Predicated region
        $region49: #{forward.3} parent=43 // pred_check
          %p346 = pneg %p214
        $region50: #{forward.3} parent=43 // pred_check_branch
          %348 = sbr.rel (%p346) target = $region52
        $region51: #{forward.3} parent=43 // pred_region
          %p349 = scmp.lt.s32.totalorder %s21, 1
          %s350 = scalar_select %p349, %s21, 1
          %s351 = smul.addr %s350, 4
          %s352 = scalar_lea.vmem %s8, %s351
        $region52: #{forward.3} parent=43 // pred_fallthru
          _
      $region44: #{forward.3} parent=5 // pred_fallthru
        _
      %p353 = scmp.le.s32.totalorder 1, %s21
      %p354 = scmp.lt.s32.totalorder %s21, 3
      %p355 = pnand %p353, %p354
      %p356 = pneg %p355
      // Predicated region
      $region53: #{forward.3} parent=5 // pred_check
        _
      $region54: #{forward.3} parent=5 // pred_check_branch
        %358 = sbr.rel (%p355) target = $region56
      $region55: #{forward.3} parent=5 // pred_region
        %s359 = ssub.s32 %s21, 1
        %p360 = scmp.lt.s32.totalorder %s26, 1
        %s361 = scalar_select %p360, %s26, 1
        %s362 = smul.addr %s361, 2
        %s363 = smul.addr %s362, 4
        %s364 = scalar_lea.vmem %s0, %s363
        %p365 = pneg %p47
        %p366 = pneg %p44
        %p367 = pneg %p68
        %p368 = pneg %p65
        %p369 = pneg %p89
        %p370 = pneg %p86
        %p371 = pneg %p110
        %p372 = pneg %p107
        %p373 = pneg %p131
        %p374 = pneg %p128
        %p375 = pneg %p152
        %p376 = pneg %p149
        %p377 = pneg %p173
        %p378 = pneg %p170
        %p379 = pneg %p194
        %p380 = pneg %p191
        %p381 = scmp.lt.s32.totalorder %s26, 1
        %s382 = scalar_select %p381, %s26, 1
        %s383 = smul.addr %s382, 4
        %s384 = scalar_lea.vmem %s8, %s383
        %p385 = pneg %p220
        %p386 = pneg %p217
        %p387 = pneg %p246
        %p388 = pneg %p243
        %s389 = sand.u32 %s233, 1
        %s390 = scalar_lea.sflag [#allocation3], %s389
        %s391 = sand.u32 %s233, 1
        %s392 = smul.addr %s391, 4
        %s393 = scalar_lea.vmem [#allocation2], %s392
        %p394 = pneg %p272
        %p395 = pneg %p269
        %p396 = scmp.lt.s32.totalorder %s26, 1
        %s397 = scalar_select %p396, %s26, 1
        %s398 = smul.addr %s397, 4
        %s399 = scalar_lea.vmem %s10, %s398
        %p400 = pneg %p298
        %p401 = pneg %p295
        %p402 = scmp.lt.s32.totalorder %s26, 1
        %s403 = scalar_select %p402, %s26, 1
        %s404 = scalar_lea.vmem %s11, %s403
        %p405 = scmp.lt.s32.totalorder %s26, 1
        %s406 = scalar_select %p405, %s26, 1
        %s407 = smul.addr %s406, 2
        %s408 = smul.addr %s407, 4
        %s409 = scalar_lea.vmem %s0, %s408
        %p410 = scmp.lt.s32.totalorder %s26, 1
        %s411 = scalar_select %p410, %s26, 1
        %s412 = smul.addr %s411, 4
        %s413 = scalar_lea.vmem %s8, %s412
        %p414 = scmp.lt.s32.totalorder %s26, 1
        %s415 = scalar_select %p414, %s26, 1
        %s416 = smul.addr %s415, 4
        %s417 = scalar_lea.vmem %s10, %s416
        %p418 = scmp.lt.s32.totalorder %s26, 1
        %s419 = scalar_select %p418, %s26, 1
        %s420 = scalar_lea.vmem %s11, %s419
        %v422 = vld [vmem:[%s409] sm:$0xff]
        %v423 = vld [vmem:[%s1] sm:$0xf]
        %v424 = vld [vmem:[%s1 + $0x4] sm:$0xf]
        %v425 = vld [vmem:[%s1 + $0x8] sm:$0xf]
        %v426 = vld [vmem:[%s1 + $0xc] sm:$0xf]
        %v427 = vld [vmem:[%s1 + $0x10] sm:$0xf]
        %v428 = vld [vmem:[%s1 + $0x14] sm:$0xf]
        %v429 = vld [vmem:[%s1 + $0x18] sm:$0xf]
        %v430 = vld [vmem:[%s1 + $0x1c] sm:$0xf]
        %v431 = vld [vmem:[%s1 + $0x20] sm:$0xf]
        %v432 = vld [vmem:[%s1 + $0x24] sm:$0xf]
        %v433 = vld [vmem:[%s1 + $0x28] sm:$0xf]
        %v434 = vld [vmem:[%s1 + $0x2c] sm:$0xf]
        %v435 = vld [vmem:[%s1 + $0x30] sm:$0xf]
        %v436 = vld [vmem:[%s1 + $0x34] sm:$0xf]
        %v437 = vld [vmem:[%s1 + $0x38] sm:$0xf]
        %v438 = vld [vmem:[%s1 + $0x3c] sm:$0xf]
        %v439 = vld [vmem:[%s1 + $0x40] sm:$0xf]
        %v440 = vld [vmem:[%s1 + $0x44] sm:$0xf]
        %v441 = vld [vmem:[%s1 + $0x48] sm:$0xf]
        %v442 = vld [vmem:[%s1 + $0x4c] sm:$0xf]
        %v443 = vld [vmem:[%s1 + $0x50] sm:$0xf]
        %v444 = vld [vmem:[%s1 + $0x54] sm:$0xf]
        %v445 = vld [vmem:[%s1 + $0x58] sm:$0xf]
        %v446 = vld [vmem:[%s1 + $0x5c] sm:$0xf]
        %v448 = vcombine.high %v422, %v422
        %v450 = vpack.c.bf16 %v422, %v422
        %v451 = vpack.c.bf16 %v448, %v448
        %v452 = vld [vmem:[%s2] sm:$0x1]
        %v454 = vlaneseq
        %v455 = vshrl.u32 %v454, 7
        %v456 = vsub.s32 0, %v455
        %v457 = vrot.slane %v452, %v456
        %v483 = vunpack.c.l.b16 %v423
        %v484 = vunpack.c.l.b16 %v424
        %v485 = vunpack.c.l.b16 %v425
        %v486 = vunpack.c.l.b16 %v426
        %v487 = vunpack.c.l.b16 %v427
        %v488 = vunpack.c.l.b16 %v428
        %v489 = vunpack.c.l.b16 %v429
        %v490 = vunpack.c.l.b16 %v430
        %v491 = vunpack.c.l.b16 %v431
        %v492 = vunpack.c.l.b16 %v432
        %v493 = vunpack.c.l.b16 %v433
        %v494 = vunpack.c.l.b16 %v434
        %v495 = vunpack.c.l.b16 %v435
        %v496 = vunpack.c.l.b16 %v436
        %v497 = vunpack.c.l.b16 %v437
        %v498 = vunpack.c.l.b16 %v438
        %v499 = vunpack.c.l.b16 %v439
        %v500 = vunpack.c.l.b16 %v440
        %v501 = vunpack.c.l.b16 %v441
        %v502 = vunpack.c.l.b16 %v442
        %v503 = vunpack.c.l.b16 %v443
        %v504 = vunpack.c.l.b16 %v444
        %v505 = vunpack.c.l.b16 %v445
        %v506 = vunpack.c.l.b16 %v446
        %v507 = vpack.c.b16 %v484, %v483
        %v508 = vpack.c.b16 %v486, %v485
        %v509 = vpack.c.b16 %v488, %v487
        %v510 = vpack.c.b16 %v490, %v489
        %v511 = vpack.c.b16 %v492, %v491
        %v512 = vpack.c.b16 %v494, %v493
        %v513 = vpack.c.b16 %v496, %v495
        %v514 = vpack.c.b16 %v498, %v497
        %v515 = vpack.c.b16 %v500, %v499
        %v516 = vpack.c.b16 %v502, %v501
        %v517 = vpack.c.b16 %v504, %v503
        %v518 = vpack.c.b16 %v506, %v505
        %vm531 = vcmask 523264
        %v533 = vsel %vm531, %v451, 0
        %535 = vmatprep.subr.bf16.mxu0 0
        %536 = vmatpush1.bf16.msra.mxu0 %v507
        %537 = vmatprep.subr.bf16.mxu0 0
        %538 = vmatpush1.bf16.msra.mxu0 %v508
        %539 = vmatprep.subr.bf16.mxu0 0
        %540 = vmatpush1.bf16.msra.mxu0 %v509
        %541 = vmatprep.subr.bf16.mxu0 0
        %542 = vmatpush1.bf16.msra.mxu0 %v510
        %543 = vmatprep.subr.bf16.mxu0 0
        %544 = vmatpush1.bf16.msra.mxu0 %v511
        %545 = vmatprep.subr.bf16.mxu0 0
        %546 = vmatpush1.bf16.msra.mxu0 %v512
        %547 = vmatprep.subr.bf16.mxu0 0
        %548 = vmatpush1.bf16.msra.mxu0 %v513
        %549 = vmatprep.subr.bf16.mxu0 0
        %550 = vmatpush1.bf16.msra.mxu0 %v514
        %551 = vmatprep.subr.bf16.mxu0 0
        %552 = vmatpush1.bf16.msra.mxu0 %v515
        %553 = vmatprep.subr.bf16.mxu0 0
        %554 = vmatpush1.bf16.msra.mxu0 %v516
        %555 = vmatprep.subr.bf16.mxu0 0
        %556 = vmatpush1.bf16.msra.mxu0 %v517
        %557 = vmatprep.subr.bf16.mxu0 0
        %558 = vmatpush1.bf16.msra.mxu0 %v518
        %559 = vmatprep.subr.bf16.mxu0 0
        %560 = vmatpush1.bf16.msra.mxu0 0
        %561 = vmatprep.subr.bf16.mxu0 0
        %562 = vmatpush1.bf16.msra.mxu0 0
        %563 = vmatprep.subr.bf16.mxu0 0
        %564 = vmatpush1.bf16.msra.mxu0 0
        %565 = vmatprep.subr.bf16.mxu0 0
        %566 = vmatpush1.bf16.msra.mxu0 0
        %567 = vmatprep.mubr.bf16.mxu0 %v533
        %568 = vmatmul.mubr.bf16.gmra.mrb[0].mxu0 %v450
        %v569 = vpop.f32.mrb[0].mxu0
        %v570 = vadd.f32 %v457, %v569
        %v571 = vpop.f32.mrb[0].mxu0
        %v572 = vpop.f32.mrb[0].mxu0
        %v573 = vpop.f32.mrb[0].mxu0
        %574 = vdwg.mxu0
        %v575 = vmul.f32 %v570, %v570
        %v576 = vmul.f32 %v570, %v575
        %v577 = vmul.f32 %v576, 0.044715
        %v578 = vadd.f32 %v570, %v577
        %v579 = vmul.f32 %v578, 0.7978846
        %v580 = vtanh.pop %v579
        %v581 = vadd.f32 %v580, 1.0
        %v582 = vmul.f32 %v581, 0.5
        %v583 = vmul.f32 %v570, %v582
        %v584 = vld [vmem:[%s3] sm:$0x1]
        %v585 = vmul.f32 %v583, %v583
        %vm586 = vcmask 1043456
        %v587 = vsel %vm586, %v585, 0.0
        %588 = vadd.xlane.f32.xlu0 %v587
        %v589 = vpop.xlane.xlu0 %588
        %v590 = vrcp.pop 128.0
        %v591 = vmul.f32 %v589, %v590
        %v592 = vadd.f32 %v591, 1e-06
        %v593 = vrsqrt.pop %v592
        %v594 = vmul.f32 %v583, %v593
        %v596 = vlaneseq
        %v597 = vshrl.u32 %v596, 7
        %v598 = vsub.s32 0, %v597
        %v599 = vrot.slane %v584, %v598
        %v601 = vmul.f32 %v594, %v599
        %602 = vst [vmem:[%s393] sm:$0xf] %v601
        %v603 = vld [vmem:[%s4] sm:$0xf]
        %v604 = vld [vmem:[%s4 + $0x4] sm:$0xf]
        %v605 = vld [vmem:[%s4 + $0x8] sm:$0xf]
        %v606 = vld [vmem:[%s4 + $0xc] sm:$0xf]
        %v607 = vld [vmem:[%s4 + $0x10] sm:$0xf]
        %v608 = vld [vmem:[%s4 + $0x14] sm:$0xf]
        %v609 = vld [vmem:[%s4 + $0x18] sm:$0xf]
        %v610 = vld [vmem:[%s4 + $0x1c] sm:$0xf]
        %v611 = vld [vmem:[%s4 + $0x20] sm:$0xf]
        %v612 = vld [vmem:[%s4 + $0x24] sm:$0xf]
        %v613 = vld [vmem:[%s4 + $0x28] sm:$0xf]
        %v614 = vld [vmem:[%s4 + $0x2c] sm:$0xf]
        %v615 = vld [vmem:[%s4 + $0x30] sm:$0xf]
        %v616 = vld [vmem:[%s4 + $0x34] sm:$0xf]
        %v617 = vld [vmem:[%s4 + $0x38] sm:$0xf]
        %v618 = vld [vmem:[%s4 + $0x3c] sm:$0xf]
        %v619 = vpack.c.bf16 %v601, %v601
        %v620 = vld [vmem:[%s5] sm:$0x1]
        %v622 = vlaneseq
        %v623 = vshrl.u32 %v622, 7
        %v624 = vsub.s32 0, %v623
        %v625 = vrot.slane %v620, %v624
        %v643 = vunpack.c.l.b16 %v603
        %v644 = vunpack.c.l.b16 %v604
        %v645 = vunpack.c.l.b16 %v605
        %v646 = vunpack.c.l.b16 %v606
        %v647 = vunpack.c.l.b16 %v607
        %v648 = vunpack.c.l.b16 %v608
        %v649 = vunpack.c.l.b16 %v609
        %v650 = vunpack.c.l.b16 %v610
        %v651 = vunpack.c.l.b16 %v611
        %v652 = vunpack.c.l.b16 %v612
        %v653 = vunpack.c.l.b16 %v613
        %v654 = vunpack.c.l.b16 %v614
        %v655 = vunpack.c.l.b16 %v615
        %v656 = vunpack.c.l.b16 %v616
        %v657 = vunpack.c.l.b16 %v617
        %v658 = vunpack.c.l.b16 %v618
        %v659 = vpack.c.b16 %v644, %v643
        %v660 = vpack.c.b16 %v646, %v645
        %v661 = vpack.c.b16 %v648, %v647
        %v662 = vpack.c.b16 %v650, %v649
        %v663 = vpack.c.b16 %v652, %v651
        %v664 = vpack.c.b16 %v654, %v653
        %v665 = vpack.c.b16 %v656, %v655
        %v666 = vpack.c.b16 %v658, %v657
        %675 = vmatprep.subr.bf16.mxu0 0
        %676 = vmatpush1.bf16.msra.mxu0 %v659
        %677 = vmatprep.subr.bf16.mxu0 0
        %678 = vmatpush1.bf16.msra.mxu0 %v660
        %679 = vmatprep.subr.bf16.mxu0 0
        %680 = vmatpush1.bf16.msra.mxu0 %v661
        %681 = vmatprep.subr.bf16.mxu0 0
        %682 = vmatpush1.bf16.msra.mxu0 %v662
        %683 = vmatprep.subr.bf16.mxu0 0
        %684 = vmatpush1.bf16.msra.mxu0 %v663
        %685 = vmatprep.subr.bf16.mxu0 0
        %686 = vmatpush1.bf16.msra.mxu0 %v664
        %687 = vmatprep.subr.bf16.mxu0 0
        %688 = vmatpush1.bf16.msra.mxu0 %v665
        %689 = vmatprep.subr.bf16.mxu0 0
        %690 = vmatpush1.bf16.msra.mxu0 %v666
        %691 = vmatprep.subr.bf16.mxu0 0
        %692 = vmatpush1.bf16.msra.mxu0 0
        %693 = vmatprep.subr.bf16.mxu0 0
        %694 = vmatpush1.bf16.msra.mxu0 0
        %695 = vmatprep.subr.bf16.mxu0 0
        %696 = vmatpush1.bf16.msra.mxu0 0
        %697 = vmatprep.subr.bf16.mxu0 0
        %698 = vmatpush1.bf16.msra.mxu0 0
        %699 = vmatprep.subr.bf16.mxu0 0
        %700 = vmatpush1.bf16.msra.mxu0 0
        %701 = vmatprep.subr.bf16.mxu0 0
        %702 = vmatpush1.bf16.msra.mxu0 0
        %703 = vmatprep.subr.bf16.mxu0 0
        %704 = vmatpush1.bf16.msra.mxu0 0
        %705 = vmatprep.subr.bf16.mxu0 0
        %706 = vmatpush1.bf16.msra.mxu0 0
        %707 = vmatprep.mubr.bf16.mxu0 0
        %708 = vmatmul.mubr.bf16.gmra.mrb[0].mxu0 %v619
        %v709 = vpop.f32.mrb[0].mxu0
        %v710 = vadd.f32 %v625, %v709
        %v711 = vpop.f32.mrb[0].mxu0
        %v712 = vpop.f32.mrb[0].mxu0
        %v713 = vpop.f32.mrb[0].mxu0
        %714 = vdwg.mxu0
        %v715 = vmul.f32 %v710, %v710
        %v716 = vmul.f32 %v710, %v715
        %v717 = vmul.f32 %v716, 0.044715
        %v718 = vadd.f32 %v710, %v717
        %v719 = vmul.f32 %v718, 0.7978846
        %v720 = vtanh.pop %v719
        %v721 = vadd.f32 %v720, 1.0
        %v722 = vmul.f32 %v721, 0.5
        %v723 = vmul.f32 %v710, %v722
        %v724 = vld [vmem:[%s6] sm:$0xf]
        %v725 = vld [vmem:[%s6 + $0x4] sm:$0xf]
        %v726 = vld [vmem:[%s6 + $0x8] sm:$0xf]
        %v727 = vld [vmem:[%s6 + $0xc] sm:$0xf]
        %v728 = vld [vmem:[%s6 + $0x10] sm:$0xf]
        %v729 = vld [vmem:[%s6 + $0x14] sm:$0xf]
        %v730 = vld [vmem:[%s6 + $0x18] sm:$0xf]
        %v731 = vld [vmem:[%s6 + $0x1c] sm:$0xf]
        %v732 = vld [vmem:[%s6 + $0x20] sm:$0xf]
        %v733 = vld [vmem:[%s6 + $0x24] sm:$0xf]
        %v734 = vld [vmem:[%s6 + $0x28] sm:$0xf]
        %v735 = vld [vmem:[%s6 + $0x2c] sm:$0xf]
        %v736 = vld [vmem:[%s6 + $0x30] sm:$0xf]
        %v737 = vld [vmem:[%s6 + $0x34] sm:$0xf]
        %v738 = vld [vmem:[%s6 + $0x38] sm:$0xf]
        %v739 = vld [vmem:[%s6 + $0x3c] sm:$0xf]
        %v740 = vpack.c.bf16 %v723, %v723
        %v741 = vld [vmem:[%s7] sm:$0x1]
        %v743 = vlaneseq
        %v744 = vshrl.u32 %v743, 7
        %v745 = vsub.s32 0, %v744
        %v746 = vrot.slane %v741, %v745
        %v764 = vunpack.c.l.b16 %v724
        %v765 = vunpack.c.l.b16 %v725
        %v766 = vunpack.c.l.b16 %v726
        %v767 = vunpack.c.l.b16 %v727
        %v768 = vunpack.c.l.b16 %v728
        %v769 = vunpack.c.l.b16 %v729
        %v770 = vunpack.c.l.b16 %v730
        %v771 = vunpack.c.l.b16 %v731
        %v772 = vunpack.c.l.b16 %v732
        %v773 = vunpack.c.l.b16 %v733
        %v774 = vunpack.c.l.b16 %v734
        %v775 = vunpack.c.l.b16 %v735
        %v776 = vunpack.c.l.b16 %v736
        %v777 = vunpack.c.l.b16 %v737
        %v778 = vunpack.c.l.b16 %v738
        %v779 = vunpack.c.l.b16 %v739
        %v780 = vpack.c.b16 %v765, %v764
        %v781 = vpack.c.b16 %v767, %v766
        %v782 = vpack.c.b16 %v769, %v768
        %v783 = vpack.c.b16 %v771, %v770
        %v784 = vpack.c.b16 %v773, %v772
        %v785 = vpack.c.b16 %v775, %v774
        %v786 = vpack.c.b16 %v777, %v776
        %v787 = vpack.c.b16 %v779, %v778
        %796 = vmatprep.subr.bf16.mxu0 0
        %797 = vmatpush1.bf16.msra.mxu0 %v780
        %798 = vmatprep.subr.bf16.mxu0 0
        %799 = vmatpush1.bf16.msra.mxu0 %v781
        %800 = vmatprep.subr.bf16.mxu0 0
        %801 = vmatpush1.bf16.msra.mxu0 %v782
        %802 = vmatprep.subr.bf16.mxu0 0
        %803 = vmatpush1.bf16.msra.mxu0 %v783
        %804 = vmatprep.subr.bf16.mxu0 0
        %805 = vmatpush1.bf16.msra.mxu0 %v784
        %806 = vmatprep.subr.bf16.mxu0 0
        %807 = vmatpush1.bf16.msra.mxu0 %v785
        %808 = vmatprep.subr.bf16.mxu0 0
        %809 = vmatpush1.bf16.msra.mxu0 %v786
        %810 = vmatprep.subr.bf16.mxu0 0
        %811 = vmatpush1.bf16.msra.mxu0 %v787
        %812 = vmatprep.subr.bf16.mxu0 0
        %813 = vmatpush1.bf16.msra.mxu0 0
        %814 = vmatprep.subr.bf16.mxu0 0
        %815 = vmatpush1.bf16.msra.mxu0 0
        %816 = vmatprep.subr.bf16.mxu0 0
        %817 = vmatpush1.bf16.msra.mxu0 0
        %818 = vmatprep.subr.bf16.mxu0 0
        %819 = vmatpush1.bf16.msra.mxu0 0
        %820 = vmatprep.subr.bf16.mxu0 0
        %821 = vmatpush1.bf16.msra.mxu0 0
        %822 = vmatprep.subr.bf16.mxu0 0
        %823 = vmatpush1.bf16.msra.mxu0 0
        %824 = vmatprep.subr.bf16.mxu0 0
        %825 = vmatpush1.bf16.msra.mxu0 0
        %826 = vmatprep.subr.bf16.mxu0 0
        %827 = vmatpush1.bf16.msra.mxu0 0
        %828 = vmatprep.mubr.bf16.mxu0 0
        %829 = vmatmul.mubr.bf16.gmra.mrb[0].mxu0 %v740
        %v830 = vpop.f32.mrb[0].mxu0
        %v831 = vadd.f32 %v746, %v830
        %v832 = vpop.f32.mrb[0].mxu0
        %v833 = vpop.f32.mrb[0].mxu0
        %v834 = vpop.f32.mrb[0].mxu0
        %835 = vdwg.mxu0
        %836 = vst [vmem:[%s417] sm:$0xf] %v831
        %v837 = vld [vmem:[%s413] sm:$0xf]
        %v838 = vsub.f32 %v601, %v837
        %v839 = vmul.f32 %v838, %v838
        %v840 = vsel %vm586, %v839, 0.0
        %841 = vadd.xlane.f32.xlu0 %v840
        %v842 = vpop.xlane.xlu0 %841
        %v843 = vsel %vm586, %v842, 0.0
        %v844 = vrot.slane %v843, 4
        %v845 = vadd.f32 %v843, %v844
        %v846 = vrot.slane %v845, 2
        %v847 = vadd.f32 %v845, %v846
        %v848 = vrot.slane %v847, 1
        %v849 = vadd.f32 %v847, %v848
        %vm850 = vcmask 0
        %851 = vst.msk [vmem:[%s420] sm:$0x1] %vm850, %v849
        %s852 = sand.u32 %s233, 1
        %s853 = scalar_lea.sflag [#allocation3], %s852
        %s854 = sand.u32 %s233, 1
        %s855 = smul.addr %s854, 4
        %s856 = scalar_lea.vmem [#allocation2], %s855
        %p857 = scmp.lt.s32.totalorder %s26, 1
        %s858 = scalar_select %p857, %s26, 1
        %s859 = smul.addr %s858, 4
        %s860 = scalar_lea.vmem %s10, %s859
        %p861 = scmp.lt.s32.totalorder %s26, 1
        %s862 = scalar_select %p861, %s26, 1
        %s863 = scalar_lea.vmem %s11, %s862
        // Predicated region
        $region57: #{forward.3} parent=55 // pred_check
          %p864 = pneg %p243
        $region58: #{forward.3} parent=55 // pred_check_branch
          %866 = sbr.rel (%p864) target = $region60
        $region59: #{forward.3} parent=55 // pred_region
          %s868 = ssub.s32 64, 64
          %869 = vsyncadd %s853, %s868
          %s870 = smul.addr %s26, 64
          %s871 = scalar_lea.hbm %s9, %s870
          %s873 = sshll.u32 %s856, 4
          %s874 = int_to_ptr.vmem [resolvable:$true] %s873
          %876 = dma.vmem_to_hbm [thread:$0]  %s874, 64, %s871, %s853
        $region60: #{forward.3} parent=55 // pred_fallthru
          _
        // Predicated region
        $region61: #{forward.3} parent=55 // pred_check
          %p877 = pneg %p269
        $region62: #{forward.3} parent=55 // pred_check_branch
          %879 = sbr.rel (%p877) target = $region64
        $region63: #{forward.3} parent=55 // pred_region
          _
        $region64: #{forward.3} parent=55 // pred_fallthru
          _
        // Predicated region
        $region65: #{forward.3} parent=55 // pred_check
          %p880 = pneg %p295
        $region66: #{forward.3} parent=55 // pred_check_branch
          %882 = sbr.rel (%p880) target = $region68
        $region67: #{forward.3} parent=55 // pred_region
          _
        $region68: #{forward.3} parent=55 // pred_fallthru
          _
      $region56: #{forward.3} parent=5 // pred_fallthru
        _
      %p883 = scmp.le.s32.totalorder 2, %s21
      // Predicated region
      $region69: #{forward.3} parent=5 // pred_check
        %p884 = pneg %p883
      $region70: #{forward.3} parent=5 // pred_check_branch
        %886 = sbr.rel (%p884) target = $region72
      $region71: #{forward.3} parent=5 // pred_region
        %s887 = ssub.s32 %s21, 2
        // Predicated region
        $region73: #{forward.3} parent=71 // pred_check
          %p888 = pneg %p249
        $region74: #{forward.3} parent=71 // pred_check_branch
          %890 = sbr.rel (%p888) target = $region76
        $region75: #{forward.3} parent=71 // pred_region
          %s891 = sand.u32 %s234, 1
          %s892 = scalar_lea.sflag [#allocation3], %s891
          %s893 = sand.u32 %s234, 1
          %s894 = smul.addr %s893, 4
          %s895 = scalar_lea.vmem [#allocation2], %s894
          %896 = dma.done %s892, 64
        $region76: #{forward.3} parent=71 // pred_fallthru
          _
        // Predicated region
        $region77: #{forward.3} parent=71 // pred_check
          %p897 = pneg %p275
        $region78: #{forward.3} parent=71 // pred_check_branch
          %899 = sbr.rel (%p897) target = $region80
        $region79: #{forward.3} parent=71 // pred_region
          %p900 = scmp.lt.s32.totalorder %s27, 1
          %s901 = scalar_select %p900, %s27, 1
          %s902 = smul.addr %s901, 4
          %s903 = scalar_lea.vmem %s10, %s902
        $region80: #{forward.3} parent=71 // pred_fallthru
          _
        // Predicated region
        $region81: #{forward.3} parent=71 // pred_check
          %p904 = pneg %p301
        $region82: #{forward.3} parent=71 // pred_check_branch
          %906 = sbr.rel (%p904) target = $region84
        $region83: #{forward.3} parent=71 // pred_region
          %p907 = scmp.lt.s32.totalorder %s27, 1
          %s908 = scalar_select %p907, %s27, 1
          %s909 = scalar_lea.vmem %s11, %s908
        $region84: #{forward.3} parent=71 // pred_fallthru
          _
      $region72: #{forward.3} parent=5 // pred_fallthru
        _
    $region6: #{forward.3} parent=1 // loop_footer
      %s25 = sadd.s32 1, %s21
    $region7: #{forward.3} parent=1 // loop_footer_branch
      %20 = sbr.rel target = $region3
    $region8: #{forward.3} parent=1 // loop_exit
      _
    %910 = vsyncpa [#allocation3], 1
    %s911 = scalar_lea.sflag [#allocation3], 1
    %912 = vsyncpa %s911, 1

// kernel: forward.5
$region0: #{forward.5}
  #allocation0 [shape = 'u32[]', space=smem, size = 0x4, offset = 0x4, fixed_abs, tag = 'smem constant byte address 0x4 - core index']
  #allocation1 [shape = 'u32[144,128]{1,0:T(1,128)}', space=vmem, size = 0x12000, scoped, tag = 'internal scratch']
  %s0 = inlined_call_operand.vmem [shape: f32[2,12,128], index: 0, kind: input, shape index: {}]
  %s1 = inlined_call_operand.vmem [shape: f32[1,128], index: 1, kind: input, shape index: {}]
  %s2 = inlined_call_operand.vmem [shape: bf16[128,256], index: 2, kind: input, shape index: {}]
  %s3 = inlined_call_operand.vmem [shape: f32[1,256], index: 3, kind: input, shape index: {}]
  %s4 = inlined_call_operand.vmem [shape: s32[2,11,1], index: 4, kind: input, shape index: {}]
  %s5 = inlined_call_operand.vmem [shape: f32[2,12,256], index: 5, kind: output, shape index: {0}]
  %s6 = inlined_call_operand.vmem [shape: f32[2,1,1], index: 6, kind: output, shape index: {1}]
  %s7 = inlined_call_operand.vmem [shape: f32[2,1,1], index: 7, kind: output, shape index: {2}]
  %8 = xla_tuple %s5, %s6, %s7
  %s9 = sld [smem:[#allocation0]]
  $region69: #{forward.5} parent=0
    _
  %s11 = ssub.s32 1, %s9
  %s12 = scalar_select 0, %s11, %s9
  loop: start=0, step=1, limit=4
  $region2: #{forward.5} parent=0 // loop_pre_header
    _
  $region3: #{forward.5} parent=0 // loop_header
    %s14 = sphi 0, %s18
    %p15 = scmp.ge.s32.totalorder %s14, 4
    %s24 = sphi 0, %s26
    %s27 = sphi 0, %s24
    %s28 = sphi 0, %s27
    %s44 = sphi 0, %s28
    %s48 = sphi 0, %s48
    %s50 = sphi 0, %s48
    %s51 = sphi 0, %s50
    %s65 = sphi 0, %s51
    %s69 = sphi 0, %s69
    %s71 = sphi 0, %s69
    %s72 = sphi 0, %s71
    %s86 = sphi 0, %s72
    %s90 = sphi 0, %s90
    %s92 = sphi 0, %s90
    %s93 = sphi 0, %s92
    %s107 = sphi 0, %s93
    %s113 = sphi 0, %s115
    %s116 = sphi 0, %s113
    %s117 = sphi 0, %s116
    %s133 = sphi 0, %s117
    %s139 = sphi 0, %s141
    %s142 = sphi 0, %s139
    %s143 = sphi 0, %s142
    %s159 = sphi 0, %s143
    %s165 = sphi 0, %s167
    %s168 = sphi 0, %s165
    %s169 = sphi 0, %s168
    %s185 = sphi 0, %s169
    %s191 = sphi 0, %s193
    %s194 = sphi 0, %s191
    %s195 = sphi 0, %s194
    %s211 = sphi 0, %s195
  $region4: #{forward.5} parent=0 // loop_header_branch
    %17 = sbr.rel (%p15) target = $region8
  $region5: #{forward.5} parent=0 // loop_body
    %s19 = ssub.s32 %s14, 1
    %s20 = ssub.s32 %s14, 2
    %s21 = sadd.s32 %s14, 1
    %s22 = ssub.s32 %s14, %s21
    %p23 = scmp.eq.s32.totalorder %s22, 0
    %s25 = sadd.s32 %s24, 1
    %s26 = scalar_select %p23, %s24, %s25
    %p29 = pneg %p23
    %p30 = scmp.eq.s32.totalorder %s14, 1
    %p31 = por %p29, %p30
    %p32 = scmp.ne.s32.totalorder %s24, %s27
    %p33 = scmp.eq.s32.totalorder %s14, 0
    %p34 = por %p32, %p33
    %p35 = scmp.ne.s32.totalorder %s24, %s27
    %p36 = scmp.eq.s32.totalorder %s19, 1
    %p37 = por %p35, %p36
    %p38 = scmp.ne.s32.totalorder %s27, %s28
    %p39 = scmp.eq.s32.totalorder %s19, 0
    %p40 = por %p38, %p39
    %p41 = scmp.ne.s32.totalorder %s27, %s28
    %p42 = scmp.eq.s32.totalorder %s20, 1
    %p43 = por %p41, %p42
    %p45 = scmp.ne.s32.totalorder %s28, %s44
    %p46 = scmp.eq.s32.totalorder %s20, 0
    %p47 = por %p45, %p46
    %s49 = sadd.s32 %s48, 1
    %p52 = scmp.eq.s32.totalorder %s14, 1
    %p53 = scmp.ne.s32.totalorder %s48, %s50
    %p54 = scmp.eq.s32.totalorder %s14, 0
    %p55 = por %p53, %p54
    %p56 = scmp.ne.s32.totalorder %s48, %s50
    %p57 = scmp.eq.s32.totalorder %s19, 1
    %p58 = por %p56, %p57
    %p59 = scmp.ne.s32.totalorder %s50, %s51
    %p60 = scmp.eq.s32.totalorder %s19, 0
    %p61 = por %p59, %p60
    %p62 = scmp.ne.s32.totalorder %s50, %s51
    %p63 = scmp.eq.s32.totalorder %s20, 1
    %p64 = por %p62, %p63
    %p66 = scmp.ne.s32.totalorder %s51, %s65
    %p67 = scmp.eq.s32.totalorder %s20, 0
    %p68 = por %p66, %p67
    %s70 = sadd.s32 %s69, 1
    %p73 = scmp.eq.s32.totalorder %s14, 1
    %p74 = scmp.ne.s32.totalorder %s69, %s71
    %p75 = scmp.eq.s32.totalorder %s14, 0
    %p76 = por %p74, %p75
    %p77 = scmp.ne.s32.totalorder %s69, %s71
    %p78 = scmp.eq.s32.totalorder %s19, 1
    %p79 = por %p77, %p78
    %p80 = scmp.ne.s32.totalorder %s71, %s72
    %p81 = scmp.eq.s32.totalorder %s19, 0
    %p82 = por %p80, %p81
    %p83 = scmp.ne.s32.totalorder %s71, %s72
    %p84 = scmp.eq.s32.totalorder %s20, 1
    %p85 = por %p83, %p84
    %p87 = scmp.ne.s32.totalorder %s72, %s86
    %p88 = scmp.eq.s32.totalorder %s20, 0
    %p89 = por %p87, %p88
    %s91 = sadd.s32 %s90, 1
    %p94 = scmp.eq.s32.totalorder %s14, 1
    %p95 = scmp.ne.s32.totalorder %s90, %s92
    %p96 = scmp.eq.s32.totalorder %s14, 0
    %p97 = por %p95, %p96
    %p98 = scmp.ne.s32.totalorder %s90, %s92
    %p99 = scmp.eq.s32.totalorder %s19, 1
    %p100 = por %p98, %p99
    %p101 = scmp.ne.s32.totalorder %s92, %s93
    %p102 = scmp.eq.s32.totalorder %s19, 0
    %p103 = por %p101, %p102
    %p104 = scmp.ne.s32.totalorder %s92, %s93
    %p105 = scmp.eq.s32.totalorder %s20, 1
    %p106 = por %p104, %p105
    %p108 = scmp.ne.s32.totalorder %s93, %s107
    %p109 = scmp.eq.s32.totalorder %s20, 0
    %p110 = por %p108, %p109
    %s111 = ssub.s32 %s14, %s21
    %p112 = scmp.eq.s32.totalorder %s111, 0
    %s114 = sadd.s32 %s113, 1
    %s115 = scalar_select %p112, %s113, %s114
    %p118 = pneg %p112
    %p119 = scmp.eq.s32.totalorder %s14, 1
    %p120 = por %p118, %p119
    %p121 = scmp.ne.s32.totalorder %s113, %s116
    %p122 = scmp.eq.s32.totalorder %s14, 0
    %p123 = por %p121, %p122
    %p124 = scmp.ne.s32.totalorder %s113, %s116
    %p125 = scmp.eq.s32.totalorder %s19, 1
    %p126 = por %p124, %p125
    %p127 = scmp.ne.s32.totalorder %s116, %s117
    %p128 = scmp.eq.s32.totalorder %s19, 0
    %p129 = por %p127, %p128
    %p130 = scmp.ne.s32.totalorder %s116, %s117
    %p131 = scmp.eq.s32.totalorder %s20, 1
    %p132 = por %p130, %p131
    %p134 = scmp.ne.s32.totalorder %s117, %s133
    %p135 = scmp.eq.s32.totalorder %s20, 0
    %p136 = por %p134, %p135
    %s137 = ssub.s32 %s14, %s21
    %p138 = scmp.eq.s32.totalorder %s137, 0
    %s140 = sadd.s32 %s139, 1
    %s141 = scalar_select %p138, %s139, %s140
    %p144 = pneg %p138
    %p145 = scmp.eq.s32.totalorder %s14, 1
    %p146 = por %p144, %p145
    %p147 = scmp.ne.s32.totalorder %s139, %s142
    %p148 = scmp.eq.s32.totalorder %s14, 0
    %p149 = por %p147, %p148
    %p150 = scmp.ne.s32.totalorder %s139, %s142
    %p151 = scmp.eq.s32.totalorder %s19, 1
    %p152 = por %p150, %p151
    %p153 = scmp.ne.s32.totalorder %s142, %s143
    %p154 = scmp.eq.s32.totalorder %s19, 0
    %p155 = por %p153, %p154
    %p156 = scmp.ne.s32.totalorder %s142, %s143
    %p157 = scmp.eq.s32.totalorder %s20, 1
    %p158 = por %p156, %p157
    %p160 = scmp.ne.s32.totalorder %s143, %s159
    %p161 = scmp.eq.s32.totalorder %s20, 0
    %p162 = por %p160, %p161
    %s163 = ssub.s32 %s14, %s21
    %p164 = scmp.eq.s32.totalorder %s163, 0
    %s166 = sadd.s32 %s165, 1
    %s167 = scalar_select %p164, %s165, %s166
    %p170 = pneg %p164
    %p171 = scmp.eq.s32.totalorder %s14, 1
    %p172 = por %p170, %p171
    %p173 = scmp.ne.s32.totalorder %s165, %s168
    %p174 = scmp.eq.s32.totalorder %s14, 0
    %p175 = por %p173, %p174
    %p176 = scmp.ne.s32.totalorder %s165, %s168
    %p177 = scmp.eq.s32.totalorder %s19, 1
    %p178 = por %p176, %p177
    %p179 = scmp.ne.s32.totalorder %s168, %s169
    %p180 = scmp.eq.s32.totalorder %s19, 0
    %p181 = por %p179, %p180
    %p182 = scmp.ne.s32.totalorder %s168, %s169
    %p183 = scmp.eq.s32.totalorder %s20, 1
    %p184 = por %p182, %p183
    %p186 = scmp.ne.s32.totalorder %s169, %s185
    %p187 = scmp.eq.s32.totalorder %s20, 0
    %p188 = por %p186, %p187
    %s189 = ssub.s32 %s14, %s21
    %p190 = scmp.eq.s32.totalorder %s189, 0
    %s192 = sadd.s32 %s191, 1
    %s193 = scalar_select %p190, %s191, %s192
    %p196 = pneg %p190
    %p197 = scmp.eq.s32.totalorder %s14, 1
    %p198 = por %p196, %p197
    %p199 = scmp.ne.s32.totalorder %s191, %s194
    %p200 = scmp.eq.s32.totalorder %s14, 0
    %p201 = por %p199, %p200
    %p202 = scmp.ne.s32.totalorder %s191, %s194
    %p203 = scmp.eq.s32.totalorder %s19, 1
    %p204 = por %p202, %p203
    %p205 = scmp.ne.s32.totalorder %s194, %s195
    %p206 = scmp.eq.s32.totalorder %s19, 0
    %p207 = por %p205, %p206
    %p208 = scmp.ne.s32.totalorder %s194, %s195
    %p209 = scmp.eq.s32.totalorder %s20, 1
    %p210 = por %p208, %p209
    %p212 = scmp.ne.s32.totalorder %s195, %s211
    %p213 = scmp.eq.s32.totalorder %s20, 0
    %p214 = por %p212, %p213
    %p215 = scmp.le.s32.totalorder 1, %s14
    %p216 = scmp.lt.s32.totalorder %s14, 3
    %p217 = pnand %p215, %p216
    %p218 = pneg %p217
    // Predicated region
    $region9: #{forward.5} parent=5 // pred_check
      _
    $region10: #{forward.5} parent=5 // pred_check_branch
      %220 = sbr.rel (%p217) target = $region12
    $region11: #{forward.5} parent=5 // pred_region
      %s221 = ssub.s32 %s14, 1
      // Predicated region
      $region13: #{forward.5} parent=11 // pred_check
        %p222 = pneg %p61
      $region14: #{forward.5} parent=11 // pred_check_branch
        %224 = sbr.rel (%p222) target = $region16
      $region15: #{forward.5} parent=11 // pred_region
        _
      $region16: #{forward.5} parent=11 // pred_fallthru
        _
      // Predicated region
      $region17: #{forward.5} parent=11 // pred_check
        %p225 = pneg %p82
      $region18: #{forward.5} parent=11 // pred_check_branch
        %227 = sbr.rel (%p225) target = $region20
      $region19: #{forward.5} parent=11 // pred_region
        _
      $region20: #{forward.5} parent=11 // pred_fallthru
        _
      // Predicated region
      $region21: #{forward.5} parent=11 // pred_check
        %p228 = pneg %p103
      $region22: #{forward.5} parent=11 // pred_check_branch
        %230 = sbr.rel (%p228) target = $region24
      $region23: #{forward.5} parent=11 // pred_region
        _
      $region24: #{forward.5} parent=11 // pred_fallthru
        _
    $region12: #{forward.5} parent=5 // pred_fallthru
      _
    %p231 = scmp.lt.s32.totalorder %s14, 2
    // Predicated region
    $region25: #{forward.5} parent=5 // pred_check
      %p232 = pneg %p231
    $region26: #{forward.5} parent=5 // pred_check_branch
      %234 = sbr.rel (%p232) target = $region28
    $region27: #{forward.5} parent=5 // pred_region
      // Predicated region
      $region29: #{forward.5} parent=27 // pred_check
        %p235 = pneg %p34
      $region30: #{forward.5} parent=27 // pred_check_branch
        %237 = sbr.rel (%p235) target = $region32
      $region31: #{forward.5} parent=27 // pred_region
        %p238 = scmp.lt.s32.totalorder %s14, 1
        %s239 = scalar_select %p238, %s14, 1
        %s240 = smul.addr %s239, 2
        %s241 = smul.addr %s240, 8
        %s242 = scalar_lea.vmem %s0, %s241
      $region32: #{forward.5} parent=27 // pred_fallthru
        _
      // Predicated region
      $region33: #{forward.5} parent=27 // pred_check
        %p243 = pneg %p123
      $region34: #{forward.5} parent=27 // pred_check_branch
        %245 = sbr.rel (%p243) target = $region36
      $region35: #{forward.5} parent=27 // pred_region
        %p246 = scmp.lt.s32.totalorder %s14, 1
        %s247 = scalar_select %p246, %s14, 1
        %s248 = smul.addr %s247, 2
        %s249 = smul.addr %s248, 8
        %s250 = scalar_lea.vmem %s4, %s249
      $region36: #{forward.5} parent=27 // pred_fallthru
        _
    $region28: #{forward.5} parent=5 // pred_fallthru
      _
    %p251 = scmp.le.s32.totalorder 1, %s14
    %p252 = scmp.lt.s32.totalorder %s14, 3
    %p253 = pnand %p251, %p252
    %p254 = pneg %p253
    // Predicated region
    $region37: #{forward.5} parent=5 // pred_check
      _
    $region38: #{forward.5} parent=5 // pred_check_branch
      %256 = sbr.rel (%p253) target = $region40
    $region39: #{forward.5} parent=5 // pred_region
      %s257 = ssub.s32 %s14, 1
      %p258 = scmp.lt.s32.totalorder %s19, 1
      %s259 = scalar_select %p258, %s19, 1
      %s260 = smul.addr %s259, 2
      %s261 = smul.addr %s260, 8
      %s262 = scalar_lea.vmem %s0, %s261
      %p263 = pneg %p40
      %p264 = pneg %p37
      %p265 = pneg %p61
      %p266 = pneg %p58
      %p267 = pneg %p82
      %p268 = pneg %p79
      %p269 = pneg %p103
      %p270 = pneg %p100
      %p271 = scmp.lt.s32.totalorder %s19, 1
      %s272 = scalar_select %p271, %s19, 1
      %s273 = smul.addr %s272, 2
      %s274 = smul.addr %s273, 8
      %s275 = scalar_lea.vmem %s4, %s274
      %p276 = pneg %p129
      %p277 = pneg %p126
      %p278 = pneg %p155
      %p279 = pneg %p152
      %p280 = scmp.lt.s32.totalorder %s19, 1
      %s281 = scalar_select %p280, %s19, 1
      %s282 = smul.addr %s281, 4
      %s283 = smul.addr %s282, 8
      %s284 = scalar_lea.vmem %s5, %s283
      %p285 = pneg %p181
      %p286 = pneg %p178
      %p287 = scmp.lt.s32.totalorder %s19, 1
      %s288 = scalar_select %p287, %s19, 1
      %s289 = scalar_lea.vmem %s6, %s288
      %p290 = pneg %p207
      %p291 = pneg %p204
      %p292 = scmp.lt.s32.totalorder %s19, 1
      %s293 = scalar_select %p292, %s19, 1
      %s294 = scalar_lea.vmem %s7, %s293
      %p295 = scmp.lt.s32.totalorder %s19, 1
      %s296 = scalar_select %p295, %s19, 1
      %s297 = smul.addr %s296, 2
      %s298 = smul.addr %s297, 8
      %s299 = scalar_lea.vmem %s0, %s298
      %p300 = scmp.lt.s32.totalorder %s19, 1
      %s301 = scalar_select %p300, %s19, 1
      %s302 = smul.addr %s301, 2
      %s303 = smul.addr %s302, 8
      %s304 = scalar_lea.vmem %s4, %s303
      %p305 = scmp.lt.s32.totalorder %s19, 1
      %s306 = scalar_select %p305, %s19, 1
      %s307 = smul.addr %s306, 4
      %s308 = smul.addr %s307, 8
      %s309 = scalar_lea.vmem %s5, %s308
      %p310 = scmp.lt.s32.totalorder %s19, 1
      %s311 = scalar_select %p310, %s19, 1
      %s312 = scalar_lea.vmem %s6, %s311
      %p313 = scmp.lt.s32.totalorder %s19, 1
      %s314 = scalar_select %p313, %s19, 1
      %s315 = scalar_lea.vmem %s7, %s314
      %v317 = vld [vmem:[%s299] sm:$0xff]
      %v318 = vld [vmem:[%s299 + $0x8] sm:$0xf]
      %v319 = vld [vmem:[%s1] sm:$0x1]
      %v320 = vmul.f32 %v317, %v317
      %v321 = vmul.f32 %v318, %v318
      %322 = vadd.xlane.f32.xlu0 %v320
      %v323 = vpop.xlane.xlu0 %322
      %vm324 = vcmask 1043456
      %v325 = vsel %vm324, %v321, 0.0
      %326 = vadd.xlane.f32.xlu0 %v325
      %v327 = vpop.xlane.xlu0 %326
      %v328 = vrcp.pop 128.0
      %v329 = vmul.f32 %v323, %v328
      %v330 = vmul.f32 %v327, %v328
      %v331 = vadd.f32 %v329, 1e-06
      %v332 = vadd.f32 %v330, 1e-06
      %v333 = vrsqrt.pop %v331
      %v334 = vrsqrt.pop %v332
      %v335 = vmul.f32 %v317, %v333
      %v336 = vmul.f32 %v318, %v334
      %v338 = vlaneseq
      %v339 = vshrl.u32 %v338, 7
      %v340 = vsub.s32 0, %v339
      %v341 = vrot.slane %v319, %v340
      %v343 = vmul.f32 %v335, %v341
      %v344 = vmul.f32 %v336, %v341
      %v345 = vld [vmem:[%s2] sm:$0xff]
      %v346 = vld [vmem:[%s2 + $0x8] sm:$0xff]
      %v347 = vld [vmem:[%s2 + $0x10] sm:$0xff]
      %v348 = vld [vmem:[%s2 + $0x18] sm:$0xff]
      %v349 = vld [vmem:[%s2 + $0x20] sm:$0xff]
      %v350 = vld [vmem:[%s2 + $0x28] sm:$0xff]
      %v351 = vld [vmem:[%s2 + $0x30] sm:$0xff]
      %v352 = vld [vmem:[%s2 + $0x38] sm:$0xff]
      %v353 = vld [vmem:[%s2 + $0x40] sm:$0xff]
      %v354 = vld [vmem:[%s2 + $0x48] sm:$0xff]
      %v355 = vld [vmem:[%s2 + $0x50] sm:$0xff]
      %v356 = vld [vmem:[%s2 + $0x58] sm:$0xff]
      %v357 = vld [vmem:[%s2 + $0x60] sm:$0xff]
      %v358 = vld [vmem:[%s2 + $0x68] sm:$0xff]
      %v359 = vld [vmem:[%s2 + $0x70] sm:$0xff]
      %v360 = vld [vmem:[%s2 + $0x78] sm:$0xff]
      %v361 = vpack.c.bf16 %v344, %v343
      %v362 = vld [vmem:[%s3] sm:$0x3]
      %v364 = vlaneseq
      %v365 = vshrl.u32 %v364, 7
      %v366 = vsub.s32 0, %v365
      %v367 = vrot.slane %v362, %v366
      %v368 = vlaneseq
      %v369 = vshrl.u32 %v368, 7
      %v370 = vsub.s32 1, %v369
      %v371 = vrot.slane %v362, %v370
      %v390 = vunpack.c.l.b16 %v345
      %v391 = vunpack.c.h.b16 %v345
      %v392 = vunpack.c.l.b16 %v346
      %v393 = vunpack.c.h.b16 %v346
      %v394 = vunpack.c.l.b16 %v347
      %v395 = vunpack.c.h.b16 %v347
      %v396 = vunpack.c.l.b16 %v348
      %v397 = vunpack.c.h.b16 %v348
      %v398 = vunpack.c.l.b16 %v349
      %v399 = vunpack.c.h.b16 %v349
      %v400 = vunpack.c.l.b16 %v350
      %v401 = vunpack.c.h.b16 %v350
      %v402 = vunpack.c.l.b16 %v351
      %v403 = vunpack.c.h.b16 %v351
      %v404 = vunpack.c.l.b16 %v352
      %v405 = vunpack.c.h.b16 %v352
      %v406 = vunpack.c.l.b16 %v353
      %v407 = vunpack.c.h.b16 %v353
      %v408 = vunpack.c.l.b16 %v354
      %v409 = vunpack.c.h.b16 %v354
      %v410 = vunpack.c.l.b16 %v355
      %v411 = vunpack.c.h.b16 %v355
      %v412 = vunpack.c.l.b16 %v356
      %v413 = vunpack.c.h.b16 %v356
      %v414 = vunpack.c.l.b16 %v357
      %v415 = vunpack.c.h.b16 %v357
      %v416 = vunpack.c.l.b16 %v358
      %v417 = vunpack.c.h.b16 %v358
      %v418 = vunpack.c.l.b16 %v359
      %v419 = vunpack.c.h.b16 %v359
      %v420 = vunpack.c.l.b16 %v360
      %v421 = vunpack.c.h.b16 %v360
      %v422 = vpack.c.b16 %v392, %v390
      %v423 = vpack.c.b16 %v393, %v391
      %v424 = vpack.c.b16 %v396, %v394
      %v425 = vpack.c.b16 %v397, %v395
      %v426 = vpack.c.b16 %v400, %v398
      %v427 = vpack.c.b16 %v401, %v399
      %v428 = vpack.c.b16 %v404, %v402
      %v429 = vpack.c.b16 %v405, %v403
      %v430 = vpack.c.b16 %v408, %v406
      %v431 = vpack.c.b16 %v409, %v407
      %v432 = vpack.c.b16 %v412, %v410
      %v433 = vpack.c.b16 %v413, %v411
      %v434 = vpack.c.b16 %v416, %v414
      %v435 = vpack.c.b16 %v417, %v415
      %v436 = vpack.c.b16 %v420, %v418
      %v437 = vpack.c.b16 %v421, %v419
      %454 = vmatprep.subr.bf16.mxu0 %v423
      %455 = vmatpush1.bf16.msra.mxu0 %v422
      %456 = vmatprep.subr.bf16.mxu0 %v425
      %457 = vmatpush1.bf16.msra.mxu0 %v424
      %458 = vmatprep.subr.bf16.mxu0 %v427
      %459 = vmatpush1.bf16.msra.mxu0 %v426
      %460 = vmatprep.subr.bf16.mxu0 %v429
      %461 = vmatpush1.bf16.msra.mxu0 %v428
      %462 = vmatprep.subr.bf16.mxu0 %v431
      %463 = vmatpush1.bf16.msra.mxu0 %v430
      %464 = vmatprep.subr.bf16.mxu0 %v433
      %465 = vmatpush1.bf16.msra.mxu0 %v432
      %466 = vmatprep.subr.bf16.mxu0 %v435
      %467 = vmatpush1.bf16.msra.mxu0 %v434
      %468 = vmatprep.subr.bf16.mxu0 %v437
      %469 = vmatpush1.bf16.msra.mxu0 %v436
      %470 = vmatprep.subr.bf16.mxu0 0
      %471 = vmatpush1.bf16.msra.mxu0 0
      %472 = vmatprep.subr.bf16.mxu0 0
      %473 = vmatpush1.bf16.msra.mxu0 0
      %474 = vmatprep.subr.bf16.mxu0 0
      %475 = vmatpush1.bf16.msra.mxu0 0
      %476 = vmatprep.subr.bf16.mxu0 0
      %477 = vmatpush1.bf16.msra.mxu0 0
      %478 = vmatprep.subr.bf16.mxu0 0
      %479 = vmatpush1.bf16.msra.mxu0 0
      %480 = vmatprep.subr.bf16.mxu0 0
      %481 = vmatpush1.bf16.msra.mxu0 0
      %482 = vmatprep.subr.bf16.mxu0 0
      %483 = vmatpush1.bf16.msra.mxu0 0
      %484 = vmatprep.subr.bf16.mxu0 0
      %485 = vmatpush1.bf16.msra.mxu0 0
      %486 = vmatprep.mubr.bf16.mxu0 0
      %487 = vmatmul.mubr.bf16.gmra.mrb[0].mxu0 %v361
      %v488 = vpop.f32.mrb[0].mxu0
      %v489 = vadd.f32 %v367, %v488
      %v490 = vpop.f32.mrb[0].mxu0
      %v491 = vadd.f32 %v371, %v490
      %v492 = vpop.f32.mrb[0].mxu0
      %v493 = vadd.f32 %v367, %v492
      %v494 = vpop.f32.mrb[0].mxu0
      %v495 = vadd.f32 %v371, %v494
      %496 = vdwg.mxu0
      %497 = vst [vmem:[%s309] sm:$0xff] %v489
      %498 = vst [vmem:[%s309 + $0x8] sm:$0xff] %v491
      %499 = vst [vmem:[%s309 + $0x10] sm:$0xf] %v493
      %500 = vst [vmem:[%s309 + $0x18] sm:$0xf] %v495
      %v501 = vld [vmem:[%s304] sm:$0xff]
      %v502 = vld [vmem:[%s304 + $0x8] sm:$0x7]
      %v503 = vmax.f32 %v489, %v491
      %504 = vmax.xlane.f32.xlu0 %v503
      %v505 = vpop.xlane.xlu0 %504
      %vm506 = vcmask 1042432
      %v507 = vsel %vm506, %v493, -inf
      %v508 = vsel %vm506, %v495, -inf
      %v509 = vmax.f32 %v507, %v508
      %510 = vmax.xlane.f32.xlu0 %v509
      %v511 = vpop.xlane.xlu0 %510
      %v512 = vsub.f32 %v489, %v505
      %v513 = vsub.f32 %v491, %v505
      %v514 = vsub.f32 %v493, %v511
      %v515 = vsub.f32 %v495, %v511
      %v516 = vmul.f32 %v512, 1.442695
      %v517 = vpow.pop %v516
      %v518 = vmul.f32 %v513, 1.442695
      %v519 = vpow.pop %v518
      %v520 = vmul.f32 %v514, 1.442695
      %v521 = vpow.pop %v520
      %v522 = vmul.f32 %v515, 1.442695
      %v523 = vpow.pop %v522
      %v524 = vadd.f32 %v517, %v519
      %525 = vadd.xlane.f32.xlu0 %v524
      %v526 = vpop.xlane.xlu0 %525
      %v527 = vsel %vm506, %v521, 0.0
      %v528 = vsel %vm506, %v523, 0.0
      %v529 = vadd.f32 %v527, %v528
      %530 = vadd.xlane.f32.xlu0 %v529
      %v531 = vpop.xlane.xlu0 %530
      %v532 = vlog2.pop %v526
      %v533 = vmul.f32 %v532, 0.6931472
      %v534 = vlog2.pop %v531
      %v535 = vmul.f32 %v534, 0.6931472
      %v536 = vadd.f32 %v533, %v505
      %v537 = vadd.f32 %v535, %v511
      %v538 = vlaneseq
      %v539 = vand.u32 %v538, 127
      %v540 = vadd.s32 %v539, 128
      %541 = vset.pattern.permute.xlu0 0
      %542 = vperm.xlu0 %541, %v501
      %v543 = vpop.permute.xlu0 %542
      %544 = vset.pattern.permute.xlu0 0
      %545 = vperm.xlu0 %544, %v502
      %v546 = vpop.permute.xlu0 %545
      %vm547 = vcmp.eq.s32.totalorder %v539, %v543
      %vm548 = vcmp.eq.s32.totalorder %v540, %v543
      %vm549 = vcmp.eq.s32.totalorder %v539, %v546
      %vm550 = vcmp.eq.s32.totalorder %v540, %v546
      %v551 = vsel %vm547, %v489, 0.0
      %v552 = vsel %vm548, %v491, 0.0
      %v553 = vsel %vm549, %v493, 0.0
      %v554 = vsel %vm550, %v495, 0.0
      %v555 = vadd.f32 %v551, %v552
      %556 = vadd.xlane.f32.xlu0 %v555
      %v557 = vpop.xlane.xlu0 %556
      %v558 = vsel %vm506, %v553, 0.0
      %v559 = vsel %vm506, %v554, 0.0
      %v560 = vadd.f32 %v558, %v559
      %561 = vadd.xlane.f32.xlu0 %v560
      %v562 = vpop.xlane.xlu0 %561
      %vm563 = vcmp.ge.s32.totalorder %v501, 0
      %vm564 = vcmp.ge.s32.totalorder %v502, 0
      %v565 = vsel %vm563, 1, 0
      %v566 = vsel %vm564, 1, 0
      %v567 = vcvt.s32.f32 %v565
      %v568 = vcvt.s32.f32 %v566
      %v569 = vsub.f32 %v536, %v557
      %v570 = vsub.f32 %v537, %v562
      %v571 = vmul.f32 %v569, %v567
      %v572 = vmul.f32 %v570, %v568
      %vm573 = vcmask 7168
      %v574 = vsel %vm573, %v571, 0.0
      %vm575 = vcmask 2048
      %v576 = vsel %vm575, %v572, 0.0
      %v577 = vadd.f32 %v574, %v576
      %v578 = vrot.slane %v577, 4
      %v579 = vadd.f32 %v577, %v578
      %v580 = vrot.slane %v579, 2
      %v581 = vadd.f32 %v579, %v580
      %v582 = vrot.slane %v581, 1
      %v583 = vadd.f32 %v581, %v582
      %vm584 = vcmask 0
      %585 = vst.msk [vmem:[%s312] sm:$0x1] %vm584, %v583
      %v586 = vsel %vm573, %v567, 0.0
      %v587 = vsel %vm575, %v568, 0.0
      %v588 = vadd.f32 %v586, %v587
      %v589 = vrot.slane %v588, 4
      %v590 = vadd.f32 %v588, %v589
      %v591 = vrot.slane %v590, 2
      %v592 = vadd.f32 %v590, %v591
      %v593 = vrot.slane %v592, 1
      %v594 = vadd.f32 %v592, %v593
      %595 = vst.msk [vmem:[%s315] sm:$0x1] %vm584, %v594
      %p596 = scmp.lt.s32.totalorder %s19, 1
      %s597 = scalar_select %p596, %s19, 1
      %s598 = smul.addr %s597, 4
      %s599 = smul.addr %s598, 8
      %s600 = scalar_lea.vmem %s5, %s599
      %p601 = scmp.lt.s32.totalorder %s19, 1
      %s602 = scalar_select %p601, %s19, 1
      %s603 = scalar_lea.vmem %s6, %s602
      %p604 = scmp.lt.s32.totalorder %s19, 1
      %s605 = scalar_select %p604, %s19, 1
      %s606 = scalar_lea.vmem %s7, %s605
      // Predicated region
      $region41: #{forward.5} parent=39 // pred_check
        %p607 = pneg %p152
      $region42: #{forward.5} parent=39 // pred_check_branch
        %609 = sbr.rel (%p607) target = $region44
      $region43: #{forward.5} parent=39 // pred_region
        _
      $region44: #{forward.5} parent=39 // pred_fallthru
        _
      // Predicated region
      $region45: #{forward.5} parent=39 // pred_check
        %p610 = pneg %p178
      $region46: #{forward.5} parent=39 // pred_check_branch
        %612 = sbr.rel (%p610) target = $region48
      $region47: #{forward.5} parent=39 // pred_region
        _
      $region48: #{forward.5} parent=39 // pred_fallthru
        _
      // Predicated region
      $region49: #{forward.5} parent=39 // pred_check
        %p613 = pneg %p204
      $region50: #{forward.5} parent=39 // pred_check_branch
        %615 = sbr.rel (%p613) target = $region52
      $region51: #{forward.5} parent=39 // pred_region
        _
      $region52: #{forward.5} parent=39 // pred_fallthru
        _
    $region40: #{forward.5} parent=5 // pred_fallthru
      _
    %p616 = scmp.le.s32.totalorder 2, %s14
    // Predicated region
    $region53: #{forward.5} parent=5 // pred_check
      %p617 = pneg %p616
    $region54: #{forward.5} parent=5 // pred_check_branch
      %619 = sbr.rel (%p617) target = $region56
    $region55: #{forward.5} parent=5 // pred_region
      %s620 = ssub.s32 %s14, 2
      // Predicated region
      $region57: #{forward.5} parent=55 // pred_check
        %p621 = pneg %p158
      $region58: #{forward.5} parent=55 // pred_check_branch
        %623 = sbr.rel (%p621) target = $region60
      $region59: #{forward.5} parent=55 // pred_region
        %p624 = scmp.lt.s32.totalorder %s20, 1
        %s625 = scalar_select %p624, %s20, 1
        %s626 = smul.addr %s625, 4
        %s627 = smul.addr %s626, 8
        %s628 = scalar_lea.vmem %s5, %s627
      $region60: #{forward.5} parent=55 // pred_fallthru
        _
      // Predicated region
      $region61: #{forward.5} parent=55 // pred_check
        %p629 = pneg %p184
      $region62: #{forward.5} parent=55 // pred_check_branch
        %631 = sbr.rel (%p629) target = $region64
      $region63: #{forward.5} parent=55 // pred_region
        %p632 = scmp.lt.s32.totalorder %s20, 1
        %s633 = scalar_select %p632, %s20, 1
        %s634 = scalar_lea.vmem %s6, %s633
      $region64: #{forward.5} parent=55 // pred_fallthru
        _
      // Predicated region
      $region65: #{forward.5} parent=55 // pred_check
        %p635 = pneg %p210
      $region66: #{forward.5} parent=55 // pred_check_branch
        %637 = sbr.rel (%p635) target = $region68
      $region67: #{forward.5} parent=55 // pred_region
        %p638 = scmp.lt.s32.totalorder %s20, 1
        %s639 = scalar_select %p638, %s20, 1
        %s640 = scalar_lea.vmem %s7, %s639
      $region68: #{forward.5} parent=55 // pred_fallthru
        _
    $region56: #{forward.5} parent=5 // pred_fallthru
      _
  $region6: #{forward.5} parent=0 // loop_footer
    %s18 = sadd.s32 1, %s14
  $region7: #{forward.5} parent=0 // loop_footer_branch
    %13 = sbr.rel target = $region3
  $region8: #{forward.5} parent=0 // loop_exit
    _

// kernel: forward.4
$region0: #{forward.4}
  #allocation0 [shape = 'u32[]', space=smem, size = 0x4, offset = 0x4, fixed_abs, tag = 'smem constant byte address 0x4 - core index']
  #allocation1 [shape = 'u32[144,128]{1,0:T(1,128)}', space=vmem, size = 0x12000, scoped, tag = 'internal scratch']
  %s0 = inlined_call_operand.vmem [shape: f32[2,12,128], index: 0, kind: input, shape index: {}]
  %s1 = inlined_call_operand.vmem [shape: f32[2,1,12], index: 1, kind: input, shape index: {}]
  %s2 = inlined_call_operand.vmem [shape: f32[1,128], index: 2, kind: input, shape index: {}]
  %s3 = inlined_call_operand.vmem [shape: bf16[128,384], index: 3, kind: input, shape index: {}]
  %s4 = inlined_call_operand.vmem [shape: bf16[128,128], index: 4, kind: input, shape index: {}]
  %s5 = inlined_call_operand.vmem [shape: f32[1,128], index: 5, kind: input, shape index: {}]
  %s6 = inlined_call_operand.vmem [shape: bf16[128,512], index: 6, kind: input, shape index: {}]
  %s7 = inlined_call_operand.vmem [shape: bf16[256,128], index: 7, kind: input, shape index: {}]
  %s8 = inlined_call_operand.vmem [shape: f32[2,12,128], index: 8, kind: output, shape index: {}]
  %s9 = sld [smem:[#allocation0]]
  $region65: #{forward.4} parent=0
    _
  %s11 = ssub.s32 1, %s9
  %s12 = scalar_select 0, %s11, %s9
  loop: start=0, step=1, limit=4
  $region2: #{forward.4} parent=0 // loop_pre_header
    _
  $region3: #{forward.4} parent=0 // loop_header
    %s14 = sphi 0, %s18
    %p15 = scmp.ge.s32.totalorder %s14, 4
    %s24 = sphi 0, %s26
    %s27 = sphi 0, %s24
    %s28 = sphi 0, %s27
    %s44 = sphi 0, %s28
    %s50 = sphi 0, %s52
    %s53 = sphi 0, %s50
    %s54 = sphi 0, %s53
    %s70 = sphi 0, %s54
    %s74 = sphi 0, %s74
    %s76 = sphi 0, %s74
    %s77 = sphi 0, %s76
    %s91 = sphi 0, %s77
    %s95 = sphi 0, %s95
    %s97 = sphi 0, %s95
    %s98 = sphi 0, %s97
    %s112 = sphi 0, %s98
    %s116 = sphi 0, %s116
    %s118 = sphi 0, %s116
    %s119 = sphi 0, %s118
    %s133 = sphi 0, %s119
    %s137 = sphi 0, %s137
    %s139 = sphi 0, %s137
    %s140 = sphi 0, %s139
    %s154 = sphi 0, %s140
    %s158 = sphi 0, %s158
    %s160 = sphi 0, %s158
    %s161 = sphi 0, %s160
    %s175 = sphi 0, %s161
    %s179 = sphi 0, %s179
    %s181 = sphi 0, %s179
    %s182 = sphi 0, %s181
    %s196 = sphi 0, %s182
    %s202 = sphi 0, %s204
    %s205 = sphi 0, %s202
    %s206 = sphi 0, %s205
    %s222 = sphi 0, %s206
  $region4: #{forward.4} parent=0 // loop_header_branch
    %17 = sbr.rel (%p15) target = $region8
  $region5: #{forward.4} parent=0 // loop_body
    %s19 = ssub.s32 %s14, 1
    %s20 = ssub.s32 %s14, 2
    %s21 = sadd.s32 %s14, 1
    %s22 = ssub.s32 %s14, %s21
    %p23 = scmp.eq.s32.totalorder %s22, 0
    %s25 = sadd.s32 %s24, 1
    %s26 = scalar_select %p23, %s24, %s25
    %p29 = pneg %p23
    %p30 = scmp.eq.s32.totalorder %s14, 1
    %p31 = por %p29, %p30
    %p32 = scmp.ne.s32.totalorder %s24, %s27
    %p33 = scmp.eq.s32.totalorder %s14, 0
    %p34 = por %p32, %p33
    %p35 = scmp.ne.s32.totalorder %s24, %s27
    %p36 = scmp.eq.s32.totalorder %s19, 1
    %p37 = por %p35, %p36
    %p38 = scmp.ne.s32.totalorder %s27, %s28
    %p39 = scmp.eq.s32.totalorder %s19, 0
    %p40 = por %p38, %p39
    %p41 = scmp.ne.s32.totalorder %s27, %s28
    %p42 = scmp.eq.s32.totalorder %s20, 1
    %p43 = por %p41, %p42
    %p45 = scmp.ne.s32.totalorder %s28, %s44
    %p46 = scmp.eq.s32.totalorder %s20, 0
    %p47 = por %p45, %p46
    %s48 = ssub.s32 %s14, %s21
    %p49 = scmp.eq.s32.totalorder %s48, 0
    %s51 = sadd.s32 %s50, 1
    %s52 = scalar_select %p49, %s50, %s51
    %p55 = pneg %p49
    %p56 = scmp.eq.s32.totalorder %s14, 1
    %p57 = por %p55, %p56
    %p58 = scmp.ne.s32.totalorder %s50, %s53
    %p59 = scmp.eq.s32.totalorder %s14, 0
    %p60 = por %p58, %p59
    %p61 = scmp.ne.s32.totalorder %s50, %s53
    %p62 = scmp.eq.s32.totalorder %s19, 1
    %p63 = por %p61, %p62
    %p64 = scmp.ne.s32.totalorder %s53, %s54
    %p65 = scmp.eq.s32.totalorder %s19, 0
    %p66 = por %p64, %p65
    %p67 = scmp.ne.s32.totalorder %s53, %s54
    %p68 = scmp.eq.s32.totalorder %s20, 1
    %p69 = por %p67, %p68
    %p71 = scmp.ne.s32.totalorder %s54, %s70
    %p72 = scmp.eq.s32.totalorder %s20, 0
    %p73 = por %p71, %p72
    %s75 = sadd.s32 %s74, 1
    %p78 = scmp.eq.s32.totalorder %s14, 1
    %p79 = scmp.ne.s32.totalorder %s74, %s76
    %p80 = scmp.eq.s32.totalorder %s14, 0
    %p81 = por %p79, %p80
    %p82 = scmp.ne.s32.totalorder %s74, %s76
    %p83 = scmp.eq.s32.totalorder %s19, 1
    %p84 = por %p82, %p83
    %p85 = scmp.ne.s32.totalorder %s76, %s77
    %p86 = scmp.eq.s32.totalorder %s19, 0
    %p87 = por %p85, %p86
    %p88 = scmp.ne.s32.totalorder %s76, %s77
    %p89 = scmp.eq.s32.totalorder %s20, 1
    %p90 = por %p88, %p89
    %p92 = scmp.ne.s32.totalorder %s77, %s91
    %p93 = scmp.eq.s32.totalorder %s20, 0
    %p94 = por %p92, %p93
    %s96 = sadd.s32 %s95, 1
    %p99 = scmp.eq.s32.totalorder %s14, 1
    %p100 = scmp.ne.s32.totalorder %s95, %s97
    %p101 = scmp.eq.s32.totalorder %s14, 0
    %p102 = por %p100, %p101
    %p103 = scmp.ne.s32.totalorder %s95, %s97
    %p104 = scmp.eq.s32.totalorder %s19, 1
    %p105 = por %p103, %p104
    %p106 = scmp.ne.s32.totalorder %s97, %s98
    %p107 = scmp.eq.s32.totalorder %s19, 0
    %p108 = por %p106, %p107
    %p109 = scmp.ne.s32.totalorder %s97, %s98
    %p110 = scmp.eq.s32.totalorder %s20, 1
    %p111 = por %p109, %p110
    %p113 = scmp.ne.s32.totalorder %s98, %s112
    %p114 = scmp.eq.s32.totalorder %s20, 0
    %p115 = por %p113, %p114
    %s117 = sadd.s32 %s116, 1
    %p120 = scmp.eq.s32.totalorder %s14, 1
    %p121 = scmp.ne.s32.totalorder %s116, %s118
    %p122 = scmp.eq.s32.totalorder %s14, 0
    %p123 = por %p121, %p122
    %p124 = scmp.ne.s32.totalorder %s116, %s118
    %p125 = scmp.eq.s32.totalorder %s19, 1
    %p126 = por %p124, %p125
    %p127 = scmp.ne.s32.totalorder %s118, %s119
    %p128 = scmp.eq.s32.totalorder %s19, 0
    %p129 = por %p127, %p128
    %p130 = scmp.ne.s32.totalorder %s118, %s119
    %p131 = scmp.eq.s32.totalorder %s20, 1
    %p132 = por %p130, %p131
    %p134 = scmp.ne.s32.totalorder %s119, %s133
    %p135 = scmp.eq.s32.totalorder %s20, 0
    %p136 = por %p134, %p135
    %s138 = sadd.s32 %s137, 1
    %p141 = scmp.eq.s32.totalorder %s14, 1
    %p142 = scmp.ne.s32.totalorder %s137, %s139
    %p143 = scmp.eq.s32.totalorder %s14, 0
    %p144 = por %p142, %p143
    %p145 = scmp.ne.s32.totalorder %s137, %s139
    %p146 = scmp.eq.s32.totalorder %s19, 1
    %p147 = por %p145, %p146
    %p148 = scmp.ne.s32.totalorder %s139, %s140
    %p149 = scmp.eq.s32.totalorder %s19, 0
    %p150 = por %p148, %p149
    %p151 = scmp.ne.s32.totalorder %s139, %s140
    %p152 = scmp.eq.s32.totalorder %s20, 1
    %p153 = por %p151, %p152
    %p155 = scmp.ne.s32.totalorder %s140, %s154
    %p156 = scmp.eq.s32.totalorder %s20, 0
    %p157 = por %p155, %p156
    %s159 = sadd.s32 %s158, 1
    %p162 = scmp.eq.s32.totalorder %s14, 1
    %p163 = scmp.ne.s32.totalorder %s158, %s160
    %p164 = scmp.eq.s32.totalorder %s14, 0
    %p165 = por %p163, %p164
    %p166 = scmp.ne.s32.totalorder %s158, %s160
    %p167 = scmp.eq.s32.totalorder %s19, 1
    %p168 = por %p166, %p167
    %p169 = scmp.ne.s32.totalorder %s160, %s161
    %p170 = scmp.eq.s32.totalorder %s19, 0
    %p171 = por %p169, %p170
    %p172 = scmp.ne.s32.totalorder %s160, %s161
    %p173 = scmp.eq.s32.totalorder %s20, 1
    %p174 = por %p172, %p173
    %p176 = scmp.ne.s32.totalorder %s161, %s175
    %p177 = scmp.eq.s32.totalorder %s20, 0
    %p178 = por %p176, %p177
    %s180 = sadd.s32 %s179, 1
    %p183 = scmp.eq.s32.totalorder %s14, 1
    %p184 = scmp.ne.s32.totalorder %s179, %s181
    %p185 = scmp.eq.s32.totalorder %s14, 0
    %p186 = por %p184, %p185
    %p187 = scmp.ne.s32.totalorder %s179, %s181
    %p188 = scmp.eq.s32.totalorder %s19, 1
    %p189 = por %p187, %p188
    %p190 = scmp.ne.s32.totalorder %s181, %s182
    %p191 = scmp.eq.s32.totalorder %s19, 0
    %p192 = por %p190, %p191
    %p193 = scmp.ne.s32.totalorder %s181, %s182
    %p194 = scmp.eq.s32.totalorder %s20, 1
    %p195 = por %p193, %p194
    %p197 = scmp.ne.s32.totalorder %s182, %s196
    %p198 = scmp.eq.s32.totalorder %s20, 0
    %p199 = por %p197, %p198
    %s200 = ssub.s32 %s14, %s21
    %p201 = scmp.eq.s32.totalorder %s200, 0
    %s203 = sadd.s32 %s202, 1
    %s204 = scalar_select %p201, %s202, %s203
    %p207 = pneg %p201
    %p208 = scmp.eq.s32.totalorder %s14, 1
    %p209 = por %p207, %p208
    %p210 = scmp.ne.s32.totalorder %s202, %s205
    %p211 = scmp.eq.s32.totalorder %s14, 0
    %p212 = por %p210, %p211
    %p213 = scmp.ne.s32.totalorder %s202, %s205
    %p214 = scmp.eq.s32.totalorder %s19, 1
    %p215 = por %p213, %p214
    %p216 = scmp.ne.s32.totalorder %s205, %s206
    %p217 = scmp.eq.s32.totalorder %s19, 0
    %p218 = por %p216, %p217
    %p219 = scmp.ne.s32.totalorder %s205, %s206
    %p220 = scmp.eq.s32.totalorder %s20, 1
    %p221 = por %p219, %p220
    %p223 = scmp.ne.s32.totalorder %s206, %s222
    %p224 = scmp.eq.s32.totalorder %s20, 0
    %p225 = por %p223, %p224
    %p226 = scmp.le.s32.totalorder 1, %s14
    %p227 = scmp.lt.s32.totalorder %s14, 3
    %p228 = pnand %p226, %p227
    %p229 = pneg %p228
    // Predicated region
    $region9: #{forward.4} parent=5 // pred_check
      _
    $region10: #{forward.4} parent=5 // pred_check_branch
      %231 = sbr.rel (%p228) target = $region12
    $region11: #{forward.4} parent=5 // pred_region
      %s232 = ssub.s32 %s14, 1
      // Predicated region
      $region13: #{forward.4} parent=11 // pred_check
        %p233 = pneg %p87
      $region14: #{forward.4} parent=11 // pred_check_branch
        %235 = sbr.rel (%p233) target = $region16
      $region15: #{forward.4} parent=11 // pred_region
        _
      $region16: #{forward.4} parent=11 // pred_fallthru
        _
      // Predicated region
      $region17: #{forward.4} parent=11 // pred_check
        %p236 = pneg %p108
      $region18: #{forward.4} parent=11 // pred_check_branch
        %238 = sbr.rel (%p236) target = $region20
      $region19: #{forward.4} parent=11 // pred_region
        _
      $region20: #{forward.4} parent=11 // pred_fallthru
        _
      // Predicated region
      $region21: #{forward.4} parent=11 // pred_check
        %p239 = pneg %p129
      $region22: #{forward.4} parent=11 // pred_check_branch
        %241 = sbr.rel (%p239) target = $region24
      $region23: #{forward.4} parent=11 // pred_region
        _
      $region24: #{forward.4} parent=11 // pred_fallthru
        _
      // Predicated region
      $region25: #{forward.4} parent=11 // pred_check
        %p242 = pneg %p150
      $region26: #{forward.4} parent=11 // pred_check_branch
        %244 = sbr.rel (%p242) target = $region28
      $region27: #{forward.4} parent=11 // pred_region
        _
      $region28: #{forward.4} parent=11 // pred_fallthru
        _
      // Predicated region
      $region29: #{forward.4} parent=11 // pred_check
        %p245 = pneg %p171
      $region30: #{forward.4} parent=11 // pred_check_branch
        %247 = sbr.rel (%p245) target = $region32
      $region31: #{forward.4} parent=11 // pred_region
        _
      $region32: #{forward.4} parent=11 // pred_fallthru
        _
      // Predicated region
      $region33: #{forward.4} parent=11 // pred_check
        %p248 = pneg %p192
      $region34: #{forward.4} parent=11 // pred_check_branch
        %250 = sbr.rel (%p248) target = $region36
      $region35: #{forward.4} parent=11 // pred_region
        _
      $region36: #{forward.4} parent=11 // pred_fallthru
        _
    $region12: #{forward.4} parent=5 // pred_fallthru
      _
    %p251 = scmp.lt.s32.totalorder %s14, 2
    // Predicated region
    $region37: #{forward.4} parent=5 // pred_check
      %p252 = pneg %p251
    $region38: #{forward.4} parent=5 // pred_check_branch
      %254 = sbr.rel (%p252) target = $region40
    $region39: #{forward.4} parent=5 // pred_region
      // Predicated region
      $region41: #{forward.4} parent=39 // pred_check
        %p255 = pneg %p34
      $region42: #{forward.4} parent=39 // pred_check_branch
        %257 = sbr.rel (%p255) target = $region44
      $region43: #{forward.4} parent=39 // pred_region
        %p258 = scmp.lt.s32.totalorder %s14, 1
        %s259 = scalar_select %p258, %s14, 1
        %s260 = smul.addr %s259, 2
        %s261 = smul.addr %s260, 8
        %s262 = scalar_lea.vmem %s0, %s261
      $region44: #{forward.4} parent=39 // pred_fallthru
        _
      // Predicated region
      $region45: #{forward.4} parent=39 // pred_check
        %p263 = pneg %p60
      $region46: #{forward.4} parent=39 // pred_check_branch
        %265 = sbr.rel (%p263) target = $region48
      $region47: #{forward.4} parent=39 // pred_region
        %p266 = scmp.lt.s32.totalorder %s14, 1
        %s267 = scalar_select %p266, %s14, 1
        %s268 = scalar_lea.vmem %s1, %s267
      $region48: #{forward.4} parent=39 // pred_fallthru
        _
    $region40: #{forward.4} parent=5 // pred_fallthru
      _
    %p269 = scmp.le.s32.totalorder 1, %s14
    %p270 = scmp.lt.s32.totalorder %s14, 3
    %p271 = pnand %p269, %p270
    %p272 = pneg %p271
    // Predicated region
    $region49: #{forward.4} parent=5 // pred_check
      _
    $region50: #{forward.4} parent=5 // pred_check_branch
      %274 = sbr.rel (%p271) target = $region52
    $region51: #{forward.4} parent=5 // pred_region
      %s275 = ssub.s32 %s14, 1
      %p276 = scmp.lt.s32.totalorder %s19, 1
      %s277 = scalar_select %p276, %s19, 1
      %s278 = smul.addr %s277, 2
      %s279 = smul.addr %s278, 8
      %s280 = scalar_lea.vmem %s0, %s279
      %p281 = pneg %p40
      %p282 = pneg %p37
      %p283 = scmp.lt.s32.totalorder %s19, 1
      %s284 = scalar_select %p283, %s19, 1
      %s285 = scalar_lea.vmem %s1, %s284
      %p286 = pneg %p66
      %p287 = pneg %p63
      %p288 = pneg %p87
      %p289 = pneg %p84
      %p290 = pneg %p108
      %p291 = pneg %p105
      %p292 = pneg %p129
      %p293 = pneg %p126
      %p294 = pneg %p150
      %p295 = pneg %p147
      %p296 = pneg %p171
      %p297 = pneg %p168
      %p298 = pneg %p192
      %p299 = pneg %p189
      %p300 = pneg %p218
      %p301 = pneg %p215
      %p302 = scmp.lt.s32.totalorder %s19, 1
      %s303 = scalar_select %p302, %s19, 1
      %s304 = smul.addr %s303, 2
      %s305 = smul.addr %s304, 8
      %s306 = scalar_lea.vmem %s8, %s305
      %p307 = scmp.lt.s32.totalorder %s19, 1
      %s308 = scalar_select %p307, %s19, 1
      %s309 = smul.addr %s308, 2
      %s310 = smul.addr %s309, 8
      %s311 = scalar_lea.vmem %s0, %s310
      %p312 = scmp.lt.s32.totalorder %s19, 1
      %s313 = scalar_select %p312, %s19, 1
      %s314 = scalar_lea.vmem %s1, %s313
      %p315 = scmp.lt.s32.totalorder %s19, 1
      %s316 = scalar_select %p315, %s19, 1
      %s317 = smul.addr %s316, 2
      %s318 = smul.addr %s317, 8
      %s319 = scalar_lea.vmem %s8, %s318
      %v321 = vld [vmem:[%s311] sm:$0xff]
      %v322 = vld [vmem:[%s311 + $0x8] sm:$0xf]
      %v323 = vld [vmem:[%s2] sm:$0x1]
      %v324 = vmul.f32 %v321, %v321
      %v325 = vmul.f32 %v322, %v322
      %326 = vadd.xlane.f32.xlu0 %v324
      %v327 = vpop.xlane.xlu0 %326
      %vm328 = vcmask 1043456
      %v329 = vsel %vm328, %v325, 0.0
      %330 = vadd.xlane.f32.xlu0 %v329
      %v331 = vpop.xlane.xlu0 %330
      %v332 = vrcp.pop 128.0
      %v333 = vmul.f32 %v327, %v332
      %v334 = vmul.f32 %v331, %v332
      %v335 = vadd.f32 %v333, 1e-06
      %v336 = vadd.f32 %v334, 1e-06
      %v337 = vrsqrt.pop %v335
      %v338 = vrsqrt.pop %v336
      %v339 = vmul.f32 %v321, %v337
      %v340 = vmul.f32 %v322, %v338
      %v342 = vlaneseq
      %v343 = vshrl.u32 %v342, 7
      %v344 = vsub.s32 0, %v343
      %v345 = vrot.slane %v323, %v344
      %v347 = vmul.f32 %v339, %v345
      %v348 = vmul.f32 %v340, %v345
      %v349 = vld [vmem:[%s3] sm:$0xff]
      %v350 = vld [vmem:[%s3 + $0x8] sm:$0xf]
      %v351 = vld [vmem:[%s3 + $0xc] sm:$0xff]
      %v352 = vld [vmem:[%s3 + $0x14] sm:$0xf]
      %v353 = vld [vmem:[%s3 + $0x18] sm:$0xff]
      %v354 = vld [vmem:[%s3 + $0x20] sm:$0xf]
      %v355 = vld [vmem:[%s3 + $0x24] sm:$0xff]
      %v356 = vld [vmem:[%s3 + $0x2c] sm:$0xf]
      %v357 = vld [vmem:[%s3 + $0x30] sm:$0xff]
      %v358 = vld [vmem:[%s3 + $0x38] sm:$0xf]
      %v359 = vld [vmem:[%s3 + $0x3c] sm:$0xff]
      %v360 = vld [vmem:[%s3 + $0x44] sm:$0xf]
      %v361 = vld [vmem:[%s3 + $0x48] sm:$0xff]
      %v362 = vld [vmem:[%s3 + $0x50] sm:$0xf]
      %v363 = vld [vmem:[%s3 + $0x54] sm:$0xff]
      %v364 = vld [vmem:[%s3 + $0x5c] sm:$0xf]
      %v365 = vld [vmem:[%s3 + $0x60] sm:$0xff]
      %v366 = vld [vmem:[%s3 + $0x68] sm:$0xf]
      %v367 = vld [vmem:[%s3 + $0x6c] sm:$0xff]
      %v368 = vld [vmem:[%s3 + $0x74] sm:$0xf]
      %v369 = vld [vmem:[%s3 + $0x78] sm:$0xff]
      %v370 = vld [vmem:[%s3 + $0x80] sm:$0xf]
      %v371 = vld [vmem:[%s3 + $0x84] sm:$0xff]
      %v372 = vld [vmem:[%s3 + $0x8c] sm:$0xf]
      %v373 = vld [vmem:[%s3 + $0x90] sm:$0xff]
      %v374 = vld [vmem:[%s3 + $0x98] sm:$0xf]
      %v375 = vld [vmem:[%s3 + $0x9c] sm:$0xff]
      %v376 = vld [vmem:[%s3 + $0xa4] sm:$0xf]
      %v377 = vld [vmem:[%s3 + $0xa8] sm:$0xff]
      %v378 = vld [vmem:[%s3 + $0xb0] sm:$0xf]
      %v379 = vld [vmem:[%s3 + $0xb4] sm:$0xff]
      %v380 = vld [vmem:[%s3 + $0xbc] sm:$0xf]
      %v381 = vpack.c.bf16 %v348, %v347
      %v414 = vunpack.c.l.b16 %v349
      %v415 = vunpack.c.h.b16 %v349
      %v416 = vunpack.c.l.b16 %v350
      %v417 = vunpack.c.l.b16 %v351
      %v418 = vunpack.c.h.b16 %v351
      %v419 = vunpack.c.l.b16 %v352
      %v420 = vunpack.c.l.b16 %v353
      %v421 = vunpack.c.h.b16 %v353
      %v422 = vunpack.c.l.b16 %v354
      %v423 = vunpack.c.l.b16 %v355
      %v424 = vunpack.c.h.b16 %v355
      %v425 = vunpack.c.l.b16 %v356
      %v426 = vunpack.c.l.b16 %v357
      %v427 = vunpack.c.h.b16 %v357
      %v428 = vunpack.c.l.b16 %v358
      %v429 = vunpack.c.l.b16 %v359
      %v430 = vunpack.c.h.b16 %v359
      %v431 = vunpack.c.l.b16 %v360
      %v432 = vunpack.c.l.b16 %v361
      %v433 = vunpack.c.h.b16 %v361
      %v434 = vunpack.c.l.b16 %v362
      %v435 = vunpack.c.l.b16 %v363
      %v436 = vunpack.c.h.b16 %v363
      %v437 = vunpack.c.l.b16 %v364
      %v438 = vunpack.c.l.b16 %v365
      %v439 = vunpack.c.h.b16 %v365
      %v440 = vunpack.c.l.b16 %v366
      %v441 = vunpack.c.l.b16 %v367
      %v442 = vunpack.c.h.b16 %v367
      %v443 = vunpack.c.l.b16 %v368
      %v444 = vunpack.c.l.b16 %v369
      %v445 = vunpack.c.h.b16 %v369
      %v446 = vunpack.c.l.b16 %v370
      %v447 = vunpack.c.l.b16 %v371
      %v448 = vunpack.c.h.b16 %v371
      %v449 = vunpack.c.l.b16 %v372
      %v450 = vunpack.c.l.b16 %v373
      %v451 = vunpack.c.h.b16 %v373
      %v452 = vunpack.c.l.b16 %v374
      %v453 = vunpack.c.l.b16 %v375
      %v454 = vunpack.c.h.b16 %v375
      %v455 = vunpack.c.l.b16 %v376
      %v456 = vunpack.c.l.b16 %v377
      %v457 = vunpack.c.h.b16 %v377
      %v458 = vunpack.c.l.b16 %v378
      %v459 = vunpack.c.l.b16 %v379
      %v460 = vunpack.c.h.b16 %v379
      %v461 = vunpack.c.l.b16 %v380
      %v462 = vpack.c.b16 %v417, %v414
      %v463 = vpack.c.b16 %v418, %v415
      %v464 = vpack.c.b16 %v419, %v416
      %v465 = vpack.c.b16 %v423, %v420
      %v466 = vpack.c.b16 %v424, %v421
      %v467 = vpack.c.b16 %v425, %v422
      %v468 = vpack.c.b16 %v429, %v426
      %v469 = vpack.c.b16 %v430, %v427
      %v470 = vpack.c.b16 %v431, %v428
      %v471 = vpack.c.b16 %v435, %v432
      %v472 = vpack.c.b16 %v436, %v433
      %v473 = vpack.c.b16 %v437, %v434
      %v474 = vpack.c.b16 %v441, %v438
      %v475 = vpack.c.b16 %v442, %v439
      %v476 = vpack.c.b16 %v443, %v440
      %v477 = vpack.c.b16 %v447, %v444
      %v478 = vpack.c.b16 %v448, %v445
      %v479 = vpack.c.b16 %v449, %v446
      %v480 = vpack.c.b16 %v453, %v450
      %v481 = vpack.c.b16 %v454, %v451
      %v482 = vpack.c.b16 %v455, %v452
      %v483 = vpack.c.b16 %v459, %v456
      %v484 = vpack.c.b16 %v460, %v457
      %v485 = vpack.c.b16 %v461, %v458
      %510 = vmatprep.subr.bf16.mxu0 %v463
      %511 = vmatpush1.bf16.msra.mxu0 %v462
      %512 = vmatprep.subr.bf16.mxu0 %v466
      %513 = vmatpush1.bf16.msra.mxu0 %v465
      %514 = vmatprep.subr.bf16.mxu0 %v469
      %515 = vmatpush1.bf16.msra.mxu0 %v468
      %516 = vmatprep.subr.bf16.mxu0 %v472
      %517 = vmatpush1.bf16.msra.mxu0 %v471
      %518 = vmatprep.subr.bf16.mxu0 %v475
      %519 = vmatpush1.bf16.msra.mxu0 %v474
      %520 = vmatprep.subr.bf16.mxu0 %v478
      %521 = vmatpush1.bf16.msra.mxu0 %v477
      %522 = vmatprep.subr.bf16.mxu0 %v481
      %523 = vmatpush1.bf16.msra.mxu0 %v480
      %524 = vmatprep.subr.bf16.mxu0 %v484
      %525 = vmatpush1.bf16.msra.mxu0 %v483
      %526 = vmatprep.subr.bf16.mxu0 0
      %527 = vmatpush1.bf16.msra.mxu0 0
      %528 = vmatprep.subr.bf16.mxu0 0
      %529 = vmatpush1.bf16.msra.mxu0 0
      %530 = vmatprep.subr.bf16.mxu0 0
      %531 = vmatpush1.bf16.msra.mxu0 0
      %532 = vmatprep.subr.bf16.mxu0 0
      %533 = vmatpush1.bf16.msra.mxu0 0
      %534 = vmatprep.subr.bf16.mxu0 0
      %535 = vmatpush1.bf16.msra.mxu0 0
      %536 = vmatprep.subr.bf16.mxu0 0
      %537 = vmatpush1.bf16.msra.mxu0 0
      %538 = vmatprep.subr.bf16.mxu0 0
      %539 = vmatpush1.bf16.msra.mxu0 0
      %540 = vmatprep.subr.bf16.mxu0 0
      %541 = vmatpush1.bf16.msra.mxu0 0
      %542 = vmatprep.mubr.bf16.mxu0 0
      %543 = vmatmul.mubr.bf16.gmra.mrb[0].mxu0 %v381
      %v544 = vpop.f32.mrb[0].mxu0
      %v545 = vadd.f32 0.0, %v544
      %v546 = vpop.f32.mrb[0].mxu0
      %v547 = vadd.f32 0.0, %v546
      %v548 = vpop.f32.mrb[0].mxu0
      %v549 = vadd.f32 0.0, %v548
      %v550 = vpop.f32.mrb[0].mxu0
      %v551 = vadd.f32 0.0, %v550
      %552 = vdwg.mxu0
      %553 = vmatprep.subr.bf16.mxu0 0
      %554 = vmatpush1.bf16.msra.mxu0 %v464
      %555 = vmatprep.subr.bf16.mxu0 0
      %556 = vmatpush1.bf16.msra.mxu0 %v467
      %557 = vmatprep.subr.bf16.mxu0 0
      %558 = vmatpush1.bf16.msra.mxu0 %v470
      %559 = vmatprep.subr.bf16.mxu0 0
      %560 = vmatpush1.bf16.msra.mxu0 %v473
      %561 = vmatprep.subr.bf16.mxu0 0
      %562 = vmatpush1.bf16.msra.mxu0 %v476
      %563 = vmatprep.subr.bf16.mxu0 0
      %564 = vmatpush1.bf16.msra.mxu0 %v479
      %565 = vmatprep.subr.bf16.mxu0 0
      %566 = vmatpush1.bf16.msra.mxu0 %v482
      %567 = vmatprep.subr.bf16.mxu0 0
      %568 = vmatpush1.bf16.msra.mxu0 %v485
      %569 = vmatprep.subr.bf16.mxu0 0
      %570 = vmatpush1.bf16.msra.mxu0 0
      %571 = vmatprep.subr.bf16.mxu0 0
      %572 = vmatpush1.bf16.msra.mxu0 0
      %573 = vmatprep.subr.bf16.mxu0 0
      %574 = vmatpush1.bf16.msra.mxu0 0
      %575 = vmatprep.subr.bf16.mxu0 0
      %576 = vmatpush1.bf16.msra.mxu0 0
      %577 = vmatprep.subr.bf16.mxu0 0
      %578 = vmatpush1.bf16.msra.mxu0 0
      %579 = vmatprep.subr.bf16.mxu0 0
      %580 = vmatpush1.bf16.msra.mxu0 0
      %581 = vmatprep.subr.bf16.mxu0 0
      %582 = vmatpush1.bf16.msra.mxu0 0
      %583 = vmatprep.subr.bf16.mxu0 0
      %584 = vmatpush1.bf16.msra.mxu0 0
      %585 = vmatprep.mubr.bf16.mxu0 0
      %586 = vmatmul.mubr.bf16.gmra.mrb[0].mxu0 %v381
      %v587 = vpop.f32.mrb[0].mxu0
      %v588 = vadd.f32 0.0, %v587
      %v589 = vpop.f32.mrb[0].mxu0
      %v590 = vpop.f32.mrb[0].mxu0
      %v591 = vadd.f32 0.0, %v590
      %v592 = vpop.f32.mrb[0].mxu0
      %593 = vdwg.mxu0
      %v594 = vlaneseq
      %v595 = vshrl.u32 %v594, 7
      %v596 = vadd.s32 %v595, 8
      %v597 = vlaneseq
      %v598 = vand.u32 %v597, 127
      %vm599 = vcmp.ge.s32.totalorder %v595, %v598
      %vm600 = vcmp.ge.s32.totalorder %v596, %v598
      %v601 = vld [vmem:[%s314] sm:$0x1]
      %vm602 = vcmp.gt.f32.partialorder %v601, 0.0
      %v603 = vsel %vm602, 1, 0
      %v604 = vlaneseq
      %v605 = vshrl.u32 %v604, 7
      %v606 = vsub.s32 0, %v605
      %v607 = vrot.slane %v603, %v606
      %vm608 = vcmp.eq.s32.totalorder %v607, 1
      %vm609 = vmand %vm599, %vm608
      %vm610 = vmand %vm600, %vm608
      %v611 = vpack.c.bf16 %v549, %v545
      %v612 = vpack.c.bf16 %v551, %v547
      %vm613 = vcmask 261120
      %v615 = vsel %vm613, %v611, 0
      %v618 = vsel %vm613, %v612, 0
      %620 = vmatprep.subr.bf16.mxu0 0
      %621 = vmatpush1.bf16.xpose.msra.mxu0 %v618
      %622 = vmatprep.subr.bf16.mxu0 0
      %623 = vmatpush1.bf16.xpose.msra.mxu0 0
      %624 = vmatprep.subr.bf16.mxu0 0
      %625 = vmatpush1.bf16.xpose.msra.mxu0 0
      %626 = vmatprep.subr.bf16.mxu0 0
      %627 = vmatpush1.bf16.xpose.msra.mxu0 0
      %628 = vmatprep.subr.bf16.mxu0 0
      %629 = vmatpush1.bf16.xpose.msra.mxu0 0
      %630 = vmatprep.subr.bf16.mxu0 0
      %631 = vmatpush1.bf16.xpose.msra.mxu0 0
      %632 = vmatprep.subr.bf16.mxu0 0
      %633 = vmatpush1.bf16.xpose.msra.mxu0 0
      %634 = vmatprep.subr.bf16.mxu0 0
      %635 = vmatpush1.bf16.xpose.msra.mxu0 0
      %636 = vmatprep.subr.bf16.mxu0 0
      %637 = vmatpush1.bf16.xpose.msra.mxu0 0
      %638 = vmatprep.subr.bf16.mxu0 0
      %639 = vmatpush1.bf16.xpose.msra.mxu0 0
      %640 = vmatprep.subr.bf16.mxu0 0
      %641 = vmatpush1.bf16.xpose.msra.mxu0 0
      %642 = vmatprep.subr.bf16.mxu0 0
      %643 = vmatpush1.bf16.xpose.msra.mxu0 0
      %644 = vmatprep.subr.bf16.mxu0 0
      %645 = vmatpush1.bf16.xpose.msra.mxu0 0
      %646 = vmatprep.subr.bf16.mxu0 0
      %647 = vmatpush1.bf16.xpose.msra.mxu0 0
      %648 = vmatprep.subr.bf16.mxu0 0
      %649 = vmatpush1.bf16.xpose.msra.mxu0 0
      %650 = vmatprep.subr.bf16.mxu0 0
      %651 = vmatpush1.bf16.xpose.msra.mxu0 0
      %652 = vmatprep.mubr.bf16.mxu0 0
      %653 = vmatmul.mubr.bf16.gmra.mrb[0].mxu0 %v615
      %v654 = vpop.f32.mrb[0].mxu0
      %v655 = vadd.f32 0.0, %v654
      %v656 = vpop.f32.mrb[0].mxu0
      %v657 = vpop.f32.mrb[0].mxu0
      %v658 = vadd.f32 0.0, %v657
      %v659 = vpop.f32.mrb[0].mxu0
      %660 = vdwg.mxu0
      %v661 = vmul.f32 %v655, 0.17677669
      %v662 = vmul.f32 %v658, 0.17677669
      %v663 = vsel %vm609, %v661, -1e+30
      %v664 = vsel %vm610, %v662, -1e+30
      %vm665 = vcmask 97280
      %v666 = vsel %vm665, %v663, -inf
      %667 = vmax.xlane.f32.xlu0 %v666
      %v668 = vpop.xlane.xlu0 %667
      %vm669 = vcmask 93184
      %v670 = vsel %vm669, %v664, -inf
      %671 = vmax.xlane.f32.xlu0 %v670
      %v672 = vpop.xlane.xlu0 %671
      %v673 = vsub.f32 %v663, %v668
      %v674 = vsub.f32 %v664, %v672
      %v675 = vmul.f32 %v673, 1.442695
      %v676 = vpow.pop %v675
      %v677 = vmul.f32 %v674, 1.442695
      %v678 = vpow.pop %v677
      %v679 = vsel %vm665, %v676, 0.0
      %680 = vadd.xlane.f32.xlu0 %v679
      %v681 = vpop.xlane.xlu0 %680
      %v682 = vsel %vm669, %v678, 0.0
      %683 = vadd.xlane.f32.xlu0 %v682
      %v684 = vpop.xlane.xlu0 %683
      %v685 = vrcp.pop %v681
      %v686 = vrcp.pop %v684
      %v687 = vmul.f32 %v676, %v685
      %v688 = vmul.f32 %v678, %v686
      %v689 = vpack.c.bf16 %v688, %v687
      %v690 = vpack.c.bf16 %v591, %v588
      %v692 = vsel %vm665, %v689, 0
      %vm694 = vcmask 1045504
      %v696 = vsel %vm694, %v690, 0
      %698 = vmatprep.subr.bf16.mxu0 0
      %699 = vmatpush1.bf16.msra.mxu0 %v696
      %700 = vmatprep.subr.bf16.mxu0 0
      %701 = vmatpush1.bf16.msra.mxu0 0
      %702 = vmatprep.subr.bf16.mxu0 0
      %703 = vmatpush1.bf16.msra.mxu0 0
      %704 = vmatprep.subr.bf16.mxu0 0
      %705 = vmatpush1.bf16.msra.mxu0 0
      %706 = vmatprep.subr.bf16.mxu0 0
      %707 = vmatpush1.bf16.msra.mxu0 0
      %708 = vmatprep.subr.bf16.mxu0 0
      %709 = vmatpush1.bf16.msra.mxu0 0
      %710 = vmatprep.subr.bf16.mxu0 0
      %711 = vmatpush1.bf16.msra.mxu0 0
      %712 = vmatprep.subr.bf16.mxu0 0
      %713 = vmatpush1.bf16.msra.mxu0 0
      %714 = vmatprep.subr.bf16.mxu0 0
      %715 = vmatpush1.bf16.msra.mxu0 0
      %716 = vmatprep.subr.bf16.mxu0 0
      %717 = vmatpush1.bf16.msra.mxu0 0
      %718 = vmatprep.subr.bf16.mxu0 0
      %719 = vmatpush1.bf16.msra.mxu0 0
      %720 = vmatprep.subr.bf16.mxu0 0
      %721 = vmatpush1.bf16.msra.mxu0 0
      %722 = vmatprep.subr.bf16.mxu0 0
      %723 = vmatpush1.bf16.msra.mxu0 0
      %724 = vmatprep.subr.bf16.mxu0 0
      %725 = vmatpush1.bf16.msra.mxu0 0
      %726 = vmatprep.subr.bf16.mxu0 0
      %727 = vmatpush1.bf16.msra.mxu0 0
      %728 = vmatprep.subr.bf16.mxu0 0
      %729 = vmatpush1.bf16.msra.mxu0 0
      %730 = vmatprep.mubr.bf16.mxu0 0
      %731 = vmatmul.mubr.bf16.gmra.mrb[0].mxu0 %v692
      %v732 = vpop.f32.mrb[0].mxu0
      %v733 = vadd.f32 0.0, %v732
      %v734 = vpop.f32.mrb[0].mxu0
      %v735 = vpop.f32.mrb[0].mxu0
      %v736 = vadd.f32 0.0, %v735
      %v737 = vpop.f32.mrb[0].mxu0
      %738 = vdwg.mxu0
      %v739 = vld [vmem:[%s4] sm:$0xf]
      %v740 = vld [vmem:[%s4 + $0x4] sm:$0xf]
      %v741 = vld [vmem:[%s4 + $0x8] sm:$0xf]
      %v742 = vld [vmem:[%s4 + $0xc] sm:$0xf]
      %v743 = vpack.c.bf16 %v736, %v733
      %745 = vrot.lane.b32.xlu0 %v611, 96
      %v746 = vpop.permute.xlu0 %745
      %748 = vrot.lane.b32.xlu0 %v612, 96
      %v749 = vpop.permute.xlu0 %748
      %v751 = vsel %vm613, %v746, 0
      %v754 = vsel %vm613, %v749, 0
      %756 = vmatprep.subr.bf16.mxu0 0
      %757 = vmatpush1.bf16.xpose.msra.mxu0 %v754
      %758 = vmatprep.subr.bf16.mxu0 0
      %759 = vmatpush1.bf16.xpose.msra.mxu0 0
      %760 = vmatprep.subr.bf16.mxu0 0
      %761 = vmatpush1.bf16.xpose.msra.mxu0 0
      %762 = vmatprep.subr.bf16.mxu0 0
      %763 = vmatpush1.bf16.xpose.msra.mxu0 0
      %764 = vmatprep.subr.bf16.mxu0 0
      %765 = vmatpush1.bf16.xpose.msra.mxu0 0
      %766 = vmatprep.subr.bf16.mxu0 0
      %767 = vmatpush1.bf16.xpose.msra.mxu0 0
      %768 = vmatprep.subr.bf16.mxu0 0
      %769 = vmatpush1.bf16.xpose.msra.mxu0 0
      %770 = vmatprep.subr.bf16.mxu0 0
      %771 = vmatpush1.bf16.xpose.msra.mxu0 0
      %772 = vmatprep.subr.bf16.mxu0 0
      %773 = vmatpush1.bf16.xpose.msra.mxu0 0
      %774 = vmatprep.subr.bf16.mxu0 0
      %775 = vmatpush1.bf16.xpose.msra.mxu0 0
      %776 = vmatprep.subr.bf16.mxu0 0
      %777 = vmatpush1.bf16.xpose.msra.mxu0 0
      %778 = vmatprep.subr.bf16.mxu0 0
      %779 = vmatpush1.bf16.xpose.msra.mxu0 0
      %780 = vmatprep.subr.bf16.mxu0 0
      %781 = vmatpush1.bf16.xpose.msra.mxu0 0
      %782 = vmatprep.subr.bf16.mxu0 0
      %783 = vmatpush1.bf16.xpose.msra.mxu0 0
      %784 = vmatprep.subr.bf16.mxu0 0
      %785 = vmatpush1.bf16.xpose.msra.mxu0 0
      %786 = vmatprep.subr.bf16.mxu0 0
      %787 = vmatpush1.bf16.xpose.msra.mxu0 0
      %788 = vmatprep.mubr.bf16.mxu0 0
      %789 = vmatmul.mubr.bf16.gmra.mrb[0].mxu0 %v751
      %v790 = vpop.f32.mrb[0].mxu0
      %v791 = vadd.f32 0.0, %v790
      %v792 = vpop.f32.mrb[0].mxu0
      %v793 = vpop.f32.mrb[0].mxu0
      %v794 = vadd.f32 0.0, %v793
      %v795 = vpop.f32.mrb[0].mxu0
      %796 = vdwg.mxu0
      %v797 = vmul.f32 %v791, 0.17677669
      %v798 = vmul.f32 %v794, 0.17677669
      %v799 = vsel %vm609, %v797, -1e+30
      %v800 = vsel %vm610, %v798, -1e+30
      %v801 = vsel %vm665, %v799, -inf
      %802 = vmax.xlane.f32.xlu0 %v801
      %v803 = vpop.xlane.xlu0 %802
      %v804 = vsel %vm669, %v800, -inf
      %805 = vmax.xlane.f32.xlu0 %v804
      %v806 = vpop.xlane.xlu0 %805
      %v807 = vsub.f32 %v799, %v803
      %v808 = vsub.f32 %v800, %v806
      %v809 = vmul.f32 %v807, 1.442695
      %v810 = vpow.pop %v809
      %v811 = vmul.f32 %v808, 1.442695
      %v812 = vpow.pop %v811
      %v813 = vsel %vm665, %v810, 0.0
      %814 = vadd.xlane.f32.xlu0 %v813
      %v815 = vpop.xlane.xlu0 %814
      %v816 = vsel %vm669, %v812, 0.0
      %817 = vadd.xlane.f32.xlu0 %v816
      %v818 = vpop.xlane.xlu0 %817
      %v819 = vrcp.pop %v815
      %v820 = vrcp.pop %v818
      %v821 = vmul.f32 %v810, %v819
      %v822 = vmul.f32 %v812, %v820
      %v823 = vpack.c.bf16 %v822, %v821
      %825 = vrot.lane.b32.xlu0 %v690, 96
      %v826 = vpop.permute.xlu0 %825
      %v828 = vsel %vm665, %v823, 0
      %v831 = vsel %vm694, %v826, 0
      %833 = vmatprep.subr.bf16.mxu0 0
      %834 = vmatpush1.bf16.msra.mxu0 %v831
      %835 = vmatprep.subr.bf16.mxu0 0
      %836 = vmatpush1.bf16.msra.mxu0 0
      %837 = vmatprep.subr.bf16.mxu0 0
      %838 = vmatpush1.bf16.msra.mxu0 0
      %839 = vmatprep.subr.bf16.mxu0 0
      %840 = vmatpush1.bf16.msra.mxu0 0
      %841 = vmatprep.subr.bf16.mxu0 0
      %842 = vmatpush1.bf16.msra.mxu0 0
      %843 = vmatprep.subr.bf16.mxu0 0
      %844 = vmatpush1.bf16.msra.mxu0 0
      %845 = vmatprep.subr.bf16.mxu0 0
      %846 = vmatpush1.bf16.msra.mxu0 0
      %847 = vmatprep.subr.bf16.mxu0 0
      %848 = vmatpush1.bf16.msra.mxu0 0
      %849 = vmatprep.subr.bf16.mxu0 0
      %850 = vmatpush1.bf16.msra.mxu0 0
      %851 = vmatprep.subr.bf16.mxu0 0
      %852 = vmatpush1.bf16.msra.mxu0 0
      %853 = vmatprep.subr.bf16.mxu0 0
      %854 = vmatpush1.bf16.msra.mxu0 0
      %855 = vmatprep.subr.bf16.mxu0 0
      %856 = vmatpush1.bf16.msra.mxu0 0
      %857 = vmatprep.subr.bf16.mxu0 0
      %858 = vmatpush1.bf16.msra.mxu0 0
      %859 = vmatprep.subr.bf16.mxu0 0
      %860 = vmatpush1.bf16.msra.mxu0 0
      %861 = vmatprep.subr.bf16.mxu0 0
      %862 = vmatpush1.bf16.msra.mxu0 0
      %863 = vmatprep.subr.bf16.mxu0 0
      %864 = vmatpush1.bf16.msra.mxu0 0
      %865 = vmatprep.mubr.bf16.mxu0 0
      %866 = vmatmul.mubr.bf16.gmra.mrb[0].mxu0 %v828
      %v867 = vpop.f32.mrb[0].mxu0
      %v868 = vadd.f32 0.0, %v867
      %v869 = vpop.f32.mrb[0].mxu0
      %v870 = vpop.f32.mrb[0].mxu0
      %v871 = vadd.f32 0.0, %v870
      %v872 = vpop.f32.mrb[0].mxu0
      %873 = vdwg.mxu0
      %v874 = vld [vmem:[%s4 + $0x10] sm:$0xf]
      %v875 = vld [vmem:[%s4 + $0x14] sm:$0xf]
      %v876 = vld [vmem:[%s4 + $0x18] sm:$0xf]
      %v877 = vld [vmem:[%s4 + $0x1c] sm:$0xf]
      %v878 = vpack.c.bf16 %v871, %v868
      %v883 = vunpack.c.l.b16 %v874
      %v884 = vunpack.c.l.b16 %v875
      %v885 = vunpack.c.l.b16 %v876
      %v886 = vunpack.c.l.b16 %v877
      %v887 = vpack.c.b16 %v884, %v883
      %v888 = vpack.c.b16 %v886, %v885
      %v892 = vsel %vm613, %v878, 0
      %894 = vmatprep.subr.bf16.mxu0 0
      %895 = vmatpush1.bf16.msra.mxu0 %v887
      %896 = vmatprep.subr.bf16.mxu0 0
      %897 = vmatpush1.bf16.msra.mxu0 %v888
      %898 = vmatprep.subr.bf16.mxu0 0
      %899 = vmatpush1.bf16.msra.mxu0 0
      %900 = vmatprep.subr.bf16.mxu0 0
      %901 = vmatpush1.bf16.msra.mxu0 0
      %902 = vmatprep.subr.bf16.mxu0 0
      %903 = vmatpush1.bf16.msra.mxu0 0
      %904 = vmatprep.subr.bf16.mxu0 0
      %905 = vmatpush1.bf16.msra.mxu0 0
      %906 = vmatprep.subr.bf16.mxu0 0
      %907 = vmatpush1.bf16.msra.mxu0 0
      %908 = vmatprep.subr.bf16.mxu0 0
      %909 = vmatpush1.bf16.msra.mxu0 0
      %910 = vmatprep.subr.bf16.mxu0 0
      %911 = vmatpush1.bf16.msra.mxu0 0
      %912 = vmatprep.subr.bf16.mxu0 0
      %913 = vmatpush1.bf16.msra.mxu0 0
      %914 = vmatprep.subr.bf16.mxu0 0
      %915 = vmatpush1.bf16.msra.mxu0 0
      %916 = vmatprep.subr.bf16.mxu0 0
      %917 = vmatpush1.bf16.msra.mxu0 0
      %918 = vmatprep.subr.bf16.mxu0 0
      %919 = vmatpush1.bf16.msra.mxu0 0
      %920 = vmatprep.subr.bf16.mxu0 0
      %921 = vmatpush1.bf16.msra.mxu0 0
      %922 = vmatprep.subr.bf16.mxu0 0
      %923 = vmatpush1.bf16.msra.mxu0 0
      %924 = vmatprep.subr.bf16.mxu0 0
      %925 = vmatpush1.bf16.msra.mxu0 0
      %926 = vmatprep.mubr.bf16.mxu0 0
      %927 = vmatmul.mubr.bf16.gmra.mrb[0].mxu0 %v892
      %v928 = vpop.f32.mrb[0].mxu0
      %v929 = vadd.f32 0.0, %v928
      %v930 = vpop.f32.mrb[0].mxu0
      %v931 = vpop.f32.mrb[0].mxu0
      %v932 = vadd.f32 0.0, %v931
      %v933 = vpop.f32.mrb[0].mxu0
      %934 = vdwg.mxu0
      %v939 = vunpack.c.l.b16 %v739
      %v940 = vunpack.c.l.b16 %v740
      %v941 = vunpack.c.l.b16 %v741
      %v942 = vunpack.c.l.b16 %v742
      %v943 = vpack.c.b16 %v940, %v939
      %v944 = vpack.c.b16 %v942, %v941
      %v948 = vsel %vm613, %v743, 0
      %950 = vmatprep.subr.bf16.mxu0 0
      %951 = vmatpush1.bf16.msra.mxu0 %v943
      %952 = vmatprep.subr.bf16.mxu0 0
      %953 = vmatpush1.bf16.msra.mxu0 %v944
      %954 = vmatprep.subr.bf16.mxu0 0
      %955 = vmatpush1.bf16.msra.mxu0 0
      %956 = vmatprep.subr.bf16.mxu0 0
      %957 = vmatpush1.bf16.msra.mxu0 0
      %958 = vmatprep.subr.bf16.mxu0 0
      %959 = vmatpush1.bf16.msra.mxu0 0
      %960 = vmatprep.subr.bf16.mxu0 0
      %961 = vmatpush1.bf16.msra.mxu0 0
      %962 = vmatprep.subr.bf16.mxu0 0
      %963 = vmatpush1.bf16.msra.mxu0 0
      %964 = vmatprep.subr.bf16.mxu0 0
      %965 = vmatpush1.bf16.msra.mxu0 0
      %966 = vmatprep.subr.bf16.mxu0 0
      %967 = vmatpush1.bf16.msra.mxu0 0
      %968 = vmatprep.subr.bf16.mxu0 0
      %969 = vmatpush1.bf16.msra.mxu0 0
      %970 = vmatprep.subr.bf16.mxu0 0
      %971 = vmatpush1.bf16.msra.mxu0 0
      %972 = vmatprep.subr.bf16.mxu0 0
      %973 = vmatpush1.bf16.msra.mxu0 0
      %974 = vmatprep.subr.bf16.mxu0 0
      %975 = vmatpush1.bf16.msra.mxu0 0
      %976 = vmatprep.subr.bf16.mxu0 0
      %977 = vmatpush1.bf16.msra.mxu0 0
      %978 = vmatprep.subr.bf16.mxu0 0
      %979 = vmatpush1.bf16.msra.mxu0 0
      %980 = vmatprep.subr.bf16.mxu0 0
      %981 = vmatpush1.bf16.msra.mxu0 0
      %982 = vmatprep.mubr.bf16.mxu0 0
      %983 = vmatmul.mubr.bf16.gmra.mrb[0].mxu0 %v948
      %v984 = vpop.f32.mrb[0].mxu0
      %v985 = vadd.f32 %v929, %v984
      %v986 = vpop.f32.mrb[0].mxu0
      %v987 = vpop.f32.mrb[0].mxu0
      %v988 = vadd.f32 %v932, %v987
      %v989 = vpop.f32.mrb[0].mxu0
      %990 = vdwg.mxu0
      %991 = vrot.lane.b32.xlu0 %v611, 64
      %v992 = vpop.permute.xlu0 %991
      %993 = vrot.lane.b32.xlu0 %v612, 64
      %v994 = vpop.permute.xlu0 %993
      %v996 = vsel %vm613, %v992, 0
      %v999 = vsel %vm613, %v994, 0
      %1001 = vmatprep.subr.bf16.mxu0 0
      %1002 = vmatpush1.bf16.xpose.msra.mxu0 %v999
      %1003 = vmatprep.subr.bf16.mxu0 0
      %1004 = vmatpush1.bf16.xpose.msra.mxu0 0
      %1005 = vmatprep.subr.bf16.mxu0 0
      %1006 = vmatpush1.bf16.xpose.msra.mxu0 0
      %1007 = vmatprep.subr.bf16.mxu0 0
      %1008 = vmatpush1.bf16.xpose.msra.mxu0 0
      %1009 = vmatprep.subr.bf16.mxu0 0
      %1010 = vmatpush1.bf16.xpose.msra.mxu0 0
      %1011 = vmatprep.subr.bf16.mxu0 0
      %1012 = vmatpush1.bf16.xpose.msra.mxu0 0
      %1013 = vmatprep.subr.bf16.mxu0 0
      %1014 = vmatpush1.bf16.xpose.msra.mxu0 0
      %1015 = vmatprep.subr.bf16.mxu0 0
      %1016 = vmatpush1.bf16.xpose.msra.mxu0 0
      %1017 = vmatprep.subr.bf16.mxu0 0
      %1018 = vmatpush1.bf16.xpose.msra.mxu0 0
      %1019 = vmatprep.subr.bf16.mxu0 0
      %1020 = vmatpush1.bf16.xpose.msra.mxu0 0
      %1021 = vmatprep.subr.bf16.mxu0 0
      %1022 = vmatpush1.bf16.xpose.msra.mxu0 0
      %1023 = vmatprep.subr.bf16.mxu0 0
      %1024 = vmatpush1.bf16.xpose.msra.mxu0 0
      %1025 = vmatprep.subr.bf16.mxu0 0
      %1026 = vmatpush1.bf16.xpose.msra.mxu0 0
      %1027 = vmatprep.subr.bf16.mxu0 0
      %1028 = vmatpush1.bf16.xpose.msra.mxu0 0
      %1029 = vmatprep.subr.bf16.mxu0 0
      %1030 = vmatpush1.bf16.xpose.msra.mxu0 0
      %1031 = vmatprep.subr.bf16.mxu0 0
      %1032 = vmatpush1.bf16.xpose.msra.mxu0 0
      %1033 = vmatprep.mubr.bf16.mxu0 0
      %1034 = vmatmul.mubr.bf16.gmra.mrb[0].mxu0 %v996
      %v1035 = vpop.f32.mrb[0].mxu0
      %v1036 = vadd.f32 0.0, %v1035
      %v1037 = vpop.f32.mrb[0].mxu0
      %v1038 = vpop.f32.mrb[0].mxu0
      %v1039 = vadd.f32 0.0, %v1038
      %v1040 = vpop.f32.mrb[0].mxu0
      %1041 = vdwg.mxu0
      %v1042 = vmul.f32 %v1036, 0.17677669
      %v1043 = vmul.f32 %v1039, 0.17677669
      %v1044 = vsel %vm609, %v1042, -1e+30
      %v1045 = vsel %vm610, %v1043, -1e+30
      %v1046 = vsel %vm665, %v1044, -inf
      %1047 = vmax.xlane.f32.xlu0 %v1046
      %v1048 = vpop.xlane.xlu0 %1047
      %v1049 = vsel %vm669, %v1045, -inf
      %1050 = vmax.xlane.f32.xlu0 %v1049
      %v1051 = vpop.xlane.xlu0 %1050
      %v1052 = vsub.f32 %v1044, %v1048
      %v1053 = vsub.f32 %v1045, %v1051
      %v1054 = vmul.f32 %v1052, 1.442695
      %v1055 = vpow.pop %v1054
      %v1056 = vmul.f32 %v1053, 1.442695
      %v1057 = vpow.pop %v1056
      %v1058 = vsel %vm665, %v1055, 0.0
      %1059 = vadd.xlane.f32.xlu0 %v1058
      %v1060 = vpop.xlane.xlu0 %1059
      %v1061 = vsel %vm669, %v1057, 0.0
      %1062 = vadd.xlane.f32.xlu0 %v1061
      %v1063 = vpop.xlane.xlu0 %1062
      %v1064 = vrcp.pop %v1060
      %v1065 = vrcp.pop %v1063
      %v1066 = vmul.f32 %v1055, %v1064
      %v1067 = vmul.f32 %v1057, %v1065
      %v1068 = vpack.c.bf16 %v1067, %v1066
      %1069 = vrot.lane.b32.xlu0 %v690, 64
      %v1070 = vpop.permute.xlu0 %1069
      %v1072 = vsel %vm665, %v1068, 0
      %v1075 = vsel %vm694, %v1070, 0
      %1077 = vmatprep.subr.bf16.mxu0 0
      %1078 = vmatpush1.bf16.msra.mxu0 %v1075
      %1079 = vmatprep.subr.bf16.mxu0 0
      %1080 = vmatpush1.bf16.msra.mxu0 0
      %1081 = vmatprep.subr.bf16.mxu0 0
      %1082 = vmatpush1.bf16.msra.mxu0 0
      %1083 = vmatprep.subr.bf16.mxu0 0
      %1084 = vmatpush1.bf16.msra.mxu0 0
      %1085 = vmatprep.subr.bf16.mxu0 0
      %1086 = vmatpush1.bf16.msra.mxu0 0
      %1087 = vmatprep.subr.bf16.mxu0 0
      %1088 = vmatpush1.bf16.msra.mxu0 0
      %1089 = vmatprep.subr.bf16.mxu0 0
      %1090 = vmatpush1.bf16.msra.mxu0 0
      %1091 = vmatprep.subr.bf16.mxu0 0
      %1092 = vmatpush1.bf16.msra.mxu0 0
      %1093 = vmatprep.subr.bf16.mxu0 0
      %1094 = vmatpush1.bf16.msra.mxu0 0
      %1095 = vmatprep.subr.bf16.mxu0 0
      %1096 = vmatpush1.bf16.msra.mxu0 0
      %1097 = vmatprep.subr.bf16.mxu0 0
      %1098 = vmatpush1.bf16.msra.mxu0 0
      %1099 = vmatprep.subr.bf16.mxu0 0
      %1100 = vmatpush1.bf16.msra.mxu0 0
      %1101 = vmatprep.subr.bf16.mxu0 0
      %1102 = vmatpush1.bf16.msra.mxu0 0
      %1103 = vmatprep.subr.bf16.mxu0 0
      %1104 = vmatpush1.bf16.msra.mxu0 0
      %1105 = vmatprep.subr.bf16.mxu0 0
      %1106 = vmatpush1.bf16.msra.mxu0 0
      %1107 = vmatprep.subr.bf16.mxu0 0
      %1108 = vmatpush1.bf16.msra.mxu0 0
      %1109 = vmatprep.mubr.bf16.mxu0 0
      %1110 = vmatmul.mubr.bf16.gmra.mrb[0].mxu0 %v1072
      %v1111 = vpop.f32.mrb[0].mxu0
      %v1112 = vadd.f32 0.0, %v1111
      %v1113 = vpop.f32.mrb[0].mxu0
      %v1114 = vpop.f32.mrb[0].mxu0
      %v1115 = vadd.f32 0.0, %v1114
      %v1116 = vpop.f32.mrb[0].mxu0
      %1117 = vdwg.mxu0
      %v1118 = vld [vmem:[%s4 + $0x20] sm:$0xf]
      %v1119 = vld [vmem:[%s4 + $0x24] sm:$0xf]
      %v1120 = vld [vmem:[%s4 + $0x28] sm:$0xf]
      %v1121 = vld [vmem:[%s4 + $0x2c] sm:$0xf]
      %v1122 = vpack.c.bf16 %v1115, %v1112
      %v1127 = vunpack.c.l.b16 %v1118
      %v1128 = vunpack.c.l.b16 %v1119
      %v1129 = vunpack.c.l.b16 %v1120
      %v1130 = vunpack.c.l.b16 %v1121
      %v1131 = vpack.c.b16 %v1128, %v1127
      %v1132 = vpack.c.b16 %v1130, %v1129
      %v1136 = vsel %vm613, %v1122, 0
      %1138 = vmatprep.subr.bf16.mxu0 0
      %1139 = vmatpush1.bf16.msra.mxu0 %v1131
      %1140 = vmatprep.subr.bf16.mxu0 0
      %1141 = vmatpush1.bf16.msra.mxu0 %v1132
      %1142 = vmatprep.subr.bf16.mxu0 0
      %1143 = vmatpush1.bf16.msra.mxu0 0
      %1144 = vmatprep.subr.bf16.mxu0 0
      %1145 = vmatpush1.bf16.msra.mxu0 0
      %1146 = vmatprep.subr.bf16.mxu0 0
      %1147 = vmatpush1.bf16.msra.mxu0 0
      %1148 = vmatprep.subr.bf16.mxu0 0
      %1149 = vmatpush1.bf16.msra.mxu0 0
      %1150 = vmatprep.subr.bf16.mxu0 0
      %1151 = vmatpush1.bf16.msra.mxu0 0
      %1152 = vmatprep.subr.bf16.mxu0 0
      %1153 = vmatpush1.bf16.msra.mxu0 0
      %1154 = vmatprep.subr.bf16.mxu0 0
      %1155 = vmatpush1.bf16.msra.mxu0 0
      %1156 = vmatprep.subr.bf16.mxu0 0
      %1157 = vmatpush1.bf16.msra.mxu0 0
      %1158 = vmatprep.subr.bf16.mxu0 0
      %1159 = vmatpush1.bf16.msra.mxu0 0
      %1160 = vmatprep.subr.bf16.mxu0 0
      %1161 = vmatpush1.bf16.msra.mxu0 0
      %1162 = vmatprep.subr.bf16.mxu0 0
      %1163 = vmatpush1.bf16.msra.mxu0 0
      %1164 = vmatprep.subr.bf16.mxu0 0
      %1165 = vmatpush1.bf16.msra.mxu0 0
      %1166 = vmatprep.subr.bf16.mxu0 0
      %1167 = vmatpush1.bf16.msra.mxu0 0
      %1168 = vmatprep.subr.bf16.mxu0 0
      %1169 = vmatpush1.bf16.msra.mxu0 0
      %1170 = vmatprep.mubr.bf16.mxu0 0
      %1171 = vmatmul.mubr.bf16.gmra.mrb[0].mxu0 %v1136
      %v1172 = vpop.f32.mrb[0].mxu0
      %v1173 = vadd.f32 0.0, %v1172
      %v1174 = vpop.f32.mrb[0].mxu0
      %v1175 = vpop.f32.mrb[0].mxu0
      %v1176 = vadd.f32 0.0, %v1175
      %v1177 = vpop.f32.mrb[0].mxu0
      %1178 = vdwg.mxu0
      %v1179 = vadd.f32 %v985, %v1173
      %v1180 = vadd.f32 %v988, %v1176
      %1181 = vrot.lane.b32.xlu0 %v611, 32
      %v1182 = vpop.permute.xlu0 %1181
      %1183 = vrot.lane.b32.xlu0 %v612, 32
      %v1184 = vpop.permute.xlu0 %1183
      %v1186 = vsel %vm613, %v1182, 0
      %v1189 = vsel %vm613, %v1184, 0
      %1191 = vmatprep.subr.bf16.mxu0 0
      %1192 = vmatpush1.bf16.xpose.msra.mxu0 %v1189
      %1193 = vmatprep.subr.bf16.mxu0 0
      %1194 = vmatpush1.bf16.xpose.msra.mxu0 0
      %1195 = vmatprep.subr.bf16.mxu0 0
      %1196 = vmatpush1.bf16.xpose.msra.mxu0 0
      %1197 = vmatprep.subr.bf16.mxu0 0
      %1198 = vmatpush1.bf16.xpose.msra.mxu0 0
      %1199 = vmatprep.subr.bf16.mxu0 0
      %1200 = vmatpush1.bf16.xpose.msra.mxu0 0
      %1201 = vmatprep.subr.bf16.mxu0 0
      %1202 = vmatpush1.bf16.xpose.msra.mxu0 0
      %1203 = vmatprep.subr.bf16.mxu0 0
      %1204 = vmatpush1.bf16.xpose.msra.mxu0 0
      %1205 = vmatprep.subr.bf16.mxu0 0
      %1206 = vmatpush1.bf16.xpose.msra.mxu0 0
      %1207 = vmatprep.subr.bf16.mxu0 0
      %1208 = vmatpush1.bf16.xpose.msra.mxu0 0
      %1209 = vmatprep.subr.bf16.mxu0 0
      %1210 = vmatpush1.bf16.xpose.msra.mxu0 0
      %1211 = vmatprep.subr.bf16.mxu0 0
      %1212 = vmatpush1.bf16.xpose.msra.mxu0 0
      %1213 = vmatprep.subr.bf16.mxu0 0
      %1214 = vmatpush1.bf16.xpose.msra.mxu0 0
      %1215 = vmatprep.subr.bf16.mxu0 0
      %1216 = vmatpush1.bf16.xpose.msra.mxu0 0
      %1217 = vmatprep.subr.bf16.mxu0 0
      %1218 = vmatpush1.bf16.xpose.msra.mxu0 0
      %1219 = vmatprep.subr.bf16.mxu0 0
      %1220 = vmatpush1.bf16.xpose.msra.mxu0 0
      %1221 = vmatprep.subr.bf16.mxu0 0
      %1222 = vmatpush1.bf16.xpose.msra.mxu0 0
      %1223 = vmatprep.mubr.bf16.mxu0 0
      %1224 = vmatmul.mubr.bf16.gmra.mrb[0].mxu0 %v1186
      %v1225 = vpop.f32.mrb[0].mxu0
      %v1226 = vadd.f32 0.0, %v1225
      %v1227 = vpop.f32.mrb[0].mxu0
      %v1228 = vpop.f32.mrb[0].mxu0
      %v1229 = vadd.f32 0.0, %v1228
      %v1230 = vpop.f32.mrb[0].mxu0
      %1231 = vdwg.mxu0
      %v1232 = vmul.f32 %v1226, 0.17677669
      %v1233 = vmul.f32 %v1229, 0.17677669
      %v1234 = vsel %vm609, %v1232, -1e+30
      %v1235 = vsel %vm610, %v1233, -1e+30
      %v1236 = vsel %vm665, %v1234, -inf
      %1237 = vmax.xlane.f32.xlu0 %v1236
      %v1238 = vpop.xlane.xlu0 %1237
      %v1239 = vsel %vm669, %v1235, -inf
      %1240 = vmax.xlane.f32.xlu0 %v1239
      %v1241 = vpop.xlane.xlu0 %1240
      %v1242 = vsub.f32 %v1234, %v1238
      %v1243 = vsub.f32 %v1235, %v1241
      %v1244 = vmul.f32 %v1242, 1.442695
      %v1245 = vpow.pop %v1244
      %v1246 = vmul.f32 %v1243, 1.442695
      %v1247 = vpow.pop %v1246
      %v1248 = vsel %vm665, %v1245, 0.0
      %1249 = vadd.xlane.f32.xlu0 %v1248
      %v1250 = vpop.xlane.xlu0 %1249
      %v1251 = vsel %vm669, %v1247, 0.0
      %1252 = vadd.xlane.f32.xlu0 %v1251
      %v1253 = vpop.xlane.xlu0 %1252
      %v1254 = vrcp.pop %v1250
      %v1255 = vrcp.pop %v1253
      %v1256 = vmul.f32 %v1245, %v1254
      %v1257 = vmul.f32 %v1247, %v1255
      %v1258 = vpack.c.bf16 %v1257, %v1256
      %1259 = vrot.lane.b32.xlu0 %v690, 32
      %v1260 = vpop.permute.xlu0 %1259
      %v1262 = vsel %vm665, %v1258, 0
      %v1265 = vsel %vm694, %v1260, 0
      %1267 = vmatprep.subr.bf16.mxu0 0
      %1268 = vmatpush1.bf16.msra.mxu0 %v1265
      %1269 = vmatprep.subr.bf16.mxu0 0
      %1270 = vmatpush1.bf16.msra.mxu0 0
      %1271 = vmatprep.subr.bf16.mxu0 0
      %1272 = vmatpush1.bf16.msra.mxu0 0
      %1273 = vmatprep.subr.bf16.mxu0 0
      %1274 = vmatpush1.bf16.msra.mxu0 0
      %1275 = vmatprep.subr.bf16.mxu0 0
      %1276 = vmatpush1.bf16.msra.mxu0 0
      %1277 = vmatprep.subr.bf16.mxu0 0
      %1278 = vmatpush1.bf16.msra.mxu0 0
      %1279 = vmatprep.subr.bf16.mxu0 0
      %1280 = vmatpush1.bf16.msra.mxu0 0
      %1281 = vmatprep.subr.bf16.mxu0 0
      %1282 = vmatpush1.bf16.msra.mxu0 0
      %1283 = vmatprep.subr.bf16.mxu0 0
      %1284 = vmatpush1.bf16.msra.mxu0 0
      %1285 = vmatprep.subr.bf16.mxu0 0
      %1286 = vmatpush1.bf16.msra.mxu0 0
      %1287 = vmatprep.subr.bf16.mxu0 0
      %1288 = vmatpush1.bf16.msra.mxu0 0
      %1289 = vmatprep.subr.bf16.mxu0 0
      %1290 = vmatpush1.bf16.msra.mxu0 0
      %1291 = vmatprep.subr.bf16.mxu0 0
      %1292 = vmatpush1.bf16.msra.mxu0 0
      %1293 = vmatprep.subr.bf16.mxu0 0
      %1294 = vmatpush1.bf16.msra.mxu0 0
      %1295 = vmatprep.subr.bf16.mxu0 0
      %1296 = vmatpush1.bf16.msra.mxu0 0
      %1297 = vmatprep.subr.bf16.mxu0 0
      %1298 = vmatpush1.bf16.msra.mxu0 0
      %1299 = vmatprep.mubr.bf16.mxu0 0
      %1300 = vmatmul.mubr.bf16.gmra.mrb[0].mxu0 %v1262
      %v1301 = vpop.f32.mrb[0].mxu0
      %v1302 = vadd.f32 0.0, %v1301
      %v1303 = vpop.f32.mrb[0].mxu0
      %v1304 = vpop.f32.mrb[0].mxu0
      %v1305 = vadd.f32 0.0, %v1304
      %v1306 = vpop.f32.mrb[0].mxu0
      %1307 = vdwg.mxu0
      %v1308 = vld [vmem:[%s4 + $0x30] sm:$0xf]
      %v1309 = vld [vmem:[%s4 + $0x34] sm:$0xf]
      %v1310 = vld [vmem:[%s4 + $0x38] sm:$0xf]
      %v1311 = vld [vmem:[%s4 + $0x3c] sm:$0xf]
      %v1312 = vpack.c.bf16 %v1305, %v1302
      %v1317 = vunpack.c.l.b16 %v1308
      %v1318 = vunpack.c.l.b16 %v1309
      %v1319 = vunpack.c.l.b16 %v1310
      %v1320 = vunpack.c.l.b16 %v1311
      %v1321 = vpack.c.b16 %v1318, %v1317
      %v1322 = vpack.c.b16 %v1320, %v1319
      %v1326 = vsel %vm613, %v1312, 0
      %1328 = vmatprep.subr.bf16.mxu0 0
      %1329 = vmatpush1.bf16.msra.mxu0 %v1321
      %1330 = vmatprep.subr.bf16.mxu0 0
      %1331 = vmatpush1.bf16.msra.mxu0 %v1322
      %1332 = vmatprep.subr.bf16.mxu0 0
      %1333 = vmatpush1.bf16.msra.mxu0 0
      %1334 = vmatprep.subr.bf16.mxu0 0
      %1335 = vmatpush1.bf16.msra.mxu0 0
      %1336 = vmatprep.subr.bf16.mxu0 0
      %1337 = vmatpush1.bf16.msra.mxu0 0
      %1338 = vmatprep.subr.bf16.mxu0 0
      %1339 = vmatpush1.bf16.msra.mxu0 0
      %1340 = vmatprep.subr.bf16.mxu0 0
      %1341 = vmatpush1.bf16.msra.mxu0 0
      %1342 = vmatprep.subr.bf16.mxu0 0
      %1343 = vmatpush1.bf16.msra.mxu0 0
      %1344 = vmatprep.subr.bf16.mxu0 0
      %1345 = vmatpush1.bf16.msra.mxu0 0
      %1346 = vmatprep.subr.bf16.mxu0 0
      %1347 = vmatpush1.bf16.msra.mxu0 0
      %1348 = vmatprep.subr.bf16.mxu0 0
      %1349 = vmatpush1.bf16.msra.mxu0 0
      %1350 = vmatprep.subr.bf16.mxu0 0
      %1351 = vmatpush1.bf16.msra.mxu0 0
      %1352 = vmatprep.subr.bf16.mxu0 0
      %1353 = vmatpush1.bf16.msra.mxu0 0
      %1354 = vmatprep.subr.bf16.mxu0 0
      %1355 = vmatpush1.bf16.msra.mxu0 0
      %1356 = vmatprep.subr.bf16.mxu0 0
      %1357 = vmatpush1.bf16.msra.mxu0 0
      %1358 = vmatprep.subr.bf16.mxu0 0
      %1359 = vmatpush1.bf16.msra.mxu0 0
      %1360 = vmatprep.mubr.bf16.mxu0 0
      %1361 = vmatmul.mubr.bf16.gmra.mrb[0].mxu0 %v1326
      %v1362 = vpop.f32.mrb[0].mxu0
      %v1363 = vadd.f32 0.0, %v1362
      %v1364 = vpop.f32.mrb[0].mxu0
      %v1365 = vpop.f32.mrb[0].mxu0
      %v1366 = vadd.f32 0.0, %v1365
      %v1367 = vpop.f32.mrb[0].mxu0
      %1368 = vdwg.mxu0
      %v1369 = vadd.f32 %v1179, %v1363
      %v1370 = vadd.f32 %v1180, %v1366
      %v1371 = vadd.f32 %v321, %v1369
      %v1372 = vadd.f32 %v322, %v1370
      %v1373 = vld [vmem:[%s5] sm:$0x1]
      %v1374 = vmul.f32 %v1371, %v1371
      %v1375 = vmul.f32 %v1372, %v1372
      %1376 = vadd.xlane.f32.xlu0 %v1374
      %v1377 = vpop.xlane.xlu0 %1376
      %v1378 = vsel %vm328, %v1375, 0.0
      %1379 = vadd.xlane.f32.xlu0 %v1378
      %v1380 = vpop.xlane.xlu0 %1379
      %v1381 = vmul.f32 %v1377, %v332
      %v1382 = vmul.f32 %v1380, %v332
      %v1383 = vadd.f32 %v1381, 1e-06
      %v1384 = vadd.f32 %v1382, 1e-06
      %v1385 = vrsqrt.pop %v1383
      %v1386 = vrsqrt.pop %v1384
      %v1387 = vmul.f32 %v1371, %v1385
      %v1388 = vmul.f32 %v1372, %v1386
      %v1390 = vlaneseq
      %v1391 = vshrl.u32 %v1390, 7
      %v1392 = vsub.s32 0, %v1391
      %v1393 = vrot.slane %v1373, %v1392
      %v1395 = vmul.f32 %v1387, %v1393
      %v1396 = vmul.f32 %v1388, %v1393
      %v1397 = vld [vmem:[%s6] sm:$0xff]
      %v1398 = vld [vmem:[%s6 + $0x8] sm:$0xff]
      %v1399 = vld [vmem:[%s6 + $0x10] sm:$0xff]
      %v1400 = vld [vmem:[%s6 + $0x18] sm:$0xff]
      %v1401 = vld [vmem:[%s6 + $0x20] sm:$0xff]
      %v1402 = vld [vmem:[%s6 + $0x28] sm:$0xff]
      %v1403 = vld [vmem:[%s6 + $0x30] sm:$0xff]
      %v1404 = vld [vmem:[%s6 + $0x38] sm:$0xff]
      %v1405 = vld [vmem:[%s6 + $0x40] sm:$0xff]
      %v1406 = vld [vmem:[%s6 + $0x48] sm:$0xff]
      %v1407 = vld [vmem:[%s6 + $0x50] sm:$0xff]
      %v1408 = vld [vmem:[%s6 + $0x58] sm:$0xff]
      %v1409 = vld [vmem:[%s6 + $0x60] sm:$0xff]
      %v1410 = vld [vmem:[%s6 + $0x68] sm:$0xff]
      %v1411 = vld [vmem:[%s6 + $0x70] sm:$0xff]
      %v1412 = vld [vmem:[%s6 + $0x78] sm:$0xff]
      %v1413 = vld [vmem:[%s6 + $0x80] sm:$0xff]
      %v1414 = vld [vmem:[%s6 + $0x88] sm:$0xff]
      %v1415 = vld [vmem:[%s6 + $0x90] sm:$0xff]
      %v1416 = vld [vmem:[%s6 + $0x98] sm:$0xff]
      %v1417 = vld [vmem:[%s6 + $0xa0] sm:$0xff]
      %v1418 = vld [vmem:[%s6 + $0xa8] sm:$0xff]
      %v1419 = vld [vmem:[%s6 + $0xb0] sm:$0xff]
      %v1420 = vld [vmem:[%s6 + $0xb8] sm:$0xff]
      %v1421 = vld [vmem:[%s6 + $0xc0] sm:$0xff]
      %v1422 = vld [vmem:[%s6 + $0xc8] sm:$0xff]
      %v1423 = vld [vmem:[%s6 + $0xd0] sm:$0xff]
      %v1424 = vld [vmem:[%s6 + $0xd8] sm:$0xff]
      %v1425 = vld [vmem:[%s6 + $0xe0] sm:$0xff]
      %v1426 = vld [vmem:[%s6 + $0xe8] sm:$0xff]
      %v1427 = vld [vmem:[%s6 + $0xf0] sm:$0xff]
      %v1428 = vld [vmem:[%s6 + $0xf8] sm:$0xff]
      %v1429 = vpack.c.bf16 %v1396, %v1395
      %v1462 = vunpack.c.l.b16 %v1397
      %v1463 = vunpack.c.h.b16 %v1397
      %v1464 = vunpack.c.l.b16 %v1398
      %v1465 = vunpack.c.h.b16 %v1398
      %v1466 = vunpack.c.l.b16 %v1399
      %v1467 = vunpack.c.h.b16 %v1399
      %v1468 = vunpack.c.l.b16 %v1400
      %v1469 = vunpack.c.h.b16 %v1400
      %v1470 = vunpack.c.l.b16 %v1401
      %v1471 = vunpack.c.h.b16 %v1401
      %v1472 = vunpack.c.l.b16 %v1402
      %v1473 = vunpack.c.h.b16 %v1402
      %v1474 = vunpack.c.l.b16 %v1403
      %v1475 = vunpack.c.h.b16 %v1403
      %v1476 = vunpack.c.l.b16 %v1404
      %v1477 = vunpack.c.h.b16 %v1404
      %v1478 = vunpack.c.l.b16 %v1405
      %v1479 = vunpack.c.h.b16 %v1405
      %v1480 = vunpack.c.l.b16 %v1406
      %v1481 = vunpack.c.h.b16 %v1406
      %v1482 = vunpack.c.l.b16 %v1407
      %v1483 = vunpack.c.h.b16 %v1407
      %v1484 = vunpack.c.l.b16 %v1408
      %v1485 = vunpack.c.h.b16 %v1408
      %v1486 = vunpack.c.l.b16 %v1409
      %v1487 = vunpack.c.h.b16 %v1409
      %v1488 = vunpack.c.l.b16 %v1410
      %v1489 = vunpack.c.h.b16 %v1410
      %v1490 = vunpack.c.l.b16 %v1411
      %v1491 = vunpack.c.h.b16 %v1411
      %v1492 = vunpack.c.l.b16 %v1412
      %v1493 = vunpack.c.h.b16 %v1412
      %v1494 = vunpack.c.l.b16 %v1413
      %v1495 = vunpack.c.h.b16 %v1413
      %v1496 = vunpack.c.l.b16 %v1414
      %v1497 = vunpack.c.h.b16 %v1414
      %v1498 = vunpack.c.l.b16 %v1415
      %v1499 = vunpack.c.h.b16 %v1415
      %v1500 = vunpack.c.l.b16 %v1416
      %v1501 = vunpack.c.h.b16 %v1416
      %v1502 = vunpack.c.l.b16 %v1417
      %v1503 = vunpack.c.h.b16 %v1417
      %v1504 = vunpack.c.l.b16 %v1418
      %v1505 = vunpack.c.h.b16 %v1418
      %v1506 = vunpack.c.l.b16 %v1419
      %v1507 = vunpack.c.h.b16 %v1419
      %v1508 = vunpack.c.l.b16 %v1420
      %v1509 = vunpack.c.h.b16 %v1420
      %v1510 = vunpack.c.l.b16 %v1421
      %v1511 = vunpack.c.h.b16 %v1421
      %v1512 = vunpack.c.l.b16 %v1422
      %v1513 = vunpack.c.h.b16 %v1422
      %v1514 = vunpack.c.l.b16 %v1423
      %v1515 = vunpack.c.h.b16 %v1423
      %v1516 = vunpack.c.l.b16 %v1424
      %v1517 = vunpack.c.h.b16 %v1424
      %v1518 = vunpack.c.l.b16 %v1425
      %v1519 = vunpack.c.h.b16 %v1425
      %v1520 = vunpack.c.l.b16 %v1426
      %v1521 = vunpack.c.h.b16 %v1426
      %v1522 = vunpack.c.l.b16 %v1427
      %v1523 = vunpack.c.h.b16 %v1427
      %v1524 = vunpack.c.l.b16 %v1428
      %v1525 = vunpack.c.h.b16 %v1428
      %v1526 = vpack.c.b16 %v1466, %v1462
      %v1527 = vpack.c.b16 %v1467, %v1463
      %v1528 = vpack.c.b16 %v1468, %v1464
      %v1529 = vpack.c.b16 %v1469, %v1465
      %v1530 = vpack.c.b16 %v1474, %v1470
      %v1531 = vpack.c.b16 %v1475, %v1471
      %v1532 = vpack.c.b16 %v1476, %v1472
      %v1533 = vpack.c.b16 %v1477, %v1473
      %v1534 = vpack.c.b16 %v1482, %v1478
      %v1535 = vpack.c.b16 %v1483, %v1479
      %v1536 = vpack.c.b16 %v1484, %v1480
      %v1537 = vpack.c.b16 %v1485, %v1481
      %v1538 = vpack.c.b16 %v1490, %v1486
      %v1539 = vpack.c.b16 %v1491, %v1487
      %v1540 = vpack.c.b16 %v1492, %v1488
      %v1541 = vpack.c.b16 %v1493, %v1489
      %v1542 = vpack.c.b16 %v1498, %v1494
      %v1543 = vpack.c.b16 %v1499, %v1495
      %v1544 = vpack.c.b16 %v1500, %v1496
      %v1545 = vpack.c.b16 %v1501, %v1497
      %v1546 = vpack.c.b16 %v1506, %v1502
      %v1547 = vpack.c.b16 %v1507, %v1503
      %v1548 = vpack.c.b16 %v1508, %v1504
      %v1549 = vpack.c.b16 %v1509, %v1505
      %v1550 = vpack.c.b16 %v1514, %v1510
      %v1551 = vpack.c.b16 %v1515, %v1511
      %v1552 = vpack.c.b16 %v1516, %v1512
      %v1553 = vpack.c.b16 %v1517, %v1513
      %v1554 = vpack.c.b16 %v1522, %v1518
      %v1555 = vpack.c.b16 %v1523, %v1519
      %v1556 = vpack.c.b16 %v1524, %v1520
      %v1557 = vpack.c.b16 %v1525, %v1521
      %1590 = vmatprep.subr.bf16.mxu0 %v1527
      %1591 = vmatpush1.bf16.msra.mxu0 %v1526
      %1592 = vmatprep.subr.bf16.mxu0 %v1531
      %1593 = vmatpush1.bf16.msra.mxu0 %v1530
      %1594 = vmatprep.subr.bf16.mxu0 %v1535
      %1595 = vmatpush1.bf16.msra.mxu0 %v1534
      %1596 = vmatprep.subr.bf16.mxu0 %v1539
      %1597 = vmatpush1.bf16.msra.mxu0 %v1538
      %1598 = vmatprep.subr.bf16.mxu0 %v1543
      %1599 = vmatpush1.bf16.msra.mxu0 %v1542
      %1600 = vmatprep.subr.bf16.mxu0 %v1547
      %1601 = vmatpush1.bf16.msra.mxu0 %v1546
      %1602 = vmatprep.subr.bf16.mxu0 %v1551
      %1603 = vmatpush1.bf16.msra.mxu0 %v1550
      %1604 = vmatprep.subr.bf16.mxu0 %v1555
      %1605 = vmatpush1.bf16.msra.mxu0 %v1554
      %1606 = vmatprep.subr.bf16.mxu0 0
      %1607 = vmatpush1.bf16.msra.mxu0 0
      %1608 = vmatprep.subr.bf16.mxu0 0
      %1609 = vmatpush1.bf16.msra.mxu0 0
      %1610 = vmatprep.subr.bf16.mxu0 0
      %1611 = vmatpush1.bf16.msra.mxu0 0
      %1612 = vmatprep.subr.bf16.mxu0 0
      %1613 = vmatpush1.bf16.msra.mxu0 0
      %1614 = vmatprep.subr.bf16.mxu0 0
      %1615 = vmatpush1.bf16.msra.mxu0 0
      %1616 = vmatprep.subr.bf16.mxu0 0
      %1617 = vmatpush1.bf16.msra.mxu0 0
      %1618 = vmatprep.subr.bf16.mxu0 0
      %1619 = vmatpush1.bf16.msra.mxu0 0
      %1620 = vmatprep.subr.bf16.mxu0 0
      %1621 = vmatpush1.bf16.msra.mxu0 0
      %1622 = vmatprep.mubr.bf16.mxu0 0
      %1623 = vmatmul.mubr.bf16.gmra.mrb[0].mxu0 %v1429
      %v1624 = vpop.f32.mrb[0].mxu0
      %v1625 = vadd.f32 0.0, %v1624
      %v1626 = vpop.f32.mrb[0].mxu0
      %v1627 = vadd.f32 0.0, %v1626
      %v1628 = vpop.f32.mrb[0].mxu0
      %v1629 = vadd.f32 0.0, %v1628
      %v1630 = vpop.f32.mrb[0].mxu0
      %v1631 = vadd.f32 0.0, %v1630
      %1632 = vdwg.mxu0
      %1633 = vmatprep.subr.bf16.mxu0 %v1529
      %1634 = vmatpush1.bf16.msra.mxu0 %v1528
      %1635 = vmatprep.subr.bf16.mxu0 %v1533
      %1636 = vmatpush1.bf16.msra.mxu0 %v1532
      %1637 = vmatprep.subr.bf16.mxu0 %v1537
      %1638 = vmatpush1.bf16.msra.mxu0 %v1536
      %1639 = vmatprep.subr.bf16.mxu0 %v1541
      %1640 = vmatpush1.bf16.msra.mxu0 %v1540
      %1641 = vmatprep.subr.bf16.mxu0 %v1545
      %1642 = vmatpush1.bf16.msra.mxu0 %v1544
      %1643 = vmatprep.subr.bf16.mxu0 %v1549
      %1644 = vmatpush1.bf16.msra.mxu0 %v1548
      %1645 = vmatprep.subr.bf16.mxu0 %v1553
      %1646 = vmatpush1.bf16.msra.mxu0 %v1552
      %1647 = vmatprep.subr.bf16.mxu0 %v1557
      %1648 = vmatpush1.bf16.msra.mxu0 %v1556
      %1649 = vmatprep.subr.bf16.mxu0 0
      %1650 = vmatpush1.bf16.msra.mxu0 0
      %1651 = vmatprep.subr.bf16.mxu0 0
      %1652 = vmatpush1.bf16.msra.mxu0 0
      %1653 = vmatprep.subr.bf16.mxu0 0
      %1654 = vmatpush1.bf16.msra.mxu0 0
      %1655 = vmatprep.subr.bf16.mxu0 0
      %1656 = vmatpush1.bf16.msra.mxu0 0
      %1657 = vmatprep.subr.bf16.mxu0 0
      %1658 = vmatpush1.bf16.msra.mxu0 0
      %1659 = vmatprep.subr.bf16.mxu0 0
      %1660 = vmatpush1.bf16.msra.mxu0 0
      %1661 = vmatprep.subr.bf16.mxu0 0
      %1662 = vmatpush1.bf16.msra.mxu0 0
      %1663 = vmatprep.subr.bf16.mxu0 0
      %1664 = vmatpush1.bf16.msra.mxu0 0
      %1665 = vmatprep.mubr.bf16.mxu0 0
      %1666 = vmatmul.mubr.bf16.gmra.mrb[0].mxu0 %v1429
      %v1667 = vpop.f32.mrb[0].mxu0
      %v1668 = vadd.f32 0.0, %v1667
      %v1669 = vpop.f32.mrb[0].mxu0
      %v1670 = vadd.f32 0.0, %v1669
      %v1671 = vpop.f32.mrb[0].mxu0
      %v1672 = vadd.f32 0.0, %v1671
      %v1673 = vpop.f32.mrb[0].mxu0
      %v1674 = vadd.f32 0.0, %v1673
      %1675 = vdwg.mxu0
      %v1676 = vxor.u32 %v1625, 2147483648
      %v1677 = vxor.u32 %v1627, 2147483648
      %v1678 = vxor.u32 %v1629, 2147483648
      %v1679 = vxor.u32 %v1631, 2147483648
      %v1680 = vmul.f32 %v1676, 1.442695
      %v1681 = vpow.pop %v1680
      %v1682 = vmul.f32 %v1677, 1.442695
      %v1683 = vpow.pop %v1682
      %v1684 = vmul.f32 %v1678, 1.442695
      %v1685 = vpow.pop %v1684
      %v1686 = vmul.f32 %v1679, 1.442695
      %v1687 = vpow.pop %v1686
      %v1688 = vadd.f32 %v1681, 1.0
      %v1689 = vadd.f32 %v1683, 1.0
      %v1690 = vadd.f32 %v1685, 1.0
      %v1691 = vadd.f32 %v1687, 1.0
      %v1692 = vrcp.pop %v1688
      %v1693 = vmul.f32 1.0, %v1692
      %v1694 = vrcp.pop %v1689
      %v1695 = vmul.f32 1.0, %v1694
      %v1696 = vrcp.pop %v1690
      %v1697 = vmul.f32 1.0, %v1696
      %v1698 = vrcp.pop %v1691
      %v1699 = vmul.f32 1.0, %v1698
      %v1700 = vmul.f32 %v1625, %v1693
      %v1701 = vmul.f32 %v1627, %v1695
      %v1702 = vmul.f32 %v1629, %v1697
      %v1703 = vmul.f32 %v1631, %v1699
      %v1704 = vmul.f32 %v1700, %v1668
      %v1705 = vmul.f32 %v1701, %v1670
      %v1706 = vmul.f32 %v1702, %v1672
      %v1707 = vmul.f32 %v1703, %v1674
      %v1708 = vld [vmem:[%s7] sm:$0xf]
      %v1709 = vld [vmem:[%s7 + $0x4] sm:$0xf]
      %v1710 = vld [vmem:[%s7 + $0x8] sm:$0xf]
      %v1711 = vld [vmem:[%s7 + $0xc] sm:$0xf]
      %v1712 = vld [vmem:[%s7 + $0x10] sm:$0xf]
      %v1713 = vld [vmem:[%s7 + $0x14] sm:$0xf]
      %v1714 = vld [vmem:[%s7 + $0x18] sm:$0xf]
      %v1715 = vld [vmem:[%s7 + $0x1c] sm:$0xf]
      %v1716 = vld [vmem:[%s7 + $0x20] sm:$0xf]
      %v1717 = vld [vmem:[%s7 + $0x24] sm:$0xf]
      %v1718 = vld [vmem:[%s7 + $0x28] sm:$0xf]
      %v1719 = vld [vmem:[%s7 + $0x2c] sm:$0xf]
      %v1720 = vld [vmem:[%s7 + $0x30] sm:$0xf]
      %v1721 = vld [vmem:[%s7 + $0x34] sm:$0xf]
      %v1722 = vld [vmem:[%s7 + $0x38] sm:$0xf]
      %v1723 = vld [vmem:[%s7 + $0x3c] sm:$0xf]
      %v1724 = vld [vmem:[%s7 + $0x40] sm:$0xf]
      %v1725 = vld [vmem:[%s7 + $0x44] sm:$0xf]
      %v1726 = vld [vmem:[%s7 + $0x48] sm:$0xf]
      %v1727 = vld [vmem:[%s7 + $0x4c] sm:$0xf]
      %v1728 = vld [vmem:[%s7 + $0x50] sm:$0xf]
      %v1729 = vld [vmem:[%s7 + $0x54] sm:$0xf]
      %v1730 = vld [vmem:[%s7 + $0x58] sm:$0xf]
      %v1731 = vld [vmem:[%s7 + $0x5c] sm:$0xf]
      %v1732 = vld [vmem:[%s7 + $0x60] sm:$0xf]
      %v1733 = vld [vmem:[%s7 + $0x64] sm:$0xf]
      %v1734 = vld [vmem:[%s7 + $0x68] sm:$0xf]
      %v1735 = vld [vmem:[%s7 + $0x6c] sm:$0xf]
      %v1736 = vld [vmem:[%s7 + $0x70] sm:$0xf]
      %v1737 = vld [vmem:[%s7 + $0x74] sm:$0xf]
      %v1738 = vld [vmem:[%s7 + $0x78] sm:$0xf]
      %v1739 = vld [vmem:[%s7 + $0x7c] sm:$0xf]
      %v1740 = vpack.c.bf16 %v1706, %v1704
      %v1741 = vpack.c.bf16 %v1707, %v1705
      %v1774 = vunpack.c.l.b16 %v1708
      %v1775 = vunpack.c.l.b16 %v1709
      %v1776 = vunpack.c.l.b16 %v1710
      %v1777 = vunpack.c.l.b16 %v1711
      %v1778 = vunpack.c.l.b16 %v1712
      %v1779 = vunpack.c.l.b16 %v1713
      %v1780 = vunpack.c.l.b16 %v1714
      %v1781 = vunpack.c.l.b16 %v1715
      %v1782 = vunpack.c.l.b16 %v1716
      %v1783 = vunpack.c.l.b16 %v1717
      %v1784 = vunpack.c.l.b16 %v1718
      %v1785 = vunpack.c.l.b16 %v1719
      %v1786 = vunpack.c.l.b16 %v1720
      %v1787 = vunpack.c.l.b16 %v1721
      %v1788 = vunpack.c.l.b16 %v1722
      %v1789 = vunpack.c.l.b16 %v1723
      %v1790 = vunpack.c.l.b16 %v1724
      %v1791 = vunpack.c.l.b16 %v1725
      %v1792 = vunpack.c.l.b16 %v1726
      %v1793 = vunpack.c.l.b16 %v1727
      %v1794 = vunpack.c.l.b16 %v1728
      %v1795 = vunpack.c.l.b16 %v1729
      %v1796 = vunpack.c.l.b16 %v1730
      %v1797 = vunpack.c.l.b16 %v1731
      %v1798 = vunpack.c.l.b16 %v1732
      %v1799 = vunpack.c.l.b16 %v1733
      %v1800 = vunpack.c.l.b16 %v1734
      %v1801 = vunpack.c.l.b16 %v1735
      %v1802 = vunpack.c.l.b16 %v1736
      %v1803 = vunpack.c.l.b16 %v1737
      %v1804 = vunpack.c.l.b16 %v1738
      %v1805 = vunpack.c.l.b16 %v1739
      %v1806 = vpack.c.b16 %v1775, %v1774
      %v1807 = vpack.c.b16 %v1777, %v1776
      %v1808 = vpack.c.b16 %v1779, %v1778
      %v1809 = vpack.c.b16 %v1781, %v1780
      %v1810 = vpack.c.b16 %v1783, %v1782
      %v1811 = vpack.c.b16 %v1785, %v1784
      %v1812 = vpack.c.b16 %v1787, %v1786
      %v1813 = vpack.c.b16 %v1789, %v1788
      %v1814 = vpack.c.b16 %v1791, %v1790
      %v1815 = vpack.c.b16 %v1793, %v1792
      %v1816 = vpack.c.b16 %v1795, %v1794
      %v1817 = vpack.c.b16 %v1797, %v1796
      %v1818 = vpack.c.b16 %v1799, %v1798
      %v1819 = vpack.c.b16 %v1801, %v1800
      %v1820 = vpack.c.b16 %v1803, %v1802
      %v1821 = vpack.c.b16 %v1805, %v1804
      %1838 = vmatprep.subr.bf16.mxu0 0
      %1839 = vmatpush1.bf16.msra.mxu0 %v1806
      %1840 = vmatprep.subr.bf16.mxu0 0
      %1841 = vmatpush1.bf16.msra.mxu0 %v1807
      %1842 = vmatprep.subr.bf16.mxu0 0
      %1843 = vmatpush1.bf16.msra.mxu0 %v1808
      %1844 = vmatprep.subr.bf16.mxu0 0
      %1845 = vmatpush1.bf16.msra.mxu0 %v1809
      %1846 = vmatprep.subr.bf16.mxu0 0
      %1847 = vmatpush1.bf16.msra.mxu0 %v1810
      %1848 = vmatprep.subr.bf16.mxu0 0
      %1849 = vmatpush1.bf16.msra.mxu0 %v1811
      %1850 = vmatprep.subr.bf16.mxu0 0
      %1851 = vmatpush1.bf16.msra.mxu0 %v1812
      %1852 = vmatprep.subr.bf16.mxu0 0
      %1853 = vmatpush1.bf16.msra.mxu0 %v1813
      %1854 = vmatprep.subr.bf16.mxu0 0
      %1855 = vmatpush1.bf16.msra.mxu0 %v1814
      %1856 = vmatprep.subr.bf16.mxu0 0
      %1857 = vmatpush1.bf16.msra.mxu0 %v1815
      %1858 = vmatprep.subr.bf16.mxu0 0
      %1859 = vmatpush1.bf16.msra.mxu0 %v1816
      %1860 = vmatprep.subr.bf16.mxu0 0
      %1861 = vmatpush1.bf16.msra.mxu0 %v1817
      %1862 = vmatprep.subr.bf16.mxu0 0
      %1863 = vmatpush1.bf16.msra.mxu0 %v1818
      %1864 = vmatprep.subr.bf16.mxu0 0
      %1865 = vmatpush1.bf16.msra.mxu0 %v1819
      %1866 = vmatprep.subr.bf16.mxu0 0
      %1867 = vmatpush1.bf16.msra.mxu0 %v1820
      %1868 = vmatprep.subr.bf16.mxu0 0
      %1869 = vmatpush1.bf16.msra.mxu0 %v1821
      %1870 = vmatprep.mubr.bf16.mxu0 %v1741
      %1871 = vmatmul.mubr.bf16.gmra.mrb[0].mxu0 %v1740
      %v1872 = vpop.f32.mrb[0].mxu0
      %v1873 = vadd.f32 0.0, %v1872
      %v1874 = vpop.f32.mrb[0].mxu0
      %v1875 = vpop.f32.mrb[0].mxu0
      %v1876 = vadd.f32 0.0, %v1875
      %v1877 = vpop.f32.mrb[0].mxu0
      %1878 = vdwg.mxu0
      %v1879 = vadd.f32 %v1371, %v1873
      %v1880 = vadd.f32 %v1372, %v1876
      %1881 = vst [vmem:[%s319] sm:$0xff] %v1879
      %1882 = vst [vmem:[%s319 + $0x8] sm:$0xf] %v1880
      %p1883 = scmp.lt.s32.totalorder %s19, 1
      %s1884 = scalar_select %p1883, %s19, 1
      %s1885 = smul.addr %s1884, 2
      %s1886 = smul.addr %s1885, 8
      %s1887 = scalar_lea.vmem %s8, %s1886
      // Predicated region
      $region53: #{forward.4} parent=51 // pred_check
        %p1888 = pneg %p215
      $region54: #{forward.4} parent=51 // pred_check_branch
        %1890 = sbr.rel (%p1888) target = $region56
      $region55: #{forward.4} parent=51 // pred_region
        _
      $region56: #{forward.4} parent=51 // pred_fallthru
        _
    $region52: #{forward.4} parent=5 // pred_fallthru
      _
    %p1891 = scmp.le.s32.totalorder 2, %s14
    // Predicated region
    $region57: #{forward.4} parent=5 // pred_check
      %p1892 = pneg %p1891
    $region58: #{forward.4} parent=5 // pred_check_branch
      %1894 = sbr.rel (%p1892) target = $region60
    $region59: #{forward.4} parent=5 // pred_region
      %s1895 = ssub.s32 %s14, 2
      // Predicated region
      $region61: #{forward.4} parent=59 // pred_check
        %p1896 = pneg %p221
      $region62: #{forward.4} parent=59 // pred_check_branch
        %1898 = sbr.rel (%p1896) target = $region64
      $region63: #{forward.4} parent=59 // pred_region
        %p1899 = scmp.lt.s32.totalorder %s20, 1
        %s1900 = scalar_select %p1899, %s20, 1
        %s1901 = smul.addr %s1900, 2
        %s1902 = smul.addr %s1901, 8
        %s1903 = scalar_lea.vmem %s8, %s1902
      $region64: #{forward.4} parent=59 // pred_fallthru
        _
    $region60: #{forward.4} parent=5 // pred_fallthru
      _
  $region6: #{forward.4} parent=0 // loop_footer
    %s18 = sadd.s32 1, %s14
  $region7: #{forward.4} parent=0 // loop_footer_branch
    %13 = sbr.rel target = $region3
  $region8: #{forward.4} parent=0 // loop_exit
    _

</llo_original>
